<compile_context>
chip_gen: v5e
topology: v5e:2x2
jax: 0.10.0
libtpu: 0.0.40
codegen_flags: <defaults>
</compile_context>

<pallas_src>
import jax
import jax.numpy as jnp
from jax.experimental import pallas as pl
from jax.experimental.pallas import tpu as pltpu

EPS = 1e-5          # nn.InstanceNorm2d default eps
RELU_SLOPE = 0.1    # LeakyReLU slope

# tap order matches w.reshape(9, ...) with k = kh*3 + kw, (dh, dw) = (kh-1, kw-1)
_TAPS = tuple((dh, dw) for dh in (-1, 0, 1) for dw in (-1, 0, 1))


def _leaky_relu(x):
    return jnp.where(x >= 0, x, x * RELU_SLOPE)


def _make_kernel(W, pad):
    """Build the UNetConvBlock kernel for image width W and flat halo `pad`."""

    def kernel(colmask_ref, x_ref, w1_ref, b1_ref, gam_ref, bet_ref,
               w2_ref, b2_ref, wid_ref, bid_ref, out_ref, xpad_s, midpad_s):
        # colmask_ref : (2, L)           column masks for the dw = -1 / +1 taps
        # x_ref       : (NB, Cin, L)     input block, L = H*W (NCHW, flattened)
        # w1_ref      : (9, Cout, Cin)   conv_1 taps, transposed (out = W^T @ x)
        # w2_ref      : (9, Cout, Cout)  conv_2 taps, transposed
        # wid_ref     : (Cout, Cin)      identity 1x1 conv, transposed
        # b*/gam/bet  : (Cout, 1)        f32 per-channel params (gamma/beta padded
        #                                with 1/0 on the un-normalized half)
        # out_ref     : (NB, Cout, L)    lane-dense NCHW output block
        # xpad_s      : VMEM (NB, Cin, Lp)   flat-padded input (compute dtype)
        # midpad_s    : VMEM (NB, Cout, Lp)  flat-padded conv_1 output
        NB, Cin, L = x_ref.shape
        Cout = wid_ref.shape[0]
        Ch = Cout // 2
        Lp = xpad_s.shape[-1]
        cdt = xpad_s.dtype
        inv_L = 1.0 / L

        mask_l = colmask_ref[0:1, :]     # zero where w == 0     (needed for dw = -1)
        mask_r = colmask_ref[1:2, :]     # zero where w == W - 1 (needed for dw = +1)

        def conv3x3(src_s, b, w_ref):
            """Nine accumulated (Cout, C) @ (C, L) matmuls on flat tap slices."""
            acc = None
            for k, (dh, dw) in enumerate(_TAPS):
                off = pad + dh * W + dw
                tap = src_s[b, :, off:off + L]                    # (C, L) compute dtype
                if dw == -1:
                    tap = tap * mask_l
                elif dw == 1:
                    tap = tap * mask_r
                c = jnp.dot(w_ref[k], tap, preferred_element_type=jnp.float32)
                acc = c if acc is None else acc + c
            return acc                                            # (Cout, L) f32

        for b in range(NB):
            # ---- flat-padded input: zero halo + interior.  Redone every step
            #      so the persistent scratch is valid on each core's first visit.
            xpad_s[b, :, 0:pad] = jnp.zeros((Cin, pad), cdt)
            xpad_s[b, :, pad + L:Lp] = jnp.zeros((Cin, Lp - pad - L), cdt)
            xpad_s[b, :, pad:pad + L] = x_ref[b].astype(cdt)

            # ---- conv_1 (3x3, pad=1) + bias -----------------------------------
            acc1 = conv3x3(xpad_s, b, w1_ref) + b1_ref[...]       # (Cout, L) f32

            # ---- HIN: InstanceNorm2d(affine) on the first Cout//2 channels.
            #      One-pass stats -> fused per-channel scale/shift (f32).
            s1 = jnp.sum(acc1, axis=1, keepdims=True)
            s2 = jnp.sum(acc1 * acc1, axis=1, keepdims=True)
            mean = s1 * inv_L
            var = jnp.maximum(s2 * inv_L - mean * mean, 0.0)      # biased, as PyTorch
            inv_std = jax.lax.rsqrt(var + EPS)
            cidx = jax.lax.broadcasted_iota(jnp.int32, (Cout, 1), 0)
            is_norm = cidx < Ch
            scale = jnp.where(is_norm, gam_ref[...] * inv_std, 1.0)
            shift = jnp.where(is_norm, bet_ref[...] - mean * scale, 0.0)
            out1 = _leaky_relu(acc1 * scale + shift)              # relu_1

            # ---- flat-padded conv_1 output ------------------------------------
            midpad_s[b, :, 0:pad] = jnp.zeros((Cout, pad), cdt)
            midpad_s[b, :, pad + L:Lp] = jnp.zeros((Cout, Lp - pad - L), cdt)
            midpad_s[b, :, pad:pad + L] = out1.astype(cdt)

            # ---- conv_2 (3x3, pad=1) + bias + relu_2 --------------------------
            acc2 = _leaky_relu(conv3x3(midpad_s, b, w2_ref) + b2_ref[...])

            # ---- identity 1x1 conv on the raw input + residual add ------------
            ident = jnp.dot(wid_ref[...], xpad_s[b, :, pad:pad + L],
                            preferred_element_type=jnp.float32) + bid_ref[...]

            out_ref[b] = (acc2 + ident).astype(out_ref.dtype)     # lane-dense store

    return kernel


def _tpu_vmem_and_cores():
    """Best-effort chip query; conservative defaults if unavailable."""
    vmem_bytes = 64 << 20      # v7x per-TensorCore VMEM (smallest current gen)
    num_cores = 1              # v5e / v6e: one TensorCore per chip
    try:
        info = pltpu.get_tpu_info()
        vmem_bytes = int(getattr(info, "vmem_capacity_bytes", vmem_bytes))
        for attr in ("num_cores", "core_count", "num_tensorcores"):
            val = getattr(info, attr, None)
            if val:
                num_cores = int(val)
                break
    except Exception:
        pass
    return vmem_bytes, num_cores


def _pick_batch_block(N, Cin, Cout, L, Lp, cbytes, budget, num_cores):
    """Images per grid step: amortize ~0.35us/step overhead within the VMEM budget."""
    per_img = (2 * Cin * L * 4            # x block, double-buffered (f32)
               + 2 * Cout * L * 4         # out block, double-buffered (f32)
               + Cin * Lp * cbytes        # flat-padded input scratch
               + Cout * Lp * cbytes       # flat-padded mid scratch
               + 6 * Cout * L * 4)        # live f32 intermediates (acc1/out1/acc2/...)
    nb = int(max(1, min(N, budget // max(per_img, 1))))
    if num_cores > 1 and N > 1:
        # only force >= num_cores programs when the chip actually has multiple
        # TensorCores (v7x); on v5e/v6e it would just double per-step overhead.
        nb = min(nb, -(-N // num_cores))
    while N % nb:
        nb -= 1
    return nb


def unet_conv_block(x_nchw, params, *, use_bf16=True, batch_block=None):
    """Forward of UNetConvBlock. x_nchw: (N, Cin, H, W) -> (N, Cout, H, W)."""
    w1, b1, gamma, beta, w2, b2, wid, bid = params
    N, Cin, H, W = x_nchw.shape
    Cout = w1.shape[-1]
    assert Cout % 2 == 0, "HIN assumes an even channel count"
    Ch = Cout // 2
    L = H * W
    pad = -(-(W + 1) // 128) * 128        # 128-aligned flat halo on each side
    Lp = pad + L + pad

    cdt = jnp.bfloat16 if use_bf16 else jnp.float32
    cbytes = 2 if use_bf16 else 4

    vmem_bytes, num_cores = _tpu_vmem_and_cores()
    vmem_limit = min(int(vmem_bytes * 5 // 8), 80 << 20)   # ~40 MiB on v7x, 80 MiB else
    nb = batch_block if batch_block is not None else _pick_batch_block(
        N, Cin, Cout, L, Lp, cbytes, vmem_limit // 2, num_cores)
    assert N % nb == 0
    grid = (N // nb,)

    # spatial flatten only -- a free reshape, NO NCHW<->NHWC transpose
    x_flat = x_nchw.reshape(N, Cin, L).astype(jnp.float32)

    # conv taps transposed for out = W^T @ x (result is natively NCHW)
    w1t = jnp.transpose(w1, (0, 1, 3, 2)).reshape(9, Cout, Cin).astype(cdt)
    w2t = jnp.transpose(w2, (0, 1, 3, 2)).reshape(9, Cout, Cout).astype(cdt)
    widt = jnp.transpose(wid, (1, 0)).astype(cdt)

    # per-channel params as (Cout, 1) f32; gamma/beta padded with 1/0 on the
    # un-normalized half so the kernel never slices at a channel offset
    gamma_full = jnp.concatenate(
        [gamma.astype(jnp.float32),
         jnp.ones((Cout - Ch,), jnp.float32)]).reshape(Cout, 1)
    beta_full = jnp.concatenate(
        [beta.astype(jnp.float32),
         jnp.zeros((Cout - Ch,), jnp.float32)]).reshape(Cout, 1)
    b1c = b1.reshape(Cout, 1).astype(jnp.float32)
    b2c = b2.reshape(Cout, 1).astype(jnp.float32)
    bidc = bid.reshape(Cout, 1).astype(jnp.float32)

    # column-validity masks for the horizontal +/-1 taps (the flat-padded
    # buffer would otherwise wrap across image rows at the W boundary)
    col = jnp.arange(L, dtype=jnp.int32) % W
    colmask = jnp.stack([(col != 0), (col != W - 1)], axis=0).astype(cdt)   # (2, L)

    kernel = _make_kernel(W, pad)

    out_flat = pl.pallas_call(
        kernel,
        out_shape=jax.ShapeDtypeStruct((N, Cout, L), jnp.float32),
        grid=grid,
        in_specs=[
            # TODO(synk): on v7x, pipeline_mode=pl.Buffered(1) on the
            # grid-invariant weight/bias specs would halve their VMEM footprint.
            pl.BlockSpec((2, L), lambda n: (0, 0)),               # colmask
            pl.BlockSpec((nb, Cin, L), lambda n: (n, 0, 0)),      # x
            pl.BlockSpec((9, Cout, Cin), lambda n: (0, 0, 0)),    # w1 taps
            pl.BlockSpec((Cout, 1), lambda n: (0, 0)),            # b1
            pl.BlockSpec((Cout, 1), lambda n: (0, 0)),            # gamma
            pl.BlockSpec((Cout, 1), lambda n: (0, 0)),            # beta
            pl.BlockSpec((9, Cout, Cout), lambda n: (0, 0, 0)),   # w2 taps
            pl.BlockSpec((Cout, 1), lambda n: (0, 0)),            # b2
            pl.BlockSpec((Cout, Cin), lambda n: (0, 0)),          # identity weight
            pl.BlockSpec((Cout, 1), lambda n: (0, 0)),            # identity bias
        ],
        out_specs=pl.BlockSpec((nb, Cout, L), lambda n: (n, 0, 0)),
        scratch_shapes=[
            pltpu.VMEM((nb, Cin, Lp), cdt),     # flat-padded input
            pltpu.VMEM((nb, Cout, Lp), cdt),    # flat-padded conv_1 output
        ],
        compiler_params=pltpu.CompilerParams(
            dimension_semantics=("parallel",),
            vmem_limit_bytes=int(vmem_limit)),
    )(colmask, x_flat, w1t, b1c, gamma_full, beta_full, w2t, b2c, widt, bidc)

    # contiguous split of the trailing dim -> free, already NCHW
    return out_flat.reshape(N, Cout, H, W)


def _reference_nchw(x_nchw, params):
    """Pure-JAX reference (mirrors the PyTorch forward), for validation."""
    w1, b1, gamma, beta, w2, b2, wid, bid = params
    x = jnp.transpose(x_nchw, (0, 2, 3, 1))
    dn = ('NHWC', 'HWIO', 'NHWC')
    Cin = x.shape[-1]
    Cout = w1.shape[-1]
    Ch = Cout // 2
    y = jax.lax.conv_general_dilated(x, w1, (1, 1), 'SAME',
                                     dimension_numbers=dn) + b1
    y1, y2 = y[..., :Ch], y[..., Ch:]
    mean = jnp.mean(y1, axis=(1, 2), keepdims=True)
    var = jnp.mean((y1 - mean) ** 2, axis=(1, 2), keepdims=True)
    y1 = (y1 - mean) * jax.lax.rsqrt(var + EPS) * gamma + beta
    y = jnp.concatenate([y1, y2], axis=-1)
    y = jnp.where(y >= 0, y, RELU_SLOPE * y)
    y = jax.lax.conv_general_dilated(y, w2, (1, 1), 'SAME',
                                     dimension_numbers=dn) + b2
    y = jnp.where(y >= 0, y, RELU_SLOPE * y)
    ident = jax.lax.conv_general_dilated(x, wid.reshape(1, 1, Cin, Cout),
                                         (1, 1), 'SAME',
                                         dimension_numbers=dn) + bid
    return jnp.transpose(y + ident, (0, 3, 1, 2))


if __name__ == "__main__":
    N, Cin, Cout, H, W = 2, 4, 8, 16, 16
    Ch = Cout // 2

    key = jax.random.PRNGKey(0)
    ks = jax.random.split(key, 9)
    # Deterministic synthetic parameters (shapes from the module __init__).
    w1 = jax.random.normal(ks[0], (3, 3, Cin, Cout), jnp.float32) * 0.1
    b1 = jax.random.normal(ks[1], (Cout,), jnp.float32) * 0.1
    gamma = 1.0 + 0.1 * jax.random.normal(ks[2], (Ch,), jnp.float32)
    beta = 0.1 * jax.random.normal(ks[3], (Ch,), jnp.float32)
    w2 = jax.random.normal(ks[4], (3, 3, Cout, Cout), jnp.float32) * 0.1
    b2 = jax.random.normal(ks[5], (Cout,), jnp.float32) * 0.1
    wid = jax.random.normal(ks[6], (Cin, Cout), jnp.float32) * 0.1
    bid = jax.random.normal(ks[7], (Cout,), jnp.float32) * 0.1
    params = (w1, b1, gamma, beta, w2, b2, wid, bid)

    x = jax.random.normal(ks[8], (N, Cin, H, W), jnp.float32)
    ref = jax.block_until_ready(_reference_nchw(x, params))

    # f32 path: tight numerical check against the pure-JAX reference.
    out_f32 = jax.block_until_ready(unet_conv_block(x, params, use_bf16=False))
    assert out_f32.shape == (N, Cout, H, W), out_f32.shape
    assert jnp.allclose(out_f32, ref, atol=1e-4, rtol=1e-4), (
        float(jnp.max(jnp.abs(out_f32 - ref))))

    # bf16 matmul path (default): loose check (bf16 operand rounding).
    out_bf16 = jax.block_until_ready(unet_conv_block(x, params, use_bf16=True))
    assert out_bf16.shape == (N, Cout, H, W), out_bf16.shape
    bf16_err = float(jnp.max(jnp.abs(out_bf16 - ref)))
    assert bf16_err < 0.15, bf16_err

    print("KERNEL_OK")
</pallas_src>

<mosaic_0001>
module attributes {stable_mosaic.version = 11 : i64} {
  func.func @kernel(%arg0: i32, %arg1: memref<2x256xf32, #tpu.memory_space<vmem>>, %arg2: memref<2x4x256xf32, #tpu.memory_space<vmem>>, %arg3: memref<9x8x4xf32, #tpu.memory_space<vmem>>, %arg4: memref<8x1xf32, #tpu.memory_space<vmem>>, %arg5: memref<8x1xf32, #tpu.memory_space<vmem>>, %arg6: memref<8x1xf32, #tpu.memory_space<vmem>>, %arg7: memref<9x8x8xf32, #tpu.memory_space<vmem>>, %arg8: memref<8x1xf32, #tpu.memory_space<vmem>>, %arg9: memref<8x4xf32, #tpu.memory_space<vmem>>, %arg10: memref<8x1xf32, #tpu.memory_space<vmem>>, %arg11: memref<2x8x256xf32, #tpu.memory_space<vmem>>, %arg12: memref<2x4x512xf32, #tpu.memory_space<vmem>>, %arg13: memref<2x8x512xf32, #tpu.memory_space<vmem>>) attributes {dimension_semantics = [#tpu.dimension_semantics<parallel>], iteration_bounds = array<i64: 1>, scalar_prefetch = 0 : i64, scratch_operands = 2 : i64, tpu.core_type = #tpu.core_type<tc>, window_params = [{pipeline_mode = #tpu.pipeline_mode<synchronous>, transform_indices = @transform_0, window_bounds = array<i64: 2, 256>}, {transform_indices = @transform_1, window_bounds = array<i64: 2, 4, 256>}, {pipeline_mode = #tpu.pipeline_mode<synchronous>, transform_indices = @transform_2, window_bounds = array<i64: 9, 8, 4>}, {pipeline_mode = #tpu.pipeline_mode<synchronous>, transform_indices = @transform_3, window_bounds = array<i64: 8, 1>}, {pipeline_mode = #tpu.pipeline_mode<synchronous>, transform_indices = @transform_4, window_bounds = array<i64: 8, 1>}, {pipeline_mode = #tpu.pipeline_mode<synchronous>, transform_indices = @transform_5, window_bounds = array<i64: 8, 1>}, {pipeline_mode = #tpu.pipeline_mode<synchronous>, transform_indices = @transform_6, window_bounds = array<i64: 9, 8, 8>}, {pipeline_mode = #tpu.pipeline_mode<synchronous>, transform_indices = @transform_7, window_bounds = array<i64: 8, 1>}, {pipeline_mode = #tpu.pipeline_mode<synchronous>, transform_indices = @transform_8, window_bounds = array<i64: 8, 4>}, {pipeline_mode = #tpu.pipeline_mode<synchronous>, transform_indices = @transform_9, window_bounds = array<i64: 8, 1>}, {transform_indices = @transform_10, window_bounds = array<i64: 2, 8, 256>}]} {
    %c0 = arith.constant 0 : index
    %c0_0 = arith.constant 0 : index
    %0 = vector.load %arg1[%c0, %c0_0] : memref<2x256xf32, #tpu.memory_space<vmem>>, vector<1x256xf32>
    %c1 = arith.constant 1 : index
    %c0_1 = arith.constant 0 : index
    %1 = vector.load %arg1[%c1, %c0_1] : memref<2x256xf32, #tpu.memory_space<vmem>>, vector<1x256xf32>
    %cst = arith.constant 0.000000e+00 : f32
    %2 = vector.broadcast %cst : f32 to vector<4x128xf32>
    %c0_2 = arith.constant 0 : index
    %c0_3 = arith.constant 0 : index
    %c0_4 = arith.constant 0 : index
    %3 = vector.load %arg12[%c0_2, %c0_3, %c0_4] : memref<2x4x512xf32, #tpu.memory_space<vmem>>, vector<1x4x128xf32>
    %4 = vector.shape_cast %3 : vector<1x4x128xf32> to vector<4x128xf32>
    %5 = vector.shape_cast %2 : vector<4x128xf32> to vector<1x4x128xf32>
    tpu.vector_store %arg12[%c0_2, %c0_3, %c0_4], %5 {strides = array<i32>} : memref<2x4x512xf32, #tpu.memory_space<vmem>>, vector<1x4x128xf32>,
    %cst_5 = arith.constant 0.000000e+00 : f32
    %6 = vector.broadcast %cst_5 : f32 to vector<4x128xf32>
    %c0_6 = arith.constant 0 : index
    %c0_7 = arith.constant 0 : index
    %c384 = arith.constant 384 : index
    %7 = vector.load %arg12[%c0_6, %c0_7, %c384] : memref<2x4x512xf32, #tpu.memory_space<vmem>>, vector<1x4x128xf32>
    %8 = vector.shape_cast %7 : vector<1x4x128xf32> to vector<4x128xf32>
    %9 = vector.shape_cast %6 : vector<4x128xf32> to vector<1x4x128xf32>
    tpu.vector_store %arg12[%c0_6, %c0_7, %c384], %9 {strides = array<i32>} : memref<2x4x512xf32, #tpu.memory_space<vmem>>, vector<1x4x128xf32>,
    %c0_8 = arith.constant 0 : index
    %c0_9 = arith.constant 0 : index
    %c0_10 = arith.constant 0 : index
    %10 = vector.load %arg2[%c0_8, %c0_9, %c0_10] : memref<2x4x256xf32, #tpu.memory_space<vmem>>, vector<1x4x256xf32>
    %11 = vector.shape_cast %10 : vector<1x4x256xf32> to vector<4x256xf32>
    %c0_11 = arith.constant 0 : index
    %c0_12 = arith.constant 0 : index
    %c128 = arith.constant 128 : index
    %12 = vector.load %arg12[%c0_11, %c0_12, %c128] : memref<2x4x512xf32, #tpu.memory_space<vmem>>, vector<1x4x256xf32>
    %13 = vector.shape_cast %12 : vector<1x4x256xf32> to vector<4x256xf32>
    %14 = vector.shape_cast %11 : vector<4x256xf32> to vector<1x4x256xf32>
    tpu.vector_store %arg12[%c0_11, %c0_12, %c128], %14 {strides = array<i32>} : memref<2x4x512xf32, #tpu.memory_space<vmem>>, vector<1x4x256xf32>,
    %c0_13 = arith.constant 0 : index
    %c0_14 = arith.constant 0 : index
    %c111 = arith.constant 111 : index
    %15 = vector.load %arg12[%c0_13, %c0_14, %c111] : memref<2x4x512xf32, #tpu.memory_space<vmem>>, vector<1x4x256xf32>
    %16 = vector.shape_cast %15 : vector<1x4x256xf32> to vector<4x256xf32>
    %17 = vector.broadcast %0 : vector<1x256xf32> to vector<4x256xf32>
    %18 = arith.mulf %16, %17 : vector<4x256xf32>
    %c0_15 = arith.constant 0 : index
    %c0_16 = arith.constant 0 : index
    %c0_17 = arith.constant 0 : index
    %19 = vector.load %arg3[%c0_15, %c0_16, %c0_17] : memref<9x8x4xf32, #tpu.memory_space<vmem>>, vector<1x8x4xf32>
    %20 = vector.shape_cast %19 : vector<1x8x4xf32> to vector<8x4xf32>
    %cst_18 = arith.constant dense<0.000000e+00> : vector<8x256xf32>
    %21 = tpu.matmul %20, %18, %cst_18 {dimension_numbers = #tpu.dot_dimension_numbers<[1], [0], [0], [1], [0, 0, 1, 1], [], []>} : vector<8x4xf32>, vector<4x256xf32>, vector<8x256xf32> -> vector<8x256xf32>
    %c0_19 = arith.constant 0 : index
    %c0_20 = arith.constant 0 : index
    %c112 = arith.constant 112 : index
    %22 = vector.load %arg12[%c0_19, %c0_20, %c112] : memref<2x4x512xf32, #tpu.memory_space<vmem>>, vector<1x4x256xf32>
    %23 = vector.shape_cast %22 : vector<1x4x256xf32> to vector<4x256xf32>
    %c1_21 = arith.constant 1 : index
    %c0_22 = arith.constant 0 : index
    %c0_23 = arith.constant 0 : index
    %24 = vector.load %arg3[%c1_21, %c0_22, %c0_23] : memref<9x8x4xf32, #tpu.memory_space<vmem>>, vector<1x8x4xf32>
    %25 = vector.shape_cast %24 : vector<1x8x4xf32> to vector<8x4xf32>
    %cst_24 = arith.constant dense<0.000000e+00> : vector<8x256xf32>
    %26 = tpu.matmul %25, %23, %cst_24 {dimension_numbers = #tpu.dot_dimension_numbers<[1], [0], [0], [1], [0, 0, 1, 1], [], []>} : vector<8x4xf32>, vector<4x256xf32>, vector<8x256xf32> -> vector<8x256xf32>
    %27 = arith.addf %21, %26 : vector<8x256xf32>
    %c0_25 = arith.constant 0 : index
    %c0_26 = arith.constant 0 : index
    %c113 = arith.constant 113 : index
    %28 = vector.load %arg12[%c0_25, %c0_26, %c113] : memref<2x4x512xf32, #tpu.memory_space<vmem>>, vector<1x4x256xf32>
    %29 = vector.shape_cast %28 : vector<1x4x256xf32> to vector<4x256xf32>
    %30 = vector.broadcast %1 : vector<1x256xf32> to vector<4x256xf32>
    %31 = arith.mulf %29, %30 : vector<4x256xf32>
    %c2 = arith.constant 2 : index
    %c0_27 = arith.constant 0 : index
    %c0_28 = arith.constant 0 : index
    %32 = vector.load %arg3[%c2, %c0_27, %c0_28] : memref<9x8x4xf32, #tpu.memory_space<vmem>>, vector<1x8x4xf32>
    %33 = vector.shape_cast %32 : vector<1x8x4xf32> to vector<8x4xf32>
    %cst_29 = arith.constant dense<0.000000e+00> : vector<8x256xf32>
    %34 = tpu.matmul %33, %31, %cst_29 {dimension_numbers = #tpu.dot_dimension_numbers<[1], [0], [0], [1], [0, 0, 1, 1], [], []>} : vector<8x4xf32>, vector<4x256xf32>, vector<8x256xf32> -> vector<8x256xf32>
    %35 = arith.addf %27, %34 : vector<8x256xf32>
    %c0_30 = arith.constant 0 : index
    %c0_31 = arith.constant 0 : index
    %c127 = arith.constant 127 : index
    %36 = vector.load %arg12[%c0_30, %c0_31, %c127] : memref<2x4x512xf32, #tpu.memory_space<vmem>>, vector<1x4x256xf32>
    %37 = vector.shape_cast %36 : vector<1x4x256xf32> to vector<4x256xf32>
    %38 = vector.broadcast %0 : vector<1x256xf32> to vector<4x256xf32>
    %39 = arith.mulf %37, %38 : vector<4x256xf32>
    %c3 = arith.constant 3 : index
    %c0_32 = arith.constant 0 : index
    %c0_33 = arith.constant 0 : index
    %40 = vector.load %arg3[%c3, %c0_32, %c0_33] : memref<9x8x4xf32, #tpu.memory_space<vmem>>, vector<1x8x4xf32>
    %41 = vector.shape_cast %40 : vector<1x8x4xf32> to vector<8x4xf32>
    %cst_34 = arith.constant dense<0.000000e+00> : vector<8x256xf32>
    %42 = tpu.matmul %41, %39, %cst_34 {dimension_numbers = #tpu.dot_dimension_numbers<[1], [0], [0], [1], [0, 0, 1, 1], [], []>} : vector<8x4xf32>, vector<4x256xf32>, vector<8x256xf32> -> vector<8x256xf32>
    %43 = arith.addf %35, %42 : vector<8x256xf32>
    %c0_35 = arith.constant 0 : index
    %c0_36 = arith.constant 0 : index
    %c128_37 = arith.constant 128 : index
    %44 = vector.load %arg12[%c0_35, %c0_36, %c128_37] : memref<2x4x512xf32, #tpu.memory_space<vmem>>, vector<1x4x256xf32>
    %45 = vector.shape_cast %44 : vector<1x4x256xf32> to vector<4x256xf32>
    %c4 = arith.constant 4 : index
    %c0_38 = arith.constant 0 : index
    %c0_39 = arith.constant 0 : index
    %46 = vector.load %arg3[%c4, %c0_38, %c0_39] : memref<9x8x4xf32, #tpu.memory_space<vmem>>, vector<1x8x4xf32>
    %47 = vector.shape_cast %46 : vector<1x8x4xf32> to vector<8x4xf32>
    %cst_40 = arith.constant dense<0.000000e+00> : vector<8x256xf32>
    %48 = tpu.matmul %47, %45, %cst_40 {dimension_numbers = #tpu.dot_dimension_numbers<[1], [0], [0], [1], [0, 0, 1, 1], [], []>} : vector<8x4xf32>, vector<4x256xf32>, vector<8x256xf32> -> vector<8x256xf32>
    %49 = arith.addf %43, %48 : vector<8x256xf32>
    %c0_41 = arith.constant 0 : index
    %c0_42 = arith.constant 0 : index
    %c129 = arith.constant 129 : index
    %50 = vector.load %arg12[%c0_41, %c0_42, %c129] : memref<2x4x512xf32, #tpu.memory_space<vmem>>, vector<1x4x256xf32>
    %51 = vector.shape_cast %50 : vector<1x4x256xf32> to vector<4x256xf32>
    %52 = vector.broadcast %1 : vector<1x256xf32> to vector<4x256xf32>
    %53 = arith.mulf %51, %52 : vector<4x256xf32>
    %c5 = arith.constant 5 : index
    %c0_43 = arith.constant 0 : index
    %c0_44 = arith.constant 0 : index
    %54 = vector.load %arg3[%c5, %c0_43, %c0_44] : memref<9x8x4xf32, #tpu.memory_space<vmem>>, vector<1x8x4xf32>
    %55 = vector.shape_cast %54 : vector<1x8x4xf32> to vector<8x4xf32>
    %cst_45 = arith.constant dense<0.000000e+00> : vector<8x256xf32>
    %56 = tpu.matmul %55, %53, %cst_45 {dimension_numbers = #tpu.dot_dimension_numbers<[1], [0], [0], [1], [0, 0, 1, 1], [], []>} : vector<8x4xf32>, vector<4x256xf32>, vector<8x256xf32> -> vector<8x256xf32>
    %57 = arith.addf %49, %56 : vector<8x256xf32>
    %c0_46 = arith.constant 0 : index
    %c0_47 = arith.constant 0 : index
    %c143 = arith.constant 143 : index
    %58 = vector.load %arg12[%c0_46, %c0_47, %c143] : memref<2x4x512xf32, #tpu.memory_space<vmem>>, vector<1x4x256xf32>
    %59 = vector.shape_cast %58 : vector<1x4x256xf32> to vector<4x256xf32>
    %60 = vector.broadcast %0 : vector<1x256xf32> to vector<4x256xf32>
    %61 = arith.mulf %59, %60 : vector<4x256xf32>
    %c6 = arith.constant 6 : index
    %c0_48 = arith.constant 0 : index
    %c0_49 = arith.constant 0 : index
    %62 = vector.load %arg3[%c6, %c0_48, %c0_49] : memref<9x8x4xf32, #tpu.memory_space<vmem>>, vector<1x8x4xf32>
    %63 = vector.shape_cast %62 : vector<1x8x4xf32> to vector<8x4xf32>
    %cst_50 = arith.constant dense<0.000000e+00> : vector<8x256xf32>
    %64 = tpu.matmul %63, %61, %cst_50 {dimension_numbers = #tpu.dot_dimension_numbers<[1], [0], [0], [1], [0, 0, 1, 1], [], []>} : vector<8x4xf32>, vector<4x256xf32>, vector<8x256xf32> -> vector<8x256xf32>
    %65 = arith.addf %57, %64 : vector<8x256xf32>
    %c0_51 = arith.constant 0 : index
    %c0_52 = arith.constant 0 : index
    %c144 = arith.constant 144 : index
    %66 = vector.load %arg12[%c0_51, %c0_52, %c144] : memref<2x4x512xf32, #tpu.memory_space<vmem>>, vector<1x4x256xf32>
    %67 = vector.shape_cast %66 : vector<1x4x256xf32> to vector<4x256xf32>
    %c7 = arith.constant 7 : index
    %c0_53 = arith.constant 0 : index
    %c0_54 = arith.constant 0 : index
    %68 = vector.load %arg3[%c7, %c0_53, %c0_54] : memref<9x8x4xf32, #tpu.memory_space<vmem>>, vector<1x8x4xf32>
    %69 = vector.shape_cast %68 : vector<1x8x4xf32> to vector<8x4xf32>
    %cst_55 = arith.constant dense<0.000000e+00> : vector<8x256xf32>
    %70 = tpu.matmul %69, %67, %cst_55 {dimension_numbers = #tpu.dot_dimension_numbers<[1], [0], [0], [1], [0, 0, 1, 1], [], []>} : vector<8x4xf32>, vector<4x256xf32>, vector<8x256xf32> -> vector<8x256xf32>
    %71 = arith.addf %65, %70 : vector<8x256xf32>
    %c0_56 = arith.constant 0 : index
    %c0_57 = arith.constant 0 : index
    %c145 = arith.constant 145 : index
    %72 = vector.load %arg12[%c0_56, %c0_57, %c145] : memref<2x4x512xf32, #tpu.memory_space<vmem>>, vector<1x4x256xf32>
    %73 = vector.shape_cast %72 : vector<1x4x256xf32> to vector<4x256xf32>
    %74 = vector.broadcast %1 : vector<1x256xf32> to vector<4x256xf32>
    %75 = arith.mulf %73, %74 : vector<4x256xf32>
    %c8 = arith.constant 8 : index
    %c0_58 = arith.constant 0 : index
    %c0_59 = arith.constant 0 : index
    %76 = vector.load %arg3[%c8, %c0_58, %c0_59] : memref<9x8x4xf32, #tpu.memory_space<vmem>>, vector<1x8x4xf32>
    %77 = vector.shape_cast %76 : vector<1x8x4xf32> to vector<8x4xf32>
    %cst_60 = arith.constant dense<0.000000e+00> : vector<8x256xf32>
    %78 = tpu.matmul %77, %75, %cst_60 {dimension_numbers = #tpu.dot_dimension_numbers<[1], [0], [0], [1], [0, 0, 1, 1], [], []>} : vector<8x4xf32>, vector<4x256xf32>, vector<8x256xf32> -> vector<8x256xf32>
    %79 = arith.addf %71, %78 : vector<8x256xf32>
    %c0_61 = arith.constant 0 : index
    %c0_62 = arith.constant 0 : index
    %80 = vector.load %arg4[%c0_61, %c0_62] : memref<8x1xf32, #tpu.memory_space<vmem>>, vector<8x1xf32>
    %81 = vector.broadcast %80 : vector<8x1xf32> to vector<8x256xf32>
    %82 = arith.addf %79, %81 : vector<8x256xf32>
    %cst_63 = arith.constant dense<0.000000e+00> : vector<8xf32>
    %83 = vector.multi_reduction <add>, %82, %cst_63 [1] : vector<8x256xf32> to vector<8xf32>
    %84 = vector.shape_cast %83 : vector<8xf32> to vector<8x1xf32>
    %85 = arith.mulf %82, %82 : vector<8x256xf32>
    %cst_64 = arith.constant dense<0.000000e+00> : vector<8xf32>
    %86 = vector.multi_reduction <add>, %85, %cst_64 [1] : vector<8x256xf32> to vector<8xf32>
    %87 = vector.shape_cast %86 : vector<8xf32> to vector<8x1xf32>
    %cst_65 = arith.constant 3.906250e-03 : f32
    %88 = vector.broadcast %cst_65 : f32 to vector<8x1xf32>
    %89 = arith.mulf %84, %88 : vector<8x1xf32>
    %cst_66 = arith.constant 3.906250e-03 : f32
    %90 = vector.broadcast %cst_66 : f32 to vector<8x1xf32>
    %91 = arith.mulf %87, %90 : vector<8x1xf32>
    %92 = arith.mulf %89, %89 : vector<8x1xf32>
    %93 = arith.subf %91, %92 : vector<8x1xf32>
    %cst_67 = arith.constant 0.000000e+00 : f32
    %94 = vector.broadcast %cst_67 : f32 to vector<8x1xf32>
    %95 = arith.maximumf %93, %94 : vector<8x1xf32>
    %cst_68 = arith.constant 9.99999974E-6 : f32
    %96 = vector.broadcast %cst_68 : f32 to vector<8x1xf32>
    %97 = arith.addf %95, %96 : vector<8x1xf32>
    %98 = math.rsqrt %97 : vector<8x1xf32>
    %99 = tpu.iota {dimensions = array<i32: 0>} : vector<8x1xi32>
    %c4_i32 = arith.constant 4 : i32
    %100 = vector.broadcast %c4_i32 : i32 to vector<8x1xi32>
    %101 = arith.cmpi slt, %99, %100 : vector<8x1xi32>
    %c0_69 = arith.constant 0 : index
    %c0_70 = arith.constant 0 : index
    %102 = vector.load %arg5[%c0_69, %c0_70] : memref<8x1xf32, #tpu.memory_space<vmem>>, vector<8x1xf32>
    %103 = arith.mulf %102, %98 : vector<8x1xf32>
    %cst_71 = arith.constant 1.000000e+00 : f32
    %104 = vector.broadcast %cst_71 : f32 to vector<8x1xf32>
    %105 = arith.select %101, %103, %104 : vector<8x1xi1>, vector<8x1xf32>
    %c0_72 = arith.constant 0 : index
    %c0_73 = arith.constant 0 : index
    %106 = vector.load %arg6[%c0_72, %c0_73] : memref<8x1xf32, #tpu.memory_space<vmem>>, vector<8x1xf32>
    %107 = arith.mulf %89, %105 : vector<8x1xf32>
    %108 = arith.subf %106, %107 : vector<8x1xf32>
    %cst_74 = arith.constant 0.000000e+00 : f32
    %109 = vector.broadcast %cst_74 : f32 to vector<8x1xf32>
    %110 = arith.select %101, %108, %109 : vector<8x1xi1>, vector<8x1xf32>
    %111 = vector.broadcast %105 : vector<8x1xf32> to vector<8x256xf32>
    %112 = arith.mulf %82, %111 : vector<8x256xf32>
    %113 = vector.broadcast %110 : vector<8x1xf32> to vector<8x256xf32>
    %114 = arith.addf %112, %113 : vector<8x256xf32>
    %cst_75 = arith.constant 0.000000e+00 : f32
    %115 = vector.broadcast %cst_75 : f32 to vector<8x256xf32>
    %116 = arith.cmpf oge, %114, %115 : vector<8x256xf32>
    %cst_76 = arith.constant 1.000000e-01 : f32
    %117 = vector.broadcast %cst_76 : f32 to vector<8x256xf32>
    %118 = arith.mulf %114, %117 : vector<8x256xf32>
    %119 = arith.select %116, %114, %118 : vector<8x256xi1>, vector<8x256xf32>
    %cst_77 = arith.constant 0.000000e+00 : f32
    %120 = vector.broadcast %cst_77 : f32 to vector<8x128xf32>
    %c0_78 = arith.constant 0 : index
    %c0_79 = arith.constant 0 : index
    %c0_80 = arith.constant 0 : index
    %121 = vector.load %arg13[%c0_78, %c0_79, %c0_80] : memref<2x8x512xf32, #tpu.memory_space<vmem>>, vector<1x8x128xf32>
    %122 = vector.shape_cast %121 : vector<1x8x128xf32> to vector<8x128xf32>
    %123 = vector.shape_cast %120 : vector<8x128xf32> to vector<1x8x128xf32>
    tpu.vector_store %arg13[%c0_78, %c0_79, %c0_80], %123 {strides = array<i32>} : memref<2x8x512xf32, #tpu.memory_space<vmem>>, vector<1x8x128xf32>,
    %cst_81 = arith.constant 0.000000e+00 : f32
    %124 = vector.broadcast %cst_81 : f32 to vector<8x128xf32>
    %c0_82 = arith.constant 0 : index
    %c0_83 = arith.constant 0 : index
    %c384_84 = arith.constant 384 : index
    %125 = vector.load %arg13[%c0_82, %c0_83, %c384_84] : memref<2x8x512xf32, #tpu.memory_space<vmem>>, vector<1x8x128xf32>
    %126 = vector.shape_cast %125 : vector<1x8x128xf32> to vector<8x128xf32>
    %127 = vector.shape_cast %124 : vector<8x128xf32> to vector<1x8x128xf32>
    tpu.vector_store %arg13[%c0_82, %c0_83, %c384_84], %127 {strides = array<i32>} : memref<2x8x512xf32, #tpu.memory_space<vmem>>, vector<1x8x128xf32>,
    %c0_85 = arith.constant 0 : index
    %c0_86 = arith.constant 0 : index
    %c128_87 = arith.constant 128 : index
    %128 = vector.load %arg13[%c0_85, %c0_86, %c128_87] : memref<2x8x512xf32, #tpu.memory_space<vmem>>, vector<1x8x256xf32>
    %129 = vector.shape_cast %128 : vector<1x8x256xf32> to vector<8x256xf32>
    %130 = vector.shape_cast %119 : vector<8x256xf32> to vector<1x8x256xf32>
    tpu.vector_store %arg13[%c0_85, %c0_86, %c128_87], %130 {strides = array<i32>} : memref<2x8x512xf32, #tpu.memory_space<vmem>>, vector<1x8x256xf32>,
    %c0_88 = arith.constant 0 : index
    %c0_89 = arith.constant 0 : index
    %c111_90 = arith.constant 111 : index
    %131 = vector.load %arg13[%c0_88, %c0_89, %c111_90] : memref<2x8x512xf32, #tpu.memory_space<vmem>>, vector<1x8x256xf32>
    %132 = vector.shape_cast %131 : vector<1x8x256xf32> to vector<8x256xf32>
    %133 = vector.broadcast %0 : vector<1x256xf32> to vector<8x256xf32>
    %134 = arith.mulf %132, %133 : vector<8x256xf32>
    %c0_91 = arith.constant 0 : index
    %c0_92 = arith.constant 0 : index
    %c0_93 = arith.constant 0 : index
    %135 = vector.load %arg7[%c0_91, %c0_92, %c0_93] : memref<9x8x8xf32, #tpu.memory_space<vmem>>, vector<1x8x8xf32>
    %136 = vector.shape_cast %135 : vector<1x8x8xf32> to vector<8x8xf32>
    %cst_94 = arith.constant dense<0.000000e+00> : vector<8x256xf32>
    %137 = tpu.matmul %136, %134, %cst_94 {dimension_numbers = #tpu.dot_dimension_numbers<[1], [0], [0], [1], [0, 0, 1, 1], [], []>} : vector<8x8xf32>, vector<8x256xf32>, vector<8x256xf32> -> vector<8x256xf32>
    %c0_95 = arith.constant 0 : index
    %c0_96 = arith.constant 0 : index
    %c112_97 = arith.constant 112 : index
    %138 = vector.load %arg13[%c0_95, %c0_96, %c112_97] : memref<2x8x512xf32, #tpu.memory_space<vmem>>, vector<1x8x256xf32>
    %139 = vector.shape_cast %138 : vector<1x8x256xf32> to vector<8x256xf32>
    %c1_98 = arith.constant 1 : index
    %c0_99 = arith.constant 0 : index
    %c0_100 = arith.constant 0 : index
    %140 = vector.load %arg7[%c1_98, %c0_99, %c0_100] : memref<9x8x8xf32, #tpu.memory_space<vmem>>, vector<1x8x8xf32>
    %141 = vector.shape_cast %140 : vector<1x8x8xf32> to vector<8x8xf32>
    %cst_101 = arith.constant dense<0.000000e+00> : vector<8x256xf32>
    %142 = tpu.matmul %141, %139, %cst_101 {dimension_numbers = #tpu.dot_dimension_numbers<[1], [0], [0], [1], [0, 0, 1, 1], [], []>} : vector<8x8xf32>, vector<8x256xf32>, vector<8x256xf32> -> vector<8x256xf32>
    %143 = arith.addf %137, %142 : vector<8x256xf32>
    %c0_102 = arith.constant 0 : index
    %c0_103 = arith.constant 0 : index
    %c113_104 = arith.constant 113 : index
    %144 = vector.load %arg13[%c0_102, %c0_103, %c113_104] : memref<2x8x512xf32, #tpu.memory_space<vmem>>, vector<1x8x256xf32>
    %145 = vector.shape_cast %144 : vector<1x8x256xf32> to vector<8x256xf32>
    %146 = vector.broadcast %1 : vector<1x256xf32> to vector<8x256xf32>
    %147 = arith.mulf %145, %146 : vector<8x256xf32>
    %c2_105 = arith.constant 2 : index
    %c0_106 = arith.constant 0 : index
    %c0_107 = arith.constant 0 : index
    %148 = vector.load %arg7[%c2_105, %c0_106, %c0_107] : memref<9x8x8xf32, #tpu.memory_space<vmem>>, vector<1x8x8xf32>
    %149 = vector.shape_cast %148 : vector<1x8x8xf32> to vector<8x8xf32>
    %cst_108 = arith.constant dense<0.000000e+00> : vector<8x256xf32>
    %150 = tpu.matmul %149, %147, %cst_108 {dimension_numbers = #tpu.dot_dimension_numbers<[1], [0], [0], [1], [0, 0, 1, 1], [], []>} : vector<8x8xf32>, vector<8x256xf32>, vector<8x256xf32> -> vector<8x256xf32>
    %151 = arith.addf %143, %150 : vector<8x256xf32>
    %c0_109 = arith.constant 0 : index
    %c0_110 = arith.constant 0 : index
    %c127_111 = arith.constant 127 : index
    %152 = vector.load %arg13[%c0_109, %c0_110, %c127_111] : memref<2x8x512xf32, #tpu.memory_space<vmem>>, vector<1x8x256xf32>
    %153 = vector.shape_cast %152 : vector<1x8x256xf32> to vector<8x256xf32>
    %154 = vector.broadcast %0 : vector<1x256xf32> to vector<8x256xf32>
    %155 = arith.mulf %153, %154 : vector<8x256xf32>
    %c3_112 = arith.constant 3 : index
    %c0_113 = arith.constant 0 : index
    %c0_114 = arith.constant 0 : index
    %156 = vector.load %arg7[%c3_112, %c0_113, %c0_114] : memref<9x8x8xf32, #tpu.memory_space<vmem>>, vector<1x8x8xf32>
    %157 = vector.shape_cast %156 : vector<1x8x8xf32> to vector<8x8xf32>
    %cst_115 = arith.constant dense<0.000000e+00> : vector<8x256xf32>
    %158 = tpu.matmul %157, %155, %cst_115 {dimension_numbers = #tpu.dot_dimension_numbers<[1], [0], [0], [1], [0, 0, 1, 1], [], []>} : vector<8x8xf32>, vector<8x256xf32>, vector<8x256xf32> -> vector<8x256xf32>
    %159 = arith.addf %151, %158 : vector<8x256xf32>
    %c0_116 = arith.constant 0 : index
    %c0_117 = arith.constant 0 : index
    %c128_118 = arith.constant 128 : index
    %160 = vector.load %arg13[%c0_116, %c0_117, %c128_118] : memref<2x8x512xf32, #tpu.memory_space<vmem>>, vector<1x8x256xf32>
    %161 = vector.shape_cast %160 : vector<1x8x256xf32> to vector<8x256xf32>
    %c4_119 = arith.constant 4 : index
    %c0_120 = arith.constant 0 : index
    %c0_121 = arith.constant 0 : index
    %162 = vector.load %arg7[%c4_119, %c0_120, %c0_121] : memref<9x8x8xf32, #tpu.memory_space<vmem>>, vector<1x8x8xf32>
    %163 = vector.shape_cast %162 : vector<1x8x8xf32> to vector<8x8xf32>
    %cst_122 = arith.constant dense<0.000000e+00> : vector<8x256xf32>
    %164 = tpu.matmul %163, %161, %cst_122 {dimension_numbers = #tpu.dot_dimension_numbers<[1], [0], [0], [1], [0, 0, 1, 1], [], []>} : vector<8x8xf32>, vector<8x256xf32>, vector<8x256xf32> -> vector<8x256xf32>
    %165 = arith.addf %159, %164 : vector<8x256xf32>
    %c0_123 = arith.constant 0 : index
    %c0_124 = arith.constant 0 : index
    %c129_125 = arith.constant 129 : index
    %166 = vector.load %arg13[%c0_123, %c0_124, %c129_125] : memref<2x8x512xf32, #tpu.memory_space<vmem>>, vector<1x8x256xf32>
    %167 = vector.shape_cast %166 : vector<1x8x256xf32> to vector<8x256xf32>
    %168 = vector.broadcast %1 : vector<1x256xf32> to vector<8x256xf32>
    %169 = arith.mulf %167, %168 : vector<8x256xf32>
    %c5_126 = arith.constant 5 : index
    %c0_127 = arith.constant 0 : index
    %c0_128 = arith.constant 0 : index
    %170 = vector.load %arg7[%c5_126, %c0_127, %c0_128] : memref<9x8x8xf32, #tpu.memory_space<vmem>>, vector<1x8x8xf32>
    %171 = vector.shape_cast %170 : vector<1x8x8xf32> to vector<8x8xf32>
    %cst_129 = arith.constant dense<0.000000e+00> : vector<8x256xf32>
    %172 = tpu.matmul %171, %169, %cst_129 {dimension_numbers = #tpu.dot_dimension_numbers<[1], [0], [0], [1], [0, 0, 1, 1], [], []>} : vector<8x8xf32>, vector<8x256xf32>, vector<8x256xf32> -> vector<8x256xf32>
    %173 = arith.addf %165, %172 : vector<8x256xf32>
    %c0_130 = arith.constant 0 : index
    %c0_131 = arith.constant 0 : index
    %c143_132 = arith.constant 143 : index
    %174 = vector.load %arg13[%c0_130, %c0_131, %c143_132] : memref<2x8x512xf32, #tpu.memory_space<vmem>>, vector<1x8x256xf32>
    %175 = vector.shape_cast %174 : vector<1x8x256xf32> to vector<8x256xf32>
    %176 = vector.broadcast %0 : vector<1x256xf32> to vector<8x256xf32>
    %177 = arith.mulf %175, %176 : vector<8x256xf32>
    %c6_133 = arith.constant 6 : index
    %c0_134 = arith.constant 0 : index
    %c0_135 = arith.constant 0 : index
    %178 = vector.load %arg7[%c6_133, %c0_134, %c0_135] : memref<9x8x8xf32, #tpu.memory_space<vmem>>, vector<1x8x8xf32>
    %179 = vector.shape_cast %178 : vector<1x8x8xf32> to vector<8x8xf32>
    %cst_136 = arith.constant dense<0.000000e+00> : vector<8x256xf32>
    %180 = tpu.matmul %179, %177, %cst_136 {dimension_numbers = #tpu.dot_dimension_numbers<[1], [0], [0], [1], [0, 0, 1, 1], [], []>} : vector<8x8xf32>, vector<8x256xf32>, vector<8x256xf32> -> vector<8x256xf32>
    %181 = arith.addf %173, %180 : vector<8x256xf32>
    %c0_137 = arith.constant 0 : index
    %c0_138 = arith.constant 0 : index
    %c144_139 = arith.constant 144 : index
    %182 = vector.load %arg13[%c0_137, %c0_138, %c144_139] : memref<2x8x512xf32, #tpu.memory_space<vmem>>, vector<1x8x256xf32>
    %183 = vector.shape_cast %182 : vector<1x8x256xf32> to vector<8x256xf32>
    %c7_140 = arith.constant 7 : index
    %c0_141 = arith.constant 0 : index
    %c0_142 = arith.constant 0 : index
    %184 = vector.load %arg7[%c7_140, %c0_141, %c0_142] : memref<9x8x8xf32, #tpu.memory_space<vmem>>, vector<1x8x8xf32>
    %185 = vector.shape_cast %184 : vector<1x8x8xf32> to vector<8x8xf32>
    %cst_143 = arith.constant dense<0.000000e+00> : vector<8x256xf32>
    %186 = tpu.matmul %185, %183, %cst_143 {dimension_numbers = #tpu.dot_dimension_numbers<[1], [0], [0], [1], [0, 0, 1, 1], [], []>} : vector<8x8xf32>, vector<8x256xf32>, vector<8x256xf32> -> vector<8x256xf32>
    %187 = arith.addf %181, %186 : vector<8x256xf32>
    %c0_144 = arith.constant 0 : index
    %c0_145 = arith.constant 0 : index
    %c145_146 = arith.constant 145 : index
    %188 = vector.load %arg13[%c0_144, %c0_145, %c145_146] : memref<2x8x512xf32, #tpu.memory_space<vmem>>, vector<1x8x256xf32>
    %189 = vector.shape_cast %188 : vector<1x8x256xf32> to vector<8x256xf32>
    %190 = vector.broadcast %1 : vector<1x256xf32> to vector<8x256xf32>
    %191 = arith.mulf %189, %190 : vector<8x256xf32>
    %c8_147 = arith.constant 8 : index
    %c0_148 = arith.constant 0 : index
    %c0_149 = arith.constant 0 : index
    %192 = vector.load %arg7[%c8_147, %c0_148, %c0_149] : memref<9x8x8xf32, #tpu.memory_space<vmem>>, vector<1x8x8xf32>
    %193 = vector.shape_cast %192 : vector<1x8x8xf32> to vector<8x8xf32>
    %cst_150 = arith.constant dense<0.000000e+00> : vector<8x256xf32>
    %194 = tpu.matmul %193, %191, %cst_150 {dimension_numbers = #tpu.dot_dimension_numbers<[1], [0], [0], [1], [0, 0, 1, 1], [], []>} : vector<8x8xf32>, vector<8x256xf32>, vector<8x256xf32> -> vector<8x256xf32>
    %195 = arith.addf %187, %194 : vector<8x256xf32>
    %c0_151 = arith.constant 0 : index
    %c0_152 = arith.constant 0 : index
    %196 = vector.load %arg8[%c0_151, %c0_152] : memref<8x1xf32, #tpu.memory_space<vmem>>, vector<8x1xf32>
    %197 = vector.broadcast %196 : vector<8x1xf32> to vector<8x256xf32>
    %198 = arith.addf %195, %197 : vector<8x256xf32>
    %cst_153 = arith.constant 0.000000e+00 : f32
    %199 = vector.broadcast %cst_153 : f32 to vector<8x256xf32>
    %200 = arith.cmpf oge, %198, %199 : vector<8x256xf32>
    %cst_154 = arith.constant 1.000000e-01 : f32
    %201 = vector.broadcast %cst_154 : f32 to vector<8x256xf32>
    %202 = arith.mulf %198, %201 : vector<8x256xf32>
    %203 = arith.select %200, %198, %202 : vector<8x256xi1>, vector<8x256xf32>
    %c0_155 = arith.constant 0 : index
    %c0_156 = arith.constant 0 : index
    %204 = vector.load %arg9[%c0_155, %c0_156] : memref<8x4xf32, #tpu.memory_space<vmem>>, vector<8x4xf32>
    %c0_157 = arith.constant 0 : index
    %c0_158 = arith.constant 0 : index
    %c128_159 = arith.constant 128 : index
    %205 = vector.load %arg12[%c0_157, %c0_158, %c128_159] : memref<2x4x512xf32, #tpu.memory_space<vmem>>, vector<1x4x256xf32>
    %206 = vector.shape_cast %205 : vector<1x4x256xf32> to vector<4x256xf32>
    %cst_160 = arith.constant dense<0.000000e+00> : vector<8x256xf32>
    %207 = tpu.matmul %204, %206, %cst_160 {dimension_numbers = #tpu.dot_dimension_numbers<[1], [0], [0], [1], [0, 0, 1, 1], [], []>} : vector<8x4xf32>, vector<4x256xf32>, vector<8x256xf32> -> vector<8x256xf32>
    %c0_161 = arith.constant 0 : index
    %c0_162 = arith.constant 0 : index
    %208 = vector.load %arg10[%c0_161, %c0_162] : memref<8x1xf32, #tpu.memory_space<vmem>>, vector<8x1xf32>
    %209 = vector.broadcast %208 : vector<8x1xf32> to vector<8x256xf32>
    %210 = arith.addf %207, %209 : vector<8x256xf32>
    %211 = arith.addf %203, %210 : vector<8x256xf32>
    %c0_163 = arith.constant 0 : index
    %c0_164 = arith.constant 0 : index
    %c0_165 = arith.constant 0 : index
    %212 = vector.load %arg11[%c0_163, %c0_164, %c0_165] : memref<2x8x256xf32, #tpu.memory_space<vmem>>, vector<1x8x256xf32>
    %213 = vector.shape_cast %212 : vector<1x8x256xf32> to vector<8x256xf32>
    %214 = vector.shape_cast %211 : vector<8x256xf32> to vector<1x8x256xf32>
    tpu.vector_store %arg11[%c0_163, %c0_164, %c0_165], %214 {strides = array<i32>} : memref<2x8x256xf32, #tpu.memory_space<vmem>>, vector<1x8x256xf32>,
    %cst_166 = arith.constant 0.000000e+00 : f32
    %215 = vector.broadcast %cst_166 : f32 to vector<4x128xf32>
    %c1_167 = arith.constant 1 : index
    %c0_168 = arith.constant 0 : index
    %c0_169 = arith.constant 0 : index
    %216 = vector.load %arg12[%c1_167, %c0_168, %c0_169] : memref<2x4x512xf32, #tpu.memory_space<vmem>>, vector<1x4x128xf32>
    %217 = vector.shape_cast %216 : vector<1x4x128xf32> to vector<4x128xf32>
    %218 = vector.shape_cast %215 : vector<4x128xf32> to vector<1x4x128xf32>
    tpu.vector_store %arg12[%c1_167, %c0_168, %c0_169], %218 {strides = array<i32>} : memref<2x4x512xf32, #tpu.memory_space<vmem>>, vector<1x4x128xf32>,
    %cst_170 = arith.constant 0.000000e+00 : f32
    %219 = vector.broadcast %cst_170 : f32 to vector<4x128xf32>
    %c1_171 = arith.constant 1 : index
    %c0_172 = arith.constant 0 : index
    %c384_173 = arith.constant 384 : index
    %220 = vector.load %arg12[%c1_171, %c0_172, %c384_173] : memref<2x4x512xf32, #tpu.memory_space<vmem>>, vector<1x4x128xf32>
    %221 = vector.shape_cast %220 : vector<1x4x128xf32> to vector<4x128xf32>
    %222 = vector.shape_cast %219 : vector<4x128xf32> to vector<1x4x128xf32>
    tpu.vector_store %arg12[%c1_171, %c0_172, %c384_173], %222 {strides = array<i32>} : memref<2x4x512xf32, #tpu.memory_space<vmem>>, vector<1x4x128xf32>,
    %c1_174 = arith.constant 1 : index
    %c0_175 = arith.constant 0 : index
    %c0_176 = arith.constant 0 : index
    %223 = vector.load %arg2[%c1_174, %c0_175, %c0_176] : memref<2x4x256xf32, #tpu.memory_space<vmem>>, vector<1x4x256xf32>
    %224 = vector.shape_cast %223 : vector<1x4x256xf32> to vector<4x256xf32>
    %c1_177 = arith.constant 1 : index
    %c0_178 = arith.constant 0 : index
    %c128_179 = arith.constant 128 : index
    %225 = vector.load %arg12[%c1_177, %c0_178, %c128_179] : memref<2x4x512xf32, #tpu.memory_space<vmem>>, vector<1x4x256xf32>
    %226 = vector.shape_cast %225 : vector<1x4x256xf32> to vector<4x256xf32>
    %227 = vector.shape_cast %224 : vector<4x256xf32> to vector<1x4x256xf32>
    tpu.vector_store %arg12[%c1_177, %c0_178, %c128_179], %227 {strides = array<i32>} : memref<2x4x512xf32, #tpu.memory_space<vmem>>, vector<1x4x256xf32>,
    %c1_180 = arith.constant 1 : index
    %c0_181 = arith.constant 0 : index
    %c111_182 = arith.constant 111 : index
    %228 = vector.load %arg12[%c1_180, %c0_181, %c111_182] : memref<2x4x512xf32, #tpu.memory_space<vmem>>, vector<1x4x256xf32>
    %229 = vector.shape_cast %228 : vector<1x4x256xf32> to vector<4x256xf32>
    %230 = vector.broadcast %0 : vector<1x256xf32> to vector<4x256xf32>
    %231 = arith.mulf %229, %230 : vector<4x256xf32>
    %c0_183 = arith.constant 0 : index
    %c0_184 = arith.constant 0 : index
    %c0_185 = arith.constant 0 : index
    %232 = vector.load %arg3[%c0_183, %c0_184, %c0_185] : memref<9x8x4xf32, #tpu.memory_space<vmem>>, vector<1x8x4xf32>
    %233 = vector.shape_cast %232 : vector<1x8x4xf32> to vector<8x4xf32>
    %cst_186 = arith.constant dense<0.000000e+00> : vector<8x256xf32>
    %234 = tpu.matmul %233, %231, %cst_186 {dimension_numbers = #tpu.dot_dimension_numbers<[1], [0], [0], [1], [0, 0, 1, 1], [], []>} : vector<8x4xf32>, vector<4x256xf32>, vector<8x256xf32> -> vector<8x256xf32>
    %c1_187 = arith.constant 1 : index
    %c0_188 = arith.constant 0 : index
    %c112_189 = arith.constant 112 : index
    %235 = vector.load %arg12[%c1_187, %c0_188, %c112_189] : memref<2x4x512xf32, #tpu.memory_space<vmem>>, vector<1x4x256xf32>
    %236 = vector.shape_cast %235 : vector<1x4x256xf32> to vector<4x256xf32>
    %c1_190 = arith.constant 1 : index
    %c0_191 = arith.constant 0 : index
    %c0_192 = arith.constant 0 : index
    %237 = vector.load %arg3[%c1_190, %c0_191, %c0_192] : memref<9x8x4xf32, #tpu.memory_space<vmem>>, vector<1x8x4xf32>
    %238 = vector.shape_cast %237 : vector<1x8x4xf32> to vector<8x4xf32>
    %cst_193 = arith.constant dense<0.000000e+00> : vector<8x256xf32>
    %239 = tpu.matmul %238, %236, %cst_193 {dimension_numbers = #tpu.dot_dimension_numbers<[1], [0], [0], [1], [0, 0, 1, 1], [], []>} : vector<8x4xf32>, vector<4x256xf32>, vector<8x256xf32> -> vector<8x256xf32>
    %240 = arith.addf %234, %239 : vector<8x256xf32>
    %c1_194 = arith.constant 1 : index
    %c0_195 = arith.constant 0 : index
    %c113_196 = arith.constant 113 : index
    %241 = vector.load %arg12[%c1_194, %c0_195, %c113_196] : memref<2x4x512xf32, #tpu.memory_space<vmem>>, vector<1x4x256xf32>
    %242 = vector.shape_cast %241 : vector<1x4x256xf32> to vector<4x256xf32>
    %243 = vector.broadcast %1 : vector<1x256xf32> to vector<4x256xf32>
    %244 = arith.mulf %242, %243 : vector<4x256xf32>
    %c2_197 = arith.constant 2 : index
    %c0_198 = arith.constant 0 : index
    %c0_199 = arith.constant 0 : index
    %245 = vector.load %arg3[%c2_197, %c0_198, %c0_199] : memref<9x8x4xf32, #tpu.memory_space<vmem>>, vector<1x8x4xf32>
    %246 = vector.shape_cast %245 : vector<1x8x4xf32> to vector<8x4xf32>
    %cst_200 = arith.constant dense<0.000000e+00> : vector<8x256xf32>
    %247 = tpu.matmul %246, %244, %cst_200 {dimension_numbers = #tpu.dot_dimension_numbers<[1], [0], [0], [1], [0, 0, 1, 1], [], []>} : vector<8x4xf32>, vector<4x256xf32>, vector<8x256xf32> -> vector<8x256xf32>
    %248 = arith.addf %240, %247 : vector<8x256xf32>
    %c1_201 = arith.constant 1 : index
    %c0_202 = arith.constant 0 : index
    %c127_203 = arith.constant 127 : index
    %249 = vector.load %arg12[%c1_201, %c0_202, %c127_203] : memref<2x4x512xf32, #tpu.memory_space<vmem>>, vector<1x4x256xf32>
    %250 = vector.shape_cast %249 : vector<1x4x256xf32> to vector<4x256xf32>
    %251 = vector.broadcast %0 : vector<1x256xf32> to vector<4x256xf32>
    %252 = arith.mulf %250, %251 : vector<4x256xf32>
    %c3_204 = arith.constant 3 : index
    %c0_205 = arith.constant 0 : index
    %c0_206 = arith.constant 0 : index
    %253 = vector.load %arg3[%c3_204, %c0_205, %c0_206] : memref<9x8x4xf32, #tpu.memory_space<vmem>>, vector<1x8x4xf32>
    %254 = vector.shape_cast %253 : vector<1x8x4xf32> to vector<8x4xf32>
    %cst_207 = arith.constant dense<0.000000e+00> : vector<8x256xf32>
    %255 = tpu.matmul %254, %252, %cst_207 {dimension_numbers = #tpu.dot_dimension_numbers<[1], [0], [0], [1], [0, 0, 1, 1], [], []>} : vector<8x4xf32>, vector<4x256xf32>, vector<8x256xf32> -> vector<8x256xf32>
    %256 = arith.addf %248, %255 : vector<8x256xf32>
    %c1_208 = arith.constant 1 : index
    %c0_209 = arith.constant 0 : index
    %c128_210 = arith.constant 128 : index
    %257 = vector.load %arg12[%c1_208, %c0_209, %c128_210] : memref<2x4x512xf32, #tpu.memory_space<vmem>>, vector<1x4x256xf32>
    %258 = vector.shape_cast %257 : vector<1x4x256xf32> to vector<4x256xf32>
    %c4_211 = arith.constant 4 : index
    %c0_212 = arith.constant 0 : index
    %c0_213 = arith.constant 0 : index
    %259 = vector.load %arg3[%c4_211, %c0_212, %c0_213] : memref<9x8x4xf32, #tpu.memory_space<vmem>>, vector<1x8x4xf32>
    %260 = vector.shape_cast %259 : vector<1x8x4xf32> to vector<8x4xf32>
    %cst_214 = arith.constant dense<0.000000e+00> : vector<8x256xf32>
    %261 = tpu.matmul %260, %258, %cst_214 {dimension_numbers = #tpu.dot_dimension_numbers<[1], [0], [0], [1], [0, 0, 1, 1], [], []>} : vector<8x4xf32>, vector<4x256xf32>, vector<8x256xf32> -> vector<8x256xf32>
    %262 = arith.addf %256, %261 : vector<8x256xf32>
    %c1_215 = arith.constant 1 : index
    %c0_216 = arith.constant 0 : index
    %c129_217 = arith.constant 129 : index
    %263 = vector.load %arg12[%c1_215, %c0_216, %c129_217] : memref<2x4x512xf32, #tpu.memory_space<vmem>>, vector<1x4x256xf32>
    %264 = vector.shape_cast %263 : vector<1x4x256xf32> to vector<4x256xf32>
    %265 = vector.broadcast %1 : vector<1x256xf32> to vector<4x256xf32>
    %266 = arith.mulf %264, %265 : vector<4x256xf32>
    %c5_218 = arith.constant 5 : index
    %c0_219 = arith.constant 0 : index
    %c0_220 = arith.constant 0 : index
    %267 = vector.load %arg3[%c5_218, %c0_219, %c0_220] : memref<9x8x4xf32, #tpu.memory_space<vmem>>, vector<1x8x4xf32>
    %268 = vector.shape_cast %267 : vector<1x8x4xf32> to vector<8x4xf32>
    %cst_221 = arith.constant dense<0.000000e+00> : vector<8x256xf32>
    %269 = tpu.matmul %268, %266, %cst_221 {dimension_numbers = #tpu.dot_dimension_numbers<[1], [0], [0], [1], [0, 0, 1, 1], [], []>} : vector<8x4xf32>, vector<4x256xf32>, vector<8x256xf32> -> vector<8x256xf32>
    %270 = arith.addf %262, %269 : vector<8x256xf32>
    %c1_222 = arith.constant 1 : index
    %c0_223 = arith.constant 0 : index
    %c143_224 = arith.constant 143 : index
    %271 = vector.load %arg12[%c1_222, %c0_223, %c143_224] : memref<2x4x512xf32, #tpu.memory_space<vmem>>, vector<1x4x256xf32>
    %272 = vector.shape_cast %271 : vector<1x4x256xf32> to vector<4x256xf32>
    %273 = vector.broadcast %0 : vector<1x256xf32> to vector<4x256xf32>
    %274 = arith.mulf %272, %273 : vector<4x256xf32>
    %c6_225 = arith.constant 6 : index
    %c0_226 = arith.constant 0 : index
    %c0_227 = arith.constant 0 : index
    %275 = vector.load %arg3[%c6_225, %c0_226, %c0_227] : memref<9x8x4xf32, #tpu.memory_space<vmem>>, vector<1x8x4xf32>
    %276 = vector.shape_cast %275 : vector<1x8x4xf32> to vector<8x4xf32>
    %cst_228 = arith.constant dense<0.000000e+00> : vector<8x256xf32>
    %277 = tpu.matmul %276, %274, %cst_228 {dimension_numbers = #tpu.dot_dimension_numbers<[1], [0], [0], [1], [0, 0, 1, 1], [], []>} : vector<8x4xf32>, vector<4x256xf32>, vector<8x256xf32> -> vector<8x256xf32>
    %278 = arith.addf %270, %277 : vector<8x256xf32>
    %c1_229 = arith.constant 1 : index
    %c0_230 = arith.constant 0 : index
    %c144_231 = arith.constant 144 : index
    %279 = vector.load %arg12[%c1_229, %c0_230, %c144_231] : memref<2x4x512xf32, #tpu.memory_space<vmem>>, vector<1x4x256xf32>
    %280 = vector.shape_cast %279 : vector<1x4x256xf32> to vector<4x256xf32>
    %c7_232 = arith.constant 7 : index
    %c0_233 = arith.constant 0 : index
    %c0_234 = arith.constant 0 : index
    %281 = vector.load %arg3[%c7_232, %c0_233, %c0_234] : memref<9x8x4xf32, #tpu.memory_space<vmem>>, vector<1x8x4xf32>
    %282 = vector.shape_cast %281 : vector<1x8x4xf32> to vector<8x4xf32>
    %cst_235 = arith.constant dense<0.000000e+00> : vector<8x256xf32>
    %283 = tpu.matmul %282, %280, %cst_235 {dimension_numbers = #tpu.dot_dimension_numbers<[1], [0], [0], [1], [0, 0, 1, 1], [], []>} : vector<8x4xf32>, vector<4x256xf32>, vector<8x256xf32> -> vector<8x256xf32>
    %284 = arith.addf %278, %283 : vector<8x256xf32>
    %c1_236 = arith.constant 1 : index
    %c0_237 = arith.constant 0 : index
    %c145_238 = arith.constant 145 : index
    %285 = vector.load %arg12[%c1_236, %c0_237, %c145_238] : memref<2x4x512xf32, #tpu.memory_space<vmem>>, vector<1x4x256xf32>
    %286 = vector.shape_cast %285 : vector<1x4x256xf32> to vector<4x256xf32>
    %287 = vector.broadcast %1 : vector<1x256xf32> to vector<4x256xf32>
    %288 = arith.mulf %286, %287 : vector<4x256xf32>
    %c8_239 = arith.constant 8 : index
    %c0_240 = arith.constant 0 : index
    %c0_241 = arith.constant 0 : index
    %289 = vector.load %arg3[%c8_239, %c0_240, %c0_241] : memref<9x8x4xf32, #tpu.memory_space<vmem>>, vector<1x8x4xf32>
    %290 = vector.shape_cast %289 : vector<1x8x4xf32> to vector<8x4xf32>
    %cst_242 = arith.constant dense<0.000000e+00> : vector<8x256xf32>
    %291 = tpu.matmul %290, %288, %cst_242 {dimension_numbers = #tpu.dot_dimension_numbers<[1], [0], [0], [1], [0, 0, 1, 1], [], []>} : vector<8x4xf32>, vector<4x256xf32>, vector<8x256xf32> -> vector<8x256xf32>
    %292 = arith.addf %284, %291 : vector<8x256xf32>
    %c0_243 = arith.constant 0 : index
    %c0_244 = arith.constant 0 : index
    %293 = vector.load %arg4[%c0_243, %c0_244] : memref<8x1xf32, #tpu.memory_space<vmem>>, vector<8x1xf32>
    %294 = vector.broadcast %293 : vector<8x1xf32> to vector<8x256xf32>
    %295 = arith.addf %292, %294 : vector<8x256xf32>
    %cst_245 = arith.constant dense<0.000000e+00> : vector<8xf32>
    %296 = vector.multi_reduction <add>, %295, %cst_245 [1] : vector<8x256xf32> to vector<8xf32>
    %297 = vector.shape_cast %296 : vector<8xf32> to vector<8x1xf32>
    %298 = arith.mulf %295, %295 : vector<8x256xf32>
    %cst_246 = arith.constant dense<0.000000e+00> : vector<8xf32>
    %299 = vector.multi_reduction <add>, %298, %cst_246 [1] : vector<8x256xf32> to vector<8xf32>
    %300 = vector.shape_cast %299 : vector<8xf32> to vector<8x1xf32>
    %cst_247 = arith.constant 3.906250e-03 : f32
    %301 = vector.broadcast %cst_247 : f32 to vector<8x1xf32>
    %302 = arith.mulf %297, %301 : vector<8x1xf32>
    %cst_248 = arith.constant 3.906250e-03 : f32
    %303 = vector.broadcast %cst_248 : f32 to vector<8x1xf32>
    %304 = arith.mulf %300, %303 : vector<8x1xf32>
    %305 = arith.mulf %302, %302 : vector<8x1xf32>
    %306 = arith.subf %304, %305 : vector<8x1xf32>
    %cst_249 = arith.constant 0.000000e+00 : f32
    %307 = vector.broadcast %cst_249 : f32 to vector<8x1xf32>
    %308 = arith.maximumf %306, %307 : vector<8x1xf32>
    %cst_250 = arith.constant 9.99999974E-6 : f32
    %309 = vector.broadcast %cst_250 : f32 to vector<8x1xf32>
    %310 = arith.addf %308, %309 : vector<8x1xf32>
    %311 = math.rsqrt %310 : vector<8x1xf32>
    %312 = tpu.iota {dimensions = array<i32: 0>} : vector<8x1xi32>
    %c4_i32_251 = arith.constant 4 : i32
    %313 = vector.broadcast %c4_i32_251 : i32 to vector<8x1xi32>
    %314 = arith.cmpi slt, %312, %313 : vector<8x1xi32>
    %c0_252 = arith.constant 0 : index
    %c0_253 = arith.constant 0 : index
    %315 = vector.load %arg5[%c0_252, %c0_253] : memref<8x1xf32, #tpu.memory_space<vmem>>, vector<8x1xf32>
    %316 = arith.mulf %315, %311 : vector<8x1xf32>
    %cst_254 = arith.constant 1.000000e+00 : f32
    %317 = vector.broadcast %cst_254 : f32 to vector<8x1xf32>
    %318 = arith.select %314, %316, %317 : vector<8x1xi1>, vector<8x1xf32>
    %c0_255 = arith.constant 0 : index
    %c0_256 = arith.constant 0 : index
    %319 = vector.load %arg6[%c0_255, %c0_256] : memref<8x1xf32, #tpu.memory_space<vmem>>, vector<8x1xf32>
    %320 = arith.mulf %302, %318 : vector<8x1xf32>
    %321 = arith.subf %319, %320 : vector<8x1xf32>
    %cst_257 = arith.constant 0.000000e+00 : f32
    %322 = vector.broadcast %cst_257 : f32 to vector<8x1xf32>
    %323 = arith.select %314, %321, %322 : vector<8x1xi1>, vector<8x1xf32>
    %324 = vector.broadcast %318 : vector<8x1xf32> to vector<8x256xf32>
    %325 = arith.mulf %295, %324 : vector<8x256xf32>
    %326 = vector.broadcast %323 : vector<8x1xf32> to vector<8x256xf32>
    %327 = arith.addf %325, %326 : vector<8x256xf32>
    %cst_258 = arith.constant 0.000000e+00 : f32
    %328 = vector.broadcast %cst_258 : f32 to vector<8x256xf32>
    %329 = arith.cmpf oge, %327, %328 : vector<8x256xf32>
    %cst_259 = arith.constant 1.000000e-01 : f32
    %330 = vector.broadcast %cst_259 : f32 to vector<8x256xf32>
    %331 = arith.mulf %327, %330 : vector<8x256xf32>
    %332 = arith.select %329, %327, %331 : vector<8x256xi1>, vector<8x256xf32>
    %cst_260 = arith.constant 0.000000e+00 : f32
    %333 = vector.broadcast %cst_260 : f32 to vector<8x128xf32>
    %c1_261 = arith.constant 1 : index
    %c0_262 = arith.constant 0 : index
    %c0_263 = arith.constant 0 : index
    %334 = vector.load %arg13[%c1_261, %c0_262, %c0_263] : memref<2x8x512xf32, #tpu.memory_space<vmem>>, vector<1x8x128xf32>
    %335 = vector.shape_cast %334 : vector<1x8x128xf32> to vector<8x128xf32>
    %336 = vector.shape_cast %333 : vector<8x128xf32> to vector<1x8x128xf32>
    tpu.vector_store %arg13[%c1_261, %c0_262, %c0_263], %336 {strides = array<i32>} : memref<2x8x512xf32, #tpu.memory_space<vmem>>, vector<1x8x128xf32>,
    %cst_264 = arith.constant 0.000000e+00 : f32
    %337 = vector.broadcast %cst_264 : f32 to vector<8x128xf32>
    %c1_265 = arith.constant 1 : index
    %c0_266 = arith.constant 0 : index
    %c384_267 = arith.constant 384 : index
    %338 = vector.load %arg13[%c1_265, %c0_266, %c384_267] : memref<2x8x512xf32, #tpu.memory_space<vmem>>, vector<1x8x128xf32>
    %339 = vector.shape_cast %338 : vector<1x8x128xf32> to vector<8x128xf32>
    %340 = vector.shape_cast %337 : vector<8x128xf32> to vector<1x8x128xf32>
    tpu.vector_store %arg13[%c1_265, %c0_266, %c384_267], %340 {strides = array<i32>} : memref<2x8x512xf32, #tpu.memory_space<vmem>>, vector<1x8x128xf32>,
    %c1_268 = arith.constant 1 : index
    %c0_269 = arith.constant 0 : index
    %c128_270 = arith.constant 128 : index
    %341 = vector.load %arg13[%c1_268, %c0_269, %c128_270] : memref<2x8x512xf32, #tpu.memory_space<vmem>>, vector<1x8x256xf32>
    %342 = vector.shape_cast %341 : vector<1x8x256xf32> to vector<8x256xf32>
    %343 = vector.shape_cast %332 : vector<8x256xf32> to vector<1x8x256xf32>
    tpu.vector_store %arg13[%c1_268, %c0_269, %c128_270], %343 {strides = array<i32>} : memref<2x8x512xf32, #tpu.memory_space<vmem>>, vector<1x8x256xf32>,
    %c1_271 = arith.constant 1 : index
    %c0_272 = arith.constant 0 : index
    %c111_273 = arith.constant 111 : index
    %344 = vector.load %arg13[%c1_271, %c0_272, %c111_273] : memref<2x8x512xf32, #tpu.memory_space<vmem>>, vector<1x8x256xf32>
    %345 = vector.shape_cast %344 : vector<1x8x256xf32> to vector<8x256xf32>
    %346 = vector.broadcast %0 : vector<1x256xf32> to vector<8x256xf32>
    %347 = arith.mulf %345, %346 : vector<8x256xf32>
    %c0_274 = arith.constant 0 : index
    %c0_275 = arith.constant 0 : index
    %c0_276 = arith.constant 0 : index
    %348 = vector.load %arg7[%c0_274, %c0_275, %c0_276] : memref<9x8x8xf32, #tpu.memory_space<vmem>>, vector<1x8x8xf32>
    %349 = vector.shape_cast %348 : vector<1x8x8xf32> to vector<8x8xf32>
    %cst_277 = arith.constant dense<0.000000e+00> : vector<8x256xf32>
    %350 = tpu.matmul %349, %347, %cst_277 {dimension_numbers = #tpu.dot_dimension_numbers<[1], [0], [0], [1], [0, 0, 1, 1], [], []>} : vector<8x8xf32>, vector<8x256xf32>, vector<8x256xf32> -> vector<8x256xf32>
    %c1_278 = arith.constant 1 : index
    %c0_279 = arith.constant 0 : index
    %c112_280 = arith.constant 112 : index
    %351 = vector.load %arg13[%c1_278, %c0_279, %c112_280] : memref<2x8x512xf32, #tpu.memory_space<vmem>>, vector<1x8x256xf32>
    %352 = vector.shape_cast %351 : vector<1x8x256xf32> to vector<8x256xf32>
    %c1_281 = arith.constant 1 : index
    %c0_282 = arith.constant 0 : index
    %c0_283 = arith.constant 0 : index
    %353 = vector.load %arg7[%c1_281, %c0_282, %c0_283] : memref<9x8x8xf32, #tpu.memory_space<vmem>>, vector<1x8x8xf32>
    %354 = vector.shape_cast %353 : vector<1x8x8xf32> to vector<8x8xf32>
    %cst_284 = arith.constant dense<0.000000e+00> : vector<8x256xf32>
    %355 = tpu.matmul %354, %352, %cst_284 {dimension_numbers = #tpu.dot_dimension_numbers<[1], [0], [0], [1], [0, 0, 1, 1], [], []>} : vector<8x8xf32>, vector<8x256xf32>, vector<8x256xf32> -> vector<8x256xf32>
    %356 = arith.addf %350, %355 : vector<8x256xf32>
    %c1_285 = arith.constant 1 : index
    %c0_286 = arith.constant 0 : index
    %c113_287 = arith.constant 113 : index
    %357 = vector.load %arg13[%c1_285, %c0_286, %c113_287] : memref<2x8x512xf32, #tpu.memory_space<vmem>>, vector<1x8x256xf32>
    %358 = vector.shape_cast %357 : vector<1x8x256xf32> to vector<8x256xf32>
    %359 = vector.broadcast %1 : vector<1x256xf32> to vector<8x256xf32>
    %360 = arith.mulf %358, %359 : vector<8x256xf32>
    %c2_288 = arith.constant 2 : index
    %c0_289 = arith.constant 0 : index
    %c0_290 = arith.constant 0 : index
    %361 = vector.load %arg7[%c2_288, %c0_289, %c0_290] : memref<9x8x8xf32, #tpu.memory_space<vmem>>, vector<1x8x8xf32>
    %362 = vector.shape_cast %361 : vector<1x8x8xf32> to vector<8x8xf32>
    %cst_291 = arith.constant dense<0.000000e+00> : vector<8x256xf32>
    %363 = tpu.matmul %362, %360, %cst_291 {dimension_numbers = #tpu.dot_dimension_numbers<[1], [0], [0], [1], [0, 0, 1, 1], [], []>} : vector<8x8xf32>, vector<8x256xf32>, vector<8x256xf32> -> vector<8x256xf32>
    %364 = arith.addf %356, %363 : vector<8x256xf32>
    %c1_292 = arith.constant 1 : index
    %c0_293 = arith.constant 0 : index
    %c127_294 = arith.constant 127 : index
    %365 = vector.load %arg13[%c1_292, %c0_293, %c127_294] : memref<2x8x512xf32, #tpu.memory_space<vmem>>, vector<1x8x256xf32>
    %366 = vector.shape_cast %365 : vector<1x8x256xf32> to vector<8x256xf32>
    %367 = vector.broadcast %0 : vector<1x256xf32> to vector<8x256xf32>
    %368 = arith.mulf %366, %367 : vector<8x256xf32>
    %c3_295 = arith.constant 3 : index
    %c0_296 = arith.constant 0 : index
    %c0_297 = arith.constant 0 : index
    %369 = vector.load %arg7[%c3_295, %c0_296, %c0_297] : memref<9x8x8xf32, #tpu.memory_space<vmem>>, vector<1x8x8xf32>
    %370 = vector.shape_cast %369 : vector<1x8x8xf32> to vector<8x8xf32>
    %cst_298 = arith.constant dense<0.000000e+00> : vector<8x256xf32>
    %371 = tpu.matmul %370, %368, %cst_298 {dimension_numbers = #tpu.dot_dimension_numbers<[1], [0], [0], [1], [0, 0, 1, 1], [], []>} : vector<8x8xf32>, vector<8x256xf32>, vector<8x256xf32> -> vector<8x256xf32>
    %372 = arith.addf %364, %371 : vector<8x256xf32>
    %c1_299 = arith.constant 1 : index
    %c0_300 = arith.constant 0 : index
    %c128_301 = arith.constant 128 : index
    %373 = vector.load %arg13[%c1_299, %c0_300, %c128_301] : memref<2x8x512xf32, #tpu.memory_space<vmem>>, vector<1x8x256xf32>
    %374 = vector.shape_cast %373 : vector<1x8x256xf32> to vector<8x256xf32>
    %c4_302 = arith.constant 4 : index
    %c0_303 = arith.constant 0 : index
    %c0_304 = arith.constant 0 : index
    %375 = vector.load %arg7[%c4_302, %c0_303, %c0_304] : memref<9x8x8xf32, #tpu.memory_space<vmem>>, vector<1x8x8xf32>
    %376 = vector.shape_cast %375 : vector<1x8x8xf32> to vector<8x8xf32>
    %cst_305 = arith.constant dense<0.000000e+00> : vector<8x256xf32>
    %377 = tpu.matmul %376, %374, %cst_305 {dimension_numbers = #tpu.dot_dimension_numbers<[1], [0], [0], [1], [0, 0, 1, 1], [], []>} : vector<8x8xf32>, vector<8x256xf32>, vector<8x256xf32> -> vector<8x256xf32>
    %378 = arith.addf %372, %377 : vector<8x256xf32>
    %c1_306 = arith.constant 1 : index
    %c0_307 = arith.constant 0 : index
    %c129_308 = arith.constant 129 : index
    %379 = vector.load %arg13[%c1_306, %c0_307, %c129_308] : memref<2x8x512xf32, #tpu.memory_space<vmem>>, vector<1x8x256xf32>
    %380 = vector.shape_cast %379 : vector<1x8x256xf32> to vector<8x256xf32>
    %381 = vector.broadcast %1 : vector<1x256xf32> to vector<8x256xf32>
    %382 = arith.mulf %380, %381 : vector<8x256xf32>
    %c5_309 = arith.constant 5 : index
    %c0_310 = arith.constant 0 : index
    %c0_311 = arith.constant 0 : index
    %383 = vector.load %arg7[%c5_309, %c0_310, %c0_311] : memref<9x8x8xf32, #tpu.memory_space<vmem>>, vector<1x8x8xf32>
    %384 = vector.shape_cast %383 : vector<1x8x8xf32> to vector<8x8xf32>
    %cst_312 = arith.constant dense<0.000000e+00> : vector<8x256xf32>
    %385 = tpu.matmul %384, %382, %cst_312 {dimension_numbers = #tpu.dot_dimension_numbers<[1], [0], [0], [1], [0, 0, 1, 1], [], []>} : vector<8x8xf32>, vector<8x256xf32>, vector<8x256xf32> -> vector<8x256xf32>
    %386 = arith.addf %378, %385 : vector<8x256xf32>
    %c1_313 = arith.constant 1 : index
    %c0_314 = arith.constant 0 : index
    %c143_315 = arith.constant 143 : index
    %387 = vector.load %arg13[%c1_313, %c0_314, %c143_315] : memref<2x8x512xf32, #tpu.memory_space<vmem>>, vector<1x8x256xf32>
    %388 = vector.shape_cast %387 : vector<1x8x256xf32> to vector<8x256xf32>
    %389 = vector.broadcast %0 : vector<1x256xf32> to vector<8x256xf32>
    %390 = arith.mulf %388, %389 : vector<8x256xf32>
    %c6_316 = arith.constant 6 : index
    %c0_317 = arith.constant 0 : index
    %c0_318 = arith.constant 0 : index
    %391 = vector.load %arg7[%c6_316, %c0_317, %c0_318] : memref<9x8x8xf32, #tpu.memory_space<vmem>>, vector<1x8x8xf32>
    %392 = vector.shape_cast %391 : vector<1x8x8xf32> to vector<8x8xf32>
    %cst_319 = arith.constant dense<0.000000e+00> : vector<8x256xf32>
    %393 = tpu.matmul %392, %390, %cst_319 {dimension_numbers = #tpu.dot_dimension_numbers<[1], [0], [0], [1], [0, 0, 1, 1], [], []>} : vector<8x8xf32>, vector<8x256xf32>, vector<8x256xf32> -> vector<8x256xf32>
    %394 = arith.addf %386, %393 : vector<8x256xf32>
    %c1_320 = arith.constant 1 : index
    %c0_321 = arith.constant 0 : index
    %c144_322 = arith.constant 144 : index
    %395 = vector.load %arg13[%c1_320, %c0_321, %c144_322] : memref<2x8x512xf32, #tpu.memory_space<vmem>>, vector<1x8x256xf32>
    %396 = vector.shape_cast %395 : vector<1x8x256xf32> to vector<8x256xf32>
    %c7_323 = arith.constant 7 : index
    %c0_324 = arith.constant 0 : index
    %c0_325 = arith.constant 0 : index
    %397 = vector.load %arg7[%c7_323, %c0_324, %c0_325] : memref<9x8x8xf32, #tpu.memory_space<vmem>>, vector<1x8x8xf32>
    %398 = vector.shape_cast %397 : vector<1x8x8xf32> to vector<8x8xf32>
    %cst_326 = arith.constant dense<0.000000e+00> : vector<8x256xf32>
    %399 = tpu.matmul %398, %396, %cst_326 {dimension_numbers = #tpu.dot_dimension_numbers<[1], [0], [0], [1], [0, 0, 1, 1], [], []>} : vector<8x8xf32>, vector<8x256xf32>, vector<8x256xf32> -> vector<8x256xf32>
    %400 = arith.addf %394, %399 : vector<8x256xf32>
    %c1_327 = arith.constant 1 : index
    %c0_328 = arith.constant 0 : index
    %c145_329 = arith.constant 145 : index
    %401 = vector.load %arg13[%c1_327, %c0_328, %c145_329] : memref<2x8x512xf32, #tpu.memory_space<vmem>>, vector<1x8x256xf32>
    %402 = vector.shape_cast %401 : vector<1x8x256xf32> to vector<8x256xf32>
    %403 = vector.broadcast %1 : vector<1x256xf32> to vector<8x256xf32>
    %404 = arith.mulf %402, %403 : vector<8x256xf32>
    %c8_330 = arith.constant 8 : index
    %c0_331 = arith.constant 0 : index
    %c0_332 = arith.constant 0 : index
    %405 = vector.load %arg7[%c8_330, %c0_331, %c0_332] : memref<9x8x8xf32, #tpu.memory_space<vmem>>, vector<1x8x8xf32>
    %406 = vector.shape_cast %405 : vector<1x8x8xf32> to vector<8x8xf32>
    %cst_333 = arith.constant dense<0.000000e+00> : vector<8x256xf32>
    %407 = tpu.matmul %406, %404, %cst_333 {dimension_numbers = #tpu.dot_dimension_numbers<[1], [0], [0], [1], [0, 0, 1, 1], [], []>} : vector<8x8xf32>, vector<8x256xf32>, vector<8x256xf32> -> vector<8x256xf32>
    %408 = arith.addf %400, %407 : vector<8x256xf32>
    %c0_334 = arith.constant 0 : index
    %c0_335 = arith.constant 0 : index
    %409 = vector.load %arg8[%c0_334, %c0_335] : memref<8x1xf32, #tpu.memory_space<vmem>>, vector<8x1xf32>
    %410 = vector.broadcast %409 : vector<8x1xf32> to vector<8x256xf32>
    %411 = arith.addf %408, %410 : vector<8x256xf32>
    %cst_336 = arith.constant 0.000000e+00 : f32
    %412 = vector.broadcast %cst_336 : f32 to vector<8x256xf32>
    %413 = arith.cmpf oge, %411, %412 : vector<8x256xf32>
    %cst_337 = arith.constant 1.000000e-01 : f32
    %414 = vector.broadcast %cst_337 : f32 to vector<8x256xf32>
    %415 = arith.mulf %411, %414 : vector<8x256xf32>
    %416 = arith.select %413, %411, %415 : vector<8x256xi1>, vector<8x256xf32>
    %c0_338 = arith.constant 0 : index
    %c0_339 = arith.constant 0 : index
    %417 = vector.load %arg9[%c0_338, %c0_339] : memref<8x4xf32, #tpu.memory_space<vmem>>, vector<8x4xf32>
    %c1_340 = arith.constant 1 : index
    %c0_341 = arith.constant 0 : index
    %c128_342 = arith.constant 128 : index
    %418 = vector.load %arg12[%c1_340, %c0_341, %c128_342] : memref<2x4x512xf32, #tpu.memory_space<vmem>>, vector<1x4x256xf32>
    %419 = vector.shape_cast %418 : vector<1x4x256xf32> to vector<4x256xf32>
    %cst_343 = arith.constant dense<0.000000e+00> : vector<8x256xf32>
    %420 = tpu.matmul %417, %419, %cst_343 {dimension_numbers = #tpu.dot_dimension_numbers<[1], [0], [0], [1], [0, 0, 1, 1], [], []>} : vector<8x4xf32>, vector<4x256xf32>, vector<8x256xf32> -> vector<8x256xf32>
    %c0_344 = arith.constant 0 : index
    %c0_345 = arith.constant 0 : index
    %421 = vector.load %arg10[%c0_344, %c0_345] : memref<8x1xf32, #tpu.memory_space<vmem>>, vector<8x1xf32>
    %422 = vector.broadcast %421 : vector<8x1xf32> to vector<8x256xf32>
    %423 = arith.addf %420, %422 : vector<8x256xf32>
    %424 = arith.addf %416, %423 : vector<8x256xf32>
    %c1_346 = arith.constant 1 : index
    %c0_347 = arith.constant 0 : index
    %c0_348 = arith.constant 0 : index
    %425 = vector.load %arg11[%c1_346, %c0_347, %c0_348] : memref<2x8x256xf32, #tpu.memory_space<vmem>>, vector<1x8x256xf32>
    %426 = vector.shape_cast %425 : vector<1x8x256xf32> to vector<8x256xf32>
    %427 = vector.shape_cast %424 : vector<8x256xf32> to vector<1x8x256xf32>
    tpu.vector_store %arg11[%c1_346, %c0_347, %c0_348], %427 {strides = array<i32>} : memref<2x8x256xf32, #tpu.memory_space<vmem>>, vector<1x8x256xf32>,
    return
  }
  func.func @transform_0(%arg0: i32) -> (i32, i32) {
    %c0_i32 = arith.constant 0 : i32
    %c0_i32_0 = arith.constant 0 : i32
    %c0_i32_1 = arith.constant 0 : i32
    return %c0_i32, %c0_i32_0 : i32, i32
  }
  func.func @transform_1(%arg0: i32) -> (i32, i32, i32) {
    %c0_i32 = arith.constant 0 : i32
    %c0_i32_0 = arith.constant 0 : i32
    %c0_i32_1 = arith.constant 0 : i32
    return %arg0, %c0_i32, %c0_i32_0 : i32, i32, i32
  }
  func.func @transform_2(%arg0: i32) -> (i32, i32, i32) {
    %c0_i32 = arith.constant 0 : i32
    %c0_i32_0 = arith.constant 0 : i32
    %c0_i32_1 = arith.constant 0 : i32
    %c0_i32_2 = arith.constant 0 : i32
    return %c0_i32, %c0_i32_0, %c0_i32_1 : i32, i32, i32
  }
  func.func @transform_3(%arg0: i32) -> (i32, i32) {
    %c0_i32 = arith.constant 0 : i32
    %c0_i32_0 = arith.constant 0 : i32
    %c0_i32_1 = arith.constant 0 : i32
    return %c0_i32, %c0_i32_0 : i32, i32
  }
  func.func @transform_4(%arg0: i32) -> (i32, i32) {
    %c0_i32 = arith.constant 0 : i32
    %c0_i32_0 = arith.constant 0 : i32
    %c0_i32_1 = arith.constant 0 : i32
    return %c0_i32, %c0_i32_0 : i32, i32
  }
  func.func @transform_5(%arg0: i32) -> (i32, i32) {
    %c0_i32 = arith.constant 0 : i32
    %c0_i32_0 = arith.constant 0 : i32
    %c0_i32_1 = arith.constant 0 : i32
    return %c0_i32, %c0_i32_0 : i32, i32
  }
  func.func @transform_6(%arg0: i32) -> (i32, i32, i32) {
    %c0_i32 = arith.constant 0 : i32
    %c0_i32_0 = arith.constant 0 : i32
    %c0_i32_1 = arith.constant 0 : i32
    %c0_i32_2 = arith.constant 0 : i32
    return %c0_i32, %c0_i32_0, %c0_i32_1 : i32, i32, i32
  }
  func.func @transform_7(%arg0: i32) -> (i32, i32) {
    %c0_i32 = arith.constant 0 : i32
    %c0_i32_0 = arith.constant 0 : i32
    %c0_i32_1 = arith.constant 0 : i32
    return %c0_i32, %c0_i32_0 : i32, i32
  }
  func.func @transform_8(%arg0: i32) -> (i32, i32) {
    %c0_i32 = arith.constant 0 : i32
    %c0_i32_0 = arith.constant 0 : i32
    %c0_i32_1 = arith.constant 0 : i32
    return %c0_i32, %c0_i32_0 : i32, i32
  }
  func.func @transform_9(%arg0: i32) -> (i32, i32) {
    %c0_i32 = arith.constant 0 : i32
    %c0_i32_0 = arith.constant 0 : i32
    %c0_i32_1 = arith.constant 0 : i32
    return %c0_i32, %c0_i32_0 : i32, i32
  }
  func.func @transform_10(%arg0: i32) -> (i32, i32, i32) {
    %c0_i32 = arith.constant 0 : i32
    %c0_i32_0 = arith.constant 0 : i32
    %c0_i32_1 = arith.constant 0 : i32
    return %arg0, %c0_i32, %c0_i32_0 : i32, i32, i32
  }
}

</mosaic_0001>

<llo_original>
// kernel: tpu_custom_call.1
$region0: #{tpu_custom_call.1}
  #allocation0 [shape = 'u32[]', space=smem, size = 0x4, offset = 0x4, fixed_abs, tag = 'smem constant byte address 0x4 - core index']
  #allocation1 [shape = 'u32[72,128]{1,0:T(1,128)}', space=vmem, size = 0x9000, scoped, tag = 'internal scratch']
  #allocation2 [shape = 'f32[2,4,512]{2,1,0:T(4,128)}', space=vmem, size = 0x4000, scoped, tag = 'scratch operand']
  #allocation3 [shape = 'f32[2,8,512]{2,1,0:T(8,128)}', space=vmem, size = 0x8000, scoped, tag = 'scratch operand']
  %s0 = inlined_call_operand.vmem [shape: f32[2,256], index: 0, kind: input, shape index: {}]
  %s1 = inlined_call_operand.vmem [shape: f32[2,4,256], index: 1, kind: input, shape index: {}]
  %s2 = inlined_call_operand.vmem [shape: f32[9,8,4], index: 2, kind: input, shape index: {}]
  %s3 = inlined_call_operand.vmem [shape: f32[8,1], index: 3, kind: input, shape index: {}]
  %s4 = inlined_call_operand.vmem [shape: f32[8,1], index: 4, kind: input, shape index: {}]
  %s5 = inlined_call_operand.vmem [shape: f32[8,1], index: 5, kind: input, shape index: {}]
  %s6 = inlined_call_operand.vmem [shape: f32[9,8,8], index: 6, kind: input, shape index: {}]
  %s7 = inlined_call_operand.vmem [shape: f32[8,1], index: 7, kind: input, shape index: {}]
  %s8 = inlined_call_operand.vmem [shape: f32[8,4], index: 8, kind: input, shape index: {}]
  %s9 = inlined_call_operand.vmem [shape: f32[8,1], index: 9, kind: input, shape index: {}]
  %s10 = inlined_call_operand.hbm [shape: f32[2,8,256], index: 10, kind: output, shape index: {}]
  %s11 = sld [smem:[#allocation0]]
  $region50: #{tpu_custom_call.1} parent=0
    _
  %s13 = ssub.s32 1, %s11
  %s14 = scalar_select 0, %s13, %s11
  $region1: #{tpu_custom_call.1} parent=0
    #allocation4 [shape = 'u8[16384]{0}', space=vmem, size = 0x4000, scoped, tag = 'output window, operand 0, single buffered']
    #allocation5 [shape = 's32[1]{0}', space=sflag, size = 0x4, scoped, tag = 'scoped memory for tpu_custom_call.1']
    %15 = vsyncpa [#allocation5], 0
    // Predicated region
    $region2: #{tpu_custom_call.1} parent=1 // pred_check
      _
    $region3: #{tpu_custom_call.1} parent=1 // pred_check_branch
      %17 = sbr.rel (0) target = $region5
    $region4: #{tpu_custom_call.1} parent=1 // pred_region
      _
    $region5: #{tpu_custom_call.1} parent=1 // pred_fallthru
      _
    // Predicated region
    $region6: #{tpu_custom_call.1} parent=1 // pred_check
      _
    $region7: #{tpu_custom_call.1} parent=1 // pred_check_branch
      %19 = sbr.rel (0) target = $region9
    $region8: #{tpu_custom_call.1} parent=1 // pred_region
      _
    $region9: #{tpu_custom_call.1} parent=1 // pred_fallthru
      _
    // Predicated region
    $region10: #{tpu_custom_call.1} parent=1 // pred_check
      _
    $region11: #{tpu_custom_call.1} parent=1 // pred_check_branch
      %21 = sbr.rel (0) target = $region13
    $region12: #{tpu_custom_call.1} parent=1 // pred_region
      _
    $region13: #{tpu_custom_call.1} parent=1 // pred_fallthru
      _
    // Predicated region
    $region14: #{tpu_custom_call.1} parent=1 // pred_check
      _
    $region15: #{tpu_custom_call.1} parent=1 // pred_check_branch
      %23 = sbr.rel (0) target = $region17
    $region16: #{tpu_custom_call.1} parent=1 // pred_region
      _
    $region17: #{tpu_custom_call.1} parent=1 // pred_fallthru
      _
    // Predicated region
    $region18: #{tpu_custom_call.1} parent=1 // pred_check
      _
    $region19: #{tpu_custom_call.1} parent=1 // pred_check_branch
      %25 = sbr.rel (0) target = $region21
    $region20: #{tpu_custom_call.1} parent=1 // pred_region
      _
    $region21: #{tpu_custom_call.1} parent=1 // pred_fallthru
      _
    // Predicated region
    $region22: #{tpu_custom_call.1} parent=1 // pred_check
      _
    $region23: #{tpu_custom_call.1} parent=1 // pred_check_branch
      %27 = sbr.rel (0) target = $region25
    $region24: #{tpu_custom_call.1} parent=1 // pred_region
      _
    $region25: #{tpu_custom_call.1} parent=1 // pred_fallthru
      _
    // Predicated region
    $region26: #{tpu_custom_call.1} parent=1 // pred_check
      _
    $region27: #{tpu_custom_call.1} parent=1 // pred_check_branch
      %29 = sbr.rel (0) target = $region29
    $region28: #{tpu_custom_call.1} parent=1 // pred_region
      _
    $region29: #{tpu_custom_call.1} parent=1 // pred_fallthru
      _
    // Predicated region
    $region30: #{tpu_custom_call.1} parent=1 // pred_check
      _
    $region31: #{tpu_custom_call.1} parent=1 // pred_check_branch
      %31 = sbr.rel (0) target = $region33
    $region32: #{tpu_custom_call.1} parent=1 // pred_region
      _
    $region33: #{tpu_custom_call.1} parent=1 // pred_fallthru
      _
    // Predicated region
    $region34: #{tpu_custom_call.1} parent=1 // pred_check
      _
    $region35: #{tpu_custom_call.1} parent=1 // pred_check_branch
      %33 = sbr.rel (0) target = $region37
    $region36: #{tpu_custom_call.1} parent=1 // pred_region
      _
    $region37: #{tpu_custom_call.1} parent=1 // pred_fallthru
      _
    // Predicated region
    $region38: #{tpu_custom_call.1} parent=1 // pred_check
      _
    $region39: #{tpu_custom_call.1} parent=1 // pred_check_branch
      %35 = sbr.rel (0) target = $region41
    $region40: #{tpu_custom_call.1} parent=1 // pred_region
      _
    $region41: #{tpu_custom_call.1} parent=1 // pred_fallthru
      _
    %v36 = vld [vmem:[%s0] ss:$2 sm:$0x3]
    %s37 = scalar_lea.vmem %s0, 1
    %v38 = vld [vmem:[%s37] ss:$2 sm:$0x3]
    %39 = vst [vmem:[#allocation2] sm:$0xf] 0.0
    %40 = vst [vmem:[#allocation2 + $0xc] sm:$0xf] 0.0
    %v41 = vld [vmem:[%s1] sm:$0xff]
    %42 = vst [vmem:[#allocation2 + $0x4] sm:$0xff] %v41
    %v43 = vld [vmem:[#allocation2] sm:$0xff]
    %v44 = vld [vmem:[#allocation2 + $0x8] sm:$0xf]
    %v46 = vperm.slane %v36, 0
    %v47 = vperm.slane %v36, 1
    %v48 = vrot.slane %v47, 4
    %vm49 = vcmask 1043456
    %v50 = vsel %vm49, %v46, %v48
    %51 = vrot.lane.b32.xlu0 %v50, 111
    %v52 = vpop.permute.xlu0 %51
    %v53 = vrot.slane %v52, 4
    %vm54 = vcmask 908288
    %v55 = vsel %vm54, %v53, %v52
    %v58 = vmul.f32 %v43, %v55
    %v59 = vmul.f32 %v44, %v53
    %v60 = vld [vmem:[%s2] sm:$0xff]
    %s61 = scalar_lea.vmem %s2, 8
    %v62 = vld [vmem:[%s61] sm:$0xff]
    %65 = vst [vmem:[#allocation1] ss:$2 sm:$0xff] %v43
    %s66 = scalar_lea.vmem [#allocation1], 16
    %67 = vst [vmem:[%s66] ss:$2 sm:$0xff] %v44
    %v68 = vld.sshfl [vmem:[#allocation1] sm:$0xff pattern:$0x75316420]
    %v69 = vld.sshfl [vmem:[#allocation1 + $0x8] sm:$0xff pattern:$0x75316420]
    %v70 = vld.sshfl [vmem:[#allocation1 + $0x10] sm:$0xff pattern:$0x75316420]
    %71 = vrot.lane.b32.xlu0 %v68, 16
    %v72 = vpop.permute.xlu0 %71
    %73 = vrot.lane.b32.xlu0 %v69, 16
    %v74 = vpop.permute.xlu0 %73
    %75 = vrot.lane.b32.xlu0 %v70, 16
    %v76 = vpop.permute.xlu0 %75
    %vm77 = vcmask 130048
    %v78 = vsel %vm77, %v72, %v74
    %v79 = vsel %vm77, %v74, %v76
    %vm80 = vcmask 31744
    %v82 = vsel %vm80, %v62, 0
    %v84 = vsel %vm49, %v78, 0
    %v86 = vsel %vm49, %v79, 0
    %88 = vmatpush.msra.mxu0 0.0
    %89 = vmatpush.msra.mxu0 0.0
    %90 = vmatpush.msra.mxu0 0.0
    %91 = vmatpush.msra.mxu0 0.0
    %92 = vmatpush.msra.mxu0 0.0
    %93 = vmatpush.msra.mxu0 0.0
    %94 = vmatpush.msra.mxu0 0.0
    %95 = vmatpush.msra.mxu0 0.0
    %96 = vmatpush.msra.mxu0 0.0
    %97 = vmatpush.msra.mxu0 0.0
    %98 = vmatpush.msra.mxu0 0.0
    %99 = vmatpush.msra.mxu0 0.0
    %100 = vmatpush.msra.mxu0 0.0
    %101 = vmatpush.msra.mxu0 0.0
    %102 = vmatpush.msra.mxu0 0.0
    %103 = vmatpush.msra.mxu0 %v84
    %104 = vmatmul.f32.gmra.mxu0 %v82
    %v105 = vpop.f32.mrf.mxu0
    %v106 = vadd.f32 0.0, %v105
    %107 = vdwg.mxu0
    %108 = vmatpush.msra.mxu0 0.0
    %109 = vmatpush.msra.mxu0 0.0
    %110 = vmatpush.msra.mxu0 0.0
    %111 = vmatpush.msra.mxu0 0.0
    %112 = vmatpush.msra.mxu0 0.0
    %113 = vmatpush.msra.mxu0 0.0
    %114 = vmatpush.msra.mxu0 0.0
    %115 = vmatpush.msra.mxu0 0.0
    %116 = vmatpush.msra.mxu0 0.0
    %117 = vmatpush.msra.mxu0 0.0
    %118 = vmatpush.msra.mxu0 0.0
    %119 = vmatpush.msra.mxu0 0.0
    %120 = vmatpush.msra.mxu0 0.0
    %121 = vmatpush.msra.mxu0 0.0
    %122 = vmatpush.msra.mxu0 0.0
    %123 = vmatpush.msra.mxu0 %v86
    %124 = vmatmul.f32.gmra.mxu0 %v82
    %v125 = vpop.f32.mrf.mxu0
    %v126 = vadd.f32 0.0, %v125
    %127 = vdwg.mxu0
    %130 = vst [vmem:[#allocation1] ss:$2 sm:$0xff] %v58
    %s131 = scalar_lea.vmem [#allocation1], 16
    %132 = vst [vmem:[%s131] ss:$2 sm:$0xff] %v59
    %v133 = vld.sshfl [vmem:[#allocation1] sm:$0xff pattern:$0x75316420]
    %v134 = vld.sshfl [vmem:[#allocation1 + $0x8] sm:$0xff pattern:$0x75316420]
    %v135 = vld.sshfl [vmem:[#allocation1 + $0x10] sm:$0xff pattern:$0x75316420]
    %136 = vrot.lane.b32.xlu0 %v133, 17
    %v137 = vpop.permute.xlu0 %136
    %138 = vrot.lane.b32.xlu0 %v134, 17
    %v139 = vpop.permute.xlu0 %138
    %140 = vrot.lane.b32.xlu0 %v135, 17
    %v141 = vpop.permute.xlu0 %140
    %vm142 = vcmask 138240
    %v143 = vsel %vm142, %v137, %v139
    %v144 = vsel %vm142, %v139, %v141
    %v146 = vsel %vm80, %v60, 0
    %v148 = vsel %vm49, %v143, 0
    %v150 = vsel %vm49, %v144, 0
    %152 = vmatpush.msra.mxu0 0.0
    %153 = vmatpush.msra.mxu0 0.0
    %154 = vmatpush.msra.mxu0 0.0
    %155 = vmatpush.msra.mxu0 0.0
    %156 = vmatpush.msra.mxu0 0.0
    %157 = vmatpush.msra.mxu0 0.0
    %158 = vmatpush.msra.mxu0 0.0
    %159 = vmatpush.msra.mxu0 0.0
    %160 = vmatpush.msra.mxu0 0.0
    %161 = vmatpush.msra.mxu0 0.0
    %162 = vmatpush.msra.mxu0 0.0
    %163 = vmatpush.msra.mxu0 0.0
    %164 = vmatpush.msra.mxu0 0.0
    %165 = vmatpush.msra.mxu0 0.0
    %166 = vmatpush.msra.mxu0 0.0
    %167 = vmatpush.msra.mxu0 %v148
    %168 = vmatmul.f32.gmra.mxu0 %v146
    %v169 = vpop.f32.mrf.mxu0
    %v170 = vadd.f32 %v106, %v169
    %171 = vdwg.mxu0
    %172 = vmatpush.msra.mxu0 0.0
    %173 = vmatpush.msra.mxu0 0.0
    %174 = vmatpush.msra.mxu0 0.0
    %175 = vmatpush.msra.mxu0 0.0
    %176 = vmatpush.msra.mxu0 0.0
    %177 = vmatpush.msra.mxu0 0.0
    %178 = vmatpush.msra.mxu0 0.0
    %179 = vmatpush.msra.mxu0 0.0
    %180 = vmatpush.msra.mxu0 0.0
    %181 = vmatpush.msra.mxu0 0.0
    %182 = vmatpush.msra.mxu0 0.0
    %183 = vmatpush.msra.mxu0 0.0
    %184 = vmatpush.msra.mxu0 0.0
    %185 = vmatpush.msra.mxu0 0.0
    %186 = vmatpush.msra.mxu0 0.0
    %187 = vmatpush.msra.mxu0 %v150
    %188 = vmatmul.f32.gmra.mxu0 %v146
    %v189 = vpop.f32.mrf.mxu0
    %v190 = vadd.f32 %v126, %v189
    %191 = vdwg.mxu0
    %v192 = vld [vmem:[#allocation2] sm:$0xff]
    %v193 = vld [vmem:[#allocation2 + $0x8] sm:$0xf]
    %v195 = vperm.slane %v38, 0
    %v196 = vperm.slane %v38, 1
    %v197 = vrot.slane %v196, 4
    %v198 = vsel %vm49, %v195, %v197
    %199 = vrot.lane.b32.xlu0 %v198, 113
    %v200 = vpop.permute.xlu0 %199
    %v201 = vrot.slane %v200, 4
    %vm202 = vcmask 924672
    %v203 = vsel %vm202, %v201, %v200
    %v206 = vmul.f32 %v192, %v203
    %v207 = vmul.f32 %v193, %v201
    %s208 = scalar_lea.vmem %s2, 16
    %v209 = vld [vmem:[%s208] sm:$0xff]
    %212 = vst [vmem:[#allocation1] ss:$2 sm:$0xff] %v206
    %s213 = scalar_lea.vmem [#allocation1], 16
    %214 = vst [vmem:[%s213] ss:$2 sm:$0xff] %v207
    %v215 = vld.sshfl [vmem:[#allocation1] sm:$0xff pattern:$0x75316420]
    %v216 = vld.sshfl [vmem:[#allocation1 + $0x8] sm:$0xff pattern:$0x75316420]
    %v217 = vld.sshfl [vmem:[#allocation1 + $0x10] sm:$0xff pattern:$0x75316420]
    %218 = vrot.lane.b32.xlu0 %v215, 15
    %v219 = vpop.permute.xlu0 %218
    %220 = vrot.lane.b32.xlu0 %v216, 15
    %v221 = vpop.permute.xlu0 %220
    %222 = vrot.lane.b32.xlu0 %v217, 15
    %v223 = vpop.permute.xlu0 %222
    %vm224 = vcmask 121856
    %v225 = vsel %vm224, %v219, %v221
    %v226 = vsel %vm224, %v221, %v223
    %v228 = vsel %vm80, %v209, 0
    %v230 = vsel %vm49, %v225, 0
    %v232 = vsel %vm49, %v226, 0
    %234 = vmatpush.msra.mxu0 0.0
    %235 = vmatpush.msra.mxu0 0.0
    %236 = vmatpush.msra.mxu0 0.0
    %237 = vmatpush.msra.mxu0 0.0
    %238 = vmatpush.msra.mxu0 0.0
    %239 = vmatpush.msra.mxu0 0.0
    %240 = vmatpush.msra.mxu0 0.0
    %241 = vmatpush.msra.mxu0 0.0
    %242 = vmatpush.msra.mxu0 0.0
    %243 = vmatpush.msra.mxu0 0.0
    %244 = vmatpush.msra.mxu0 0.0
    %245 = vmatpush.msra.mxu0 0.0
    %246 = vmatpush.msra.mxu0 0.0
    %247 = vmatpush.msra.mxu0 0.0
    %248 = vmatpush.msra.mxu0 0.0
    %249 = vmatpush.msra.mxu0 %v230
    %250 = vmatmul.f32.gmra.mxu0 %v228
    %v251 = vpop.f32.mrf.mxu0
    %v252 = vadd.f32 0.0, %v251
    %253 = vdwg.mxu0
    %254 = vmatpush.msra.mxu0 0.0
    %255 = vmatpush.msra.mxu0 0.0
    %256 = vmatpush.msra.mxu0 0.0
    %257 = vmatpush.msra.mxu0 0.0
    %258 = vmatpush.msra.mxu0 0.0
    %259 = vmatpush.msra.mxu0 0.0
    %260 = vmatpush.msra.mxu0 0.0
    %261 = vmatpush.msra.mxu0 0.0
    %262 = vmatpush.msra.mxu0 0.0
    %263 = vmatpush.msra.mxu0 0.0
    %264 = vmatpush.msra.mxu0 0.0
    %265 = vmatpush.msra.mxu0 0.0
    %266 = vmatpush.msra.mxu0 0.0
    %267 = vmatpush.msra.mxu0 0.0
    %268 = vmatpush.msra.mxu0 0.0
    %269 = vmatpush.msra.mxu0 %v232
    %270 = vmatmul.f32.gmra.mxu0 %v228
    %v271 = vpop.f32.mrf.mxu0
    %v272 = vadd.f32 0.0, %v271
    %273 = vdwg.mxu0
    %v274 = vadd.f32 %v170, %v252
    %v275 = vadd.f32 %v190, %v272
    %v276 = vld [vmem:[#allocation2] sm:$0xff]
    %v277 = vld [vmem:[#allocation2 + $0x8] sm:$0xf]
    %278 = vrot.lane.b32.xlu0 %v50, 127
    %v279 = vpop.permute.xlu0 %278
    %v280 = vrot.slane %v279, 4
    %vm281 = vcmask 1039360
    %v282 = vsel %vm281, %v280, %v279
    %v285 = vmul.f32 %v276, %v282
    %v286 = vmul.f32 %v277, %v280
    %s287 = scalar_lea.vmem %s2, 24
    %v288 = vld [vmem:[%s287] sm:$0xff]
    %291 = vst [vmem:[#allocation1] ss:$2 sm:$0xff] %v285
    %s292 = scalar_lea.vmem [#allocation1], 16
    %293 = vst [vmem:[%s292] ss:$2 sm:$0xff] %v286
    %v294 = vld.sshfl [vmem:[#allocation1] sm:$0xff pattern:$0x75316420]
    %v295 = vld.sshfl [vmem:[#allocation1 + $0x8] sm:$0xff pattern:$0x75316420]
    %v296 = vld.sshfl [vmem:[#allocation1 + $0x10] sm:$0xff pattern:$0x75316420]
    %297 = vrot.lane.b32.xlu0 %v294, 1
    %v298 = vpop.permute.xlu0 %297
    %299 = vrot.lane.b32.xlu0 %v295, 1
    %v300 = vpop.permute.xlu0 %299
    %301 = vrot.lane.b32.xlu0 %v296, 1
    %v302 = vpop.permute.xlu0 %301
    %vm303 = vcmask 7168
    %v304 = vsel %vm303, %v298, %v300
    %v305 = vsel %vm303, %v300, %v302
    %v307 = vsel %vm80, %v288, 0
    %v309 = vsel %vm49, %v304, 0
    %v311 = vsel %vm49, %v305, 0
    %313 = vmatpush.msra.mxu0 0.0
    %314 = vmatpush.msra.mxu0 0.0
    %315 = vmatpush.msra.mxu0 0.0
    %316 = vmatpush.msra.mxu0 0.0
    %317 = vmatpush.msra.mxu0 0.0
    %318 = vmatpush.msra.mxu0 0.0
    %319 = vmatpush.msra.mxu0 0.0
    %320 = vmatpush.msra.mxu0 0.0
    %321 = vmatpush.msra.mxu0 0.0
    %322 = vmatpush.msra.mxu0 0.0
    %323 = vmatpush.msra.mxu0 0.0
    %324 = vmatpush.msra.mxu0 0.0
    %325 = vmatpush.msra.mxu0 0.0
    %326 = vmatpush.msra.mxu0 0.0
    %327 = vmatpush.msra.mxu0 0.0
    %328 = vmatpush.msra.mxu0 %v309
    %329 = vmatmul.f32.gmra.mxu0 %v307
    %v330 = vpop.f32.mrf.mxu0
    %v331 = vadd.f32 0.0, %v330
    %332 = vdwg.mxu0
    %333 = vmatpush.msra.mxu0 0.0
    %334 = vmatpush.msra.mxu0 0.0
    %335 = vmatpush.msra.mxu0 0.0
    %336 = vmatpush.msra.mxu0 0.0
    %337 = vmatpush.msra.mxu0 0.0
    %338 = vmatpush.msra.mxu0 0.0
    %339 = vmatpush.msra.mxu0 0.0
    %340 = vmatpush.msra.mxu0 0.0
    %341 = vmatpush.msra.mxu0 0.0
    %342 = vmatpush.msra.mxu0 0.0
    %343 = vmatpush.msra.mxu0 0.0
    %344 = vmatpush.msra.mxu0 0.0
    %345 = vmatpush.msra.mxu0 0.0
    %346 = vmatpush.msra.mxu0 0.0
    %347 = vmatpush.msra.mxu0 0.0
    %348 = vmatpush.msra.mxu0 %v311
    %349 = vmatmul.f32.gmra.mxu0 %v307
    %v350 = vpop.f32.mrf.mxu0
    %v351 = vadd.f32 0.0, %v350
    %352 = vdwg.mxu0
    %v353 = vadd.f32 %v274, %v331
    %v354 = vadd.f32 %v275, %v351
    %v355 = vld [vmem:[#allocation2 + $0x4] sm:$0xff]
    %s356 = scalar_lea.vmem %s2, 32
    %v357 = vld [vmem:[%s356] sm:$0xff]
    %359 = vst [vmem:[#allocation1] ss:$2 sm:$0xff] %v355
    %v360 = vld.sshfl [vmem:[#allocation1] sm:$0xff pattern:$0x75316420]
    %v361 = vld.sshfl [vmem:[#allocation1 + $0x8] sm:$0xff pattern:$0x75316420]
    %v363 = vsel %vm80, %v357, 0
    %v365 = vsel %vm49, %v360, 0
    %v367 = vsel %vm49, %v361, 0
    %369 = vmatpush.msra.mxu0 0.0
    %370 = vmatpush.msra.mxu0 0.0
    %371 = vmatpush.msra.mxu0 0.0
    %372 = vmatpush.msra.mxu0 0.0
    %373 = vmatpush.msra.mxu0 0.0
    %374 = vmatpush.msra.mxu0 0.0
    %375 = vmatpush.msra.mxu0 0.0
    %376 = vmatpush.msra.mxu0 0.0
    %377 = vmatpush.msra.mxu0 0.0
    %378 = vmatpush.msra.mxu0 0.0
    %379 = vmatpush.msra.mxu0 0.0
    %380 = vmatpush.msra.mxu0 0.0
    %381 = vmatpush.msra.mxu0 0.0
    %382 = vmatpush.msra.mxu0 0.0
    %383 = vmatpush.msra.mxu0 0.0
    %384 = vmatpush.msra.mxu0 %v365
    %385 = vmatmul.f32.gmra.mxu0 %v363
    %v386 = vpop.f32.mrf.mxu0
    %v387 = vadd.f32 0.0, %v386
    %388 = vdwg.mxu0
    %389 = vmatpush.msra.mxu0 0.0
    %390 = vmatpush.msra.mxu0 0.0
    %391 = vmatpush.msra.mxu0 0.0
    %392 = vmatpush.msra.mxu0 0.0
    %393 = vmatpush.msra.mxu0 0.0
    %394 = vmatpush.msra.mxu0 0.0
    %395 = vmatpush.msra.mxu0 0.0
    %396 = vmatpush.msra.mxu0 0.0
    %397 = vmatpush.msra.mxu0 0.0
    %398 = vmatpush.msra.mxu0 0.0
    %399 = vmatpush.msra.mxu0 0.0
    %400 = vmatpush.msra.mxu0 0.0
    %401 = vmatpush.msra.mxu0 0.0
    %402 = vmatpush.msra.mxu0 0.0
    %403 = vmatpush.msra.mxu0 0.0
    %404 = vmatpush.msra.mxu0 %v367
    %405 = vmatmul.f32.gmra.mxu0 %v363
    %v406 = vpop.f32.mrf.mxu0
    %v407 = vadd.f32 0.0, %v406
    %408 = vdwg.mxu0
    %v409 = vadd.f32 %v353, %v387
    %v410 = vadd.f32 %v354, %v407
    %v411 = vld [vmem:[#allocation2 + $0x4] sm:$0xff]
    %v412 = vld [vmem:[#allocation2 + $0xc] sm:$0xf]
    %413 = vrot.lane.b32.xlu0 %v198, 1
    %v414 = vpop.permute.xlu0 %413
    %v415 = vrot.slane %v414, 4
    %v416 = vsel %vm303, %v415, %v414
    %v419 = vmul.f32 %v411, %v416
    %v420 = vmul.f32 %v412, %v415
    %s421 = scalar_lea.vmem %s2, 40
    %v422 = vld [vmem:[%s421] sm:$0xff]
    %425 = vst [vmem:[#allocation1] ss:$2 sm:$0xff] %v419
    %s426 = scalar_lea.vmem [#allocation1], 16
    %427 = vst [vmem:[%s426] ss:$2 sm:$0xff] %v420
    %v428 = vld.sshfl [vmem:[#allocation1] sm:$0xff pattern:$0x75316420]
    %v429 = vld.sshfl [vmem:[#allocation1 + $0x8] sm:$0xff pattern:$0x75316420]
    %v430 = vld.sshfl [vmem:[#allocation1 + $0x10] sm:$0xff pattern:$0x75316420]
    %431 = vrot.lane.b32.xlu0 %v428, 127
    %v432 = vpop.permute.xlu0 %431
    %433 = vrot.lane.b32.xlu0 %v429, 127
    %v434 = vpop.permute.xlu0 %433
    %435 = vrot.lane.b32.xlu0 %v430, 127
    %v436 = vpop.permute.xlu0 %435
    %v437 = vsel %vm281, %v432, %v434
    %v438 = vsel %vm281, %v434, %v436
    %v440 = vsel %vm80, %v422, 0
    %v442 = vsel %vm49, %v437, 0
    %v444 = vsel %vm49, %v438, 0
    %446 = vmatpush.msra.mxu0 0.0
    %447 = vmatpush.msra.mxu0 0.0
    %448 = vmatpush.msra.mxu0 0.0
    %449 = vmatpush.msra.mxu0 0.0
    %450 = vmatpush.msra.mxu0 0.0
    %451 = vmatpush.msra.mxu0 0.0
    %452 = vmatpush.msra.mxu0 0.0
    %453 = vmatpush.msra.mxu0 0.0
    %454 = vmatpush.msra.mxu0 0.0
    %455 = vmatpush.msra.mxu0 0.0
    %456 = vmatpush.msra.mxu0 0.0
    %457 = vmatpush.msra.mxu0 0.0
    %458 = vmatpush.msra.mxu0 0.0
    %459 = vmatpush.msra.mxu0 0.0
    %460 = vmatpush.msra.mxu0 0.0
    %461 = vmatpush.msra.mxu0 %v442
    %462 = vmatmul.f32.gmra.mxu0 %v440
    %v463 = vpop.f32.mrf.mxu0
    %v464 = vadd.f32 0.0, %v463
    %465 = vdwg.mxu0
    %466 = vmatpush.msra.mxu0 0.0
    %467 = vmatpush.msra.mxu0 0.0
    %468 = vmatpush.msra.mxu0 0.0
    %469 = vmatpush.msra.mxu0 0.0
    %470 = vmatpush.msra.mxu0 0.0
    %471 = vmatpush.msra.mxu0 0.0
    %472 = vmatpush.msra.mxu0 0.0
    %473 = vmatpush.msra.mxu0 0.0
    %474 = vmatpush.msra.mxu0 0.0
    %475 = vmatpush.msra.mxu0 0.0
    %476 = vmatpush.msra.mxu0 0.0
    %477 = vmatpush.msra.mxu0 0.0
    %478 = vmatpush.msra.mxu0 0.0
    %479 = vmatpush.msra.mxu0 0.0
    %480 = vmatpush.msra.mxu0 0.0
    %481 = vmatpush.msra.mxu0 %v444
    %482 = vmatmul.f32.gmra.mxu0 %v440
    %v483 = vpop.f32.mrf.mxu0
    %v484 = vadd.f32 0.0, %v483
    %485 = vdwg.mxu0
    %v486 = vadd.f32 %v409, %v464
    %v487 = vadd.f32 %v410, %v484
    %v488 = vld [vmem:[#allocation2 + $0x4] sm:$0xff]
    %v489 = vld [vmem:[#allocation2 + $0xc] sm:$0xf]
    %490 = vrot.lane.b32.xlu0 %v50, 15
    %v491 = vpop.permute.xlu0 %490
    %v492 = vrot.slane %v491, 4
    %v493 = vsel %vm224, %v492, %v491
    %v496 = vmul.f32 %v488, %v493
    %v497 = vmul.f32 %v489, %v492
    %s498 = scalar_lea.vmem %s2, 48
    %v499 = vld [vmem:[%s498] sm:$0xff]
    %502 = vst [vmem:[#allocation1] ss:$2 sm:$0xff] %v496
    %s503 = scalar_lea.vmem [#allocation1], 16
    %504 = vst [vmem:[%s503] ss:$2 sm:$0xff] %v497
    %v505 = vld.sshfl [vmem:[#allocation1] sm:$0xff pattern:$0x75316420]
    %v506 = vld.sshfl [vmem:[#allocation1 + $0x8] sm:$0xff pattern:$0x75316420]
    %v507 = vld.sshfl [vmem:[#allocation1 + $0x10] sm:$0xff pattern:$0x75316420]
    %508 = vrot.lane.b32.xlu0 %v505, 113
    %v509 = vpop.permute.xlu0 %508
    %510 = vrot.lane.b32.xlu0 %v506, 113
    %v511 = vpop.permute.xlu0 %510
    %512 = vrot.lane.b32.xlu0 %v507, 113
    %v513 = vpop.permute.xlu0 %512
    %v514 = vsel %vm202, %v509, %v511
    %v515 = vsel %vm202, %v511, %v513
    %v517 = vsel %vm80, %v499, 0
    %v519 = vsel %vm49, %v514, 0
    %v521 = vsel %vm49, %v515, 0
    %523 = vmatpush.msra.mxu0 0.0
    %524 = vmatpush.msra.mxu0 0.0
    %525 = vmatpush.msra.mxu0 0.0
    %526 = vmatpush.msra.mxu0 0.0
    %527 = vmatpush.msra.mxu0 0.0
    %528 = vmatpush.msra.mxu0 0.0
    %529 = vmatpush.msra.mxu0 0.0
    %530 = vmatpush.msra.mxu0 0.0
    %531 = vmatpush.msra.mxu0 0.0
    %532 = vmatpush.msra.mxu0 0.0
    %533 = vmatpush.msra.mxu0 0.0
    %534 = vmatpush.msra.mxu0 0.0
    %535 = vmatpush.msra.mxu0 0.0
    %536 = vmatpush.msra.mxu0 0.0
    %537 = vmatpush.msra.mxu0 0.0
    %538 = vmatpush.msra.mxu0 %v519
    %539 = vmatmul.f32.gmra.mxu0 %v517
    %v540 = vpop.f32.mrf.mxu0
    %v541 = vadd.f32 0.0, %v540
    %542 = vdwg.mxu0
    %543 = vmatpush.msra.mxu0 0.0
    %544 = vmatpush.msra.mxu0 0.0
    %545 = vmatpush.msra.mxu0 0.0
    %546 = vmatpush.msra.mxu0 0.0
    %547 = vmatpush.msra.mxu0 0.0
    %548 = vmatpush.msra.mxu0 0.0
    %549 = vmatpush.msra.mxu0 0.0
    %550 = vmatpush.msra.mxu0 0.0
    %551 = vmatpush.msra.mxu0 0.0
    %552 = vmatpush.msra.mxu0 0.0
    %553 = vmatpush.msra.mxu0 0.0
    %554 = vmatpush.msra.mxu0 0.0
    %555 = vmatpush.msra.mxu0 0.0
    %556 = vmatpush.msra.mxu0 0.0
    %557 = vmatpush.msra.mxu0 0.0
    %558 = vmatpush.msra.mxu0 %v521
    %559 = vmatmul.f32.gmra.mxu0 %v517
    %v560 = vpop.f32.mrf.mxu0
    %v561 = vadd.f32 0.0, %v560
    %562 = vdwg.mxu0
    %v563 = vadd.f32 %v486, %v541
    %v564 = vadd.f32 %v487, %v561
    %v565 = vld [vmem:[#allocation2 + $0x4] sm:$0xff]
    %v566 = vld [vmem:[#allocation2 + $0xc] sm:$0xf]
    %s567 = scalar_lea.vmem %s2, 56
    %v568 = vld [vmem:[%s567] sm:$0xff]
    %571 = vst [vmem:[#allocation1] ss:$2 sm:$0xff] %v565
    %s572 = scalar_lea.vmem [#allocation1], 16
    %573 = vst [vmem:[%s572] ss:$2 sm:$0xff] %v566
    %v574 = vld.sshfl [vmem:[#allocation1] sm:$0xff pattern:$0x75316420]
    %v575 = vld.sshfl [vmem:[#allocation1 + $0x8] sm:$0xff pattern:$0x75316420]
    %v576 = vld.sshfl [vmem:[#allocation1 + $0x10] sm:$0xff pattern:$0x75316420]
    %577 = vrot.lane.b32.xlu0 %v574, 112
    %v578 = vpop.permute.xlu0 %577
    %579 = vrot.lane.b32.xlu0 %v575, 112
    %v580 = vpop.permute.xlu0 %579
    %581 = vrot.lane.b32.xlu0 %v576, 112
    %v582 = vpop.permute.xlu0 %581
    %vm583 = vcmask 916480
    %v584 = vsel %vm583, %v578, %v580
    %v585 = vsel %vm583, %v580, %v582
    %v587 = vsel %vm80, %v568, 0
    %v589 = vsel %vm49, %v584, 0
    %v591 = vsel %vm49, %v585, 0
    %593 = vmatpush.msra.mxu0 0.0
    %594 = vmatpush.msra.mxu0 0.0
    %595 = vmatpush.msra.mxu0 0.0
    %596 = vmatpush.msra.mxu0 0.0
    %597 = vmatpush.msra.mxu0 0.0
    %598 = vmatpush.msra.mxu0 0.0
    %599 = vmatpush.msra.mxu0 0.0
    %600 = vmatpush.msra.mxu0 0.0
    %601 = vmatpush.msra.mxu0 0.0
    %602 = vmatpush.msra.mxu0 0.0
    %603 = vmatpush.msra.mxu0 0.0
    %604 = vmatpush.msra.mxu0 0.0
    %605 = vmatpush.msra.mxu0 0.0
    %606 = vmatpush.msra.mxu0 0.0
    %607 = vmatpush.msra.mxu0 0.0
    %608 = vmatpush.msra.mxu0 %v589
    %609 = vmatmul.f32.gmra.mxu0 %v587
    %v610 = vpop.f32.mrf.mxu0
    %v611 = vadd.f32 0.0, %v610
    %612 = vdwg.mxu0
    %613 = vmatpush.msra.mxu0 0.0
    %614 = vmatpush.msra.mxu0 0.0
    %615 = vmatpush.msra.mxu0 0.0
    %616 = vmatpush.msra.mxu0 0.0
    %617 = vmatpush.msra.mxu0 0.0
    %618 = vmatpush.msra.mxu0 0.0
    %619 = vmatpush.msra.mxu0 0.0
    %620 = vmatpush.msra.mxu0 0.0
    %621 = vmatpush.msra.mxu0 0.0
    %622 = vmatpush.msra.mxu0 0.0
    %623 = vmatpush.msra.mxu0 0.0
    %624 = vmatpush.msra.mxu0 0.0
    %625 = vmatpush.msra.mxu0 0.0
    %626 = vmatpush.msra.mxu0 0.0
    %627 = vmatpush.msra.mxu0 0.0
    %628 = vmatpush.msra.mxu0 %v591
    %629 = vmatmul.f32.gmra.mxu0 %v587
    %v630 = vpop.f32.mrf.mxu0
    %v631 = vadd.f32 0.0, %v630
    %632 = vdwg.mxu0
    %v633 = vadd.f32 %v563, %v611
    %v634 = vadd.f32 %v564, %v631
    %v635 = vld [vmem:[#allocation2 + $0x4] sm:$0xff]
    %v636 = vld [vmem:[#allocation2 + $0xc] sm:$0xf]
    %637 = vrot.lane.b32.xlu0 %v198, 17
    %v638 = vpop.permute.xlu0 %637
    %v639 = vrot.slane %v638, 4
    %v640 = vsel %vm142, %v639, %v638
    %v643 = vmul.f32 %v635, %v640
    %v644 = vmul.f32 %v636, %v639
    %s645 = scalar_lea.vmem %s2, 64
    %v646 = vld [vmem:[%s645] sm:$0xff]
    %649 = vst [vmem:[#allocation1] ss:$2 sm:$0xff] %v643
    %s650 = scalar_lea.vmem [#allocation1], 16
    %651 = vst [vmem:[%s650] ss:$2 sm:$0xff] %v644
    %v652 = vld.sshfl [vmem:[#allocation1] sm:$0xff pattern:$0x75316420]
    %v653 = vld.sshfl [vmem:[#allocation1 + $0x8] sm:$0xff pattern:$0x75316420]
    %v654 = vld.sshfl [vmem:[#allocation1 + $0x10] sm:$0xff pattern:$0x75316420]
    %655 = vrot.lane.b32.xlu0 %v652, 111
    %v656 = vpop.permute.xlu0 %655
    %657 = vrot.lane.b32.xlu0 %v653, 111
    %v658 = vpop.permute.xlu0 %657
    %659 = vrot.lane.b32.xlu0 %v654, 111
    %v660 = vpop.permute.xlu0 %659
    %v661 = vsel %vm54, %v656, %v658
    %v662 = vsel %vm54, %v658, %v660
    %v664 = vsel %vm80, %v646, 0
    %v666 = vsel %vm49, %v661, 0
    %v668 = vsel %vm49, %v662, 0
    %670 = vmatpush.msra.mxu0 0.0
    %671 = vmatpush.msra.mxu0 0.0
    %672 = vmatpush.msra.mxu0 0.0
    %673 = vmatpush.msra.mxu0 0.0
    %674 = vmatpush.msra.mxu0 0.0
    %675 = vmatpush.msra.mxu0 0.0
    %676 = vmatpush.msra.mxu0 0.0
    %677 = vmatpush.msra.mxu0 0.0
    %678 = vmatpush.msra.mxu0 0.0
    %679 = vmatpush.msra.mxu0 0.0
    %680 = vmatpush.msra.mxu0 0.0
    %681 = vmatpush.msra.mxu0 0.0
    %682 = vmatpush.msra.mxu0 0.0
    %683 = vmatpush.msra.mxu0 0.0
    %684 = vmatpush.msra.mxu0 0.0
    %685 = vmatpush.msra.mxu0 %v666
    %686 = vmatmul.f32.gmra.mxu0 %v664
    %v687 = vpop.f32.mrf.mxu0
    %v688 = vadd.f32 0.0, %v687
    %689 = vdwg.mxu0
    %690 = vmatpush.msra.mxu0 0.0
    %691 = vmatpush.msra.mxu0 0.0
    %692 = vmatpush.msra.mxu0 0.0
    %693 = vmatpush.msra.mxu0 0.0
    %694 = vmatpush.msra.mxu0 0.0
    %695 = vmatpush.msra.mxu0 0.0
    %696 = vmatpush.msra.mxu0 0.0
    %697 = vmatpush.msra.mxu0 0.0
    %698 = vmatpush.msra.mxu0 0.0
    %699 = vmatpush.msra.mxu0 0.0
    %700 = vmatpush.msra.mxu0 0.0
    %701 = vmatpush.msra.mxu0 0.0
    %702 = vmatpush.msra.mxu0 0.0
    %703 = vmatpush.msra.mxu0 0.0
    %704 = vmatpush.msra.mxu0 0.0
    %705 = vmatpush.msra.mxu0 %v668
    %706 = vmatmul.f32.gmra.mxu0 %v664
    %v707 = vpop.f32.mrf.mxu0
    %v708 = vadd.f32 0.0, %v707
    %709 = vdwg.mxu0
    %v710 = vadd.f32 %v633, %v688
    %v711 = vadd.f32 %v634, %v708
    %v712 = vld [vmem:[%s3] sm:$0xff]
    %714 = vset.pattern.permute.xlu0 0
    %715 = vperm.xlu0 %714, %v712
    %v716 = vpop.permute.xlu0 %715
    %v718 = vadd.f32 %v710, %v716
    %v719 = vadd.f32 %v711, %v716
    %v720 = vadd.f32 %v718, %v719
    %721 = vadd.xlane.f32.xlu0 %v720
    %v722 = vpop.xlane.xlu0 %721
    %v723 = vmul.f32 %v718, %v718
    %v724 = vmul.f32 %v719, %v719
    %v725 = vadd.f32 %v723, %v724
    %726 = vadd.xlane.f32.xlu0 %v725
    %v727 = vpop.xlane.xlu0 %726
    %v728 = vmul.f32 %v722, 0.00390625
    %v729 = vmul.f32 %v727, 0.00390625
    %v730 = vmul.f32 %v728, %v728
    %v731 = vsub.f32 %v729, %v730
    %v732 = vmax.f32 %v731, 0.0
    %v733 = vadd.f32 %v732, 1e-05
    %v734 = vrsqrt.pop %v733
    %v735 = vmul.f32 %v734, %v733
    %v736 = vmul.f32 %v735, %v734
    %v737 = vmul.f32 0.5, %v736
    %v738 = vsub.f32 1.5, %v737
    %v739 = vmul.f32 %v734, %v738
    %vm740 = vweird.f32 %v733
    %vm741 = vweird.f32 %v734
    %vm742 = vmor %vm740, %vm741
    %v743 = vsel %vm742, %v734, %v739
    %v744 = vlaneseq
    %v745 = vshrl.u32 %v744, 7
    %vm746 = vcmp.lt.s32.totalorder %v745, 4
    %v747 = vld [vmem:[%s4] sm:$0xff]
    %v748 = vmul.f32 %v747, %v743
    %v749 = vsel %vm746, %v748, 1.0
    %v750 = vld [vmem:[%s5] sm:$0xff]
    %v751 = vmul.f32 %v728, %v749
    %v752 = vsub.f32 %v750, %v751
    %v753 = vsel %vm746, %v752, 0.0
    %755 = vset.pattern.permute.xlu0 0
    %756 = vperm.xlu0 %755, %v749
    %v757 = vpop.permute.xlu0 %756
    %v759 = vmul.f32 %v718, %v757
    %v760 = vmul.f32 %v719, %v757
    %762 = vset.pattern.permute.xlu0 0
    %763 = vperm.xlu0 %762, %v753
    %v764 = vpop.permute.xlu0 %763
    %v766 = vadd.f32 %v759, %v764
    %v767 = vadd.f32 %v760, %v764
    %vm768 = vcmp.ge.f32.partialorder %v766, 0.0
    %vm769 = vcmp.ge.f32.partialorder %v767, 0.0
    %v770 = vmul.f32 %v766, 0.1
    %v771 = vmul.f32 %v767, 0.1
    %v772 = vsel %vm768, %v766, %v770
    %v773 = vsel %vm769, %v767, %v771
    %774 = vst [vmem:[#allocation3] sm:$0xff] 0.0
    %775 = vst [vmem:[#allocation3 + $0x18] sm:$0xff] 0.0
    %776 = vst [vmem:[#allocation3 + $0x8] sm:$0xff] %v772
    %777 = vst [vmem:[#allocation3 + $0x10] sm:$0xff] %v773
    %v778 = vld [vmem:[#allocation3] sm:$0xff]
    %v779 = vld [vmem:[#allocation3 + $0x8] sm:$0xff]
    %v780 = vld [vmem:[#allocation3 + $0x10] sm:$0xff]
    %781 = vrot.lane.b32.xlu0 %v46, 111
    %v782 = vpop.permute.xlu0 %781
    %783 = vrot.lane.b32.xlu0 %v47, 111
    %v784 = vpop.permute.xlu0 %783
    %v785 = vsel %vm54, %v782, %v784
    %v789 = vmul.f32 %v778, %v782
    %v790 = vmul.f32 %v779, %v785
    %v791 = vmul.f32 %v780, %v784
    %v792 = vld [vmem:[%s6] sm:$0xff]
    %s793 = scalar_lea.vmem %s6, 8
    %v794 = vld [vmem:[%s793] sm:$0xff]
    %798 = vrot.lane.b32.xlu0 %v778, 16
    %v799 = vpop.permute.xlu0 %798
    %800 = vrot.lane.b32.xlu0 %v779, 16
    %v801 = vpop.permute.xlu0 %800
    %802 = vrot.lane.b32.xlu0 %v780, 16
    %v803 = vpop.permute.xlu0 %802
    %v804 = vsel %vm77, %v799, %v801
    %v805 = vsel %vm77, %v801, %v803
    %vm808 = vcmask 64512
    %v810 = vsel %vm808, %v794, 0
    %812 = vmatpush.msra.mxu0 0.0
    %813 = vmatpush.msra.mxu0 0.0
    %814 = vmatpush.msra.mxu0 0.0
    %815 = vmatpush.msra.mxu0 0.0
    %816 = vmatpush.msra.mxu0 0.0
    %817 = vmatpush.msra.mxu0 0.0
    %818 = vmatpush.msra.mxu0 0.0
    %819 = vmatpush.msra.mxu0 0.0
    %820 = vmatpush.msra.mxu0 0.0
    %821 = vmatpush.msra.mxu0 0.0
    %822 = vmatpush.msra.mxu0 0.0
    %823 = vmatpush.msra.mxu0 0.0
    %824 = vmatpush.msra.mxu0 0.0
    %825 = vmatpush.msra.mxu0 0.0
    %826 = vmatpush.msra.mxu0 0.0
    %827 = vmatpush.msra.mxu0 %v804
    %828 = vmatmul.f32.gmra.mxu0 %v810
    %v829 = vpop.f32.mrf.mxu0
    %v830 = vadd.f32 0.0, %v829
    %831 = vdwg.mxu0
    %832 = vmatpush.msra.mxu0 0.0
    %833 = vmatpush.msra.mxu0 0.0
    %834 = vmatpush.msra.mxu0 0.0
    %835 = vmatpush.msra.mxu0 0.0
    %836 = vmatpush.msra.mxu0 0.0
    %837 = vmatpush.msra.mxu0 0.0
    %838 = vmatpush.msra.mxu0 0.0
    %839 = vmatpush.msra.mxu0 0.0
    %840 = vmatpush.msra.mxu0 0.0
    %841 = vmatpush.msra.mxu0 0.0
    %842 = vmatpush.msra.mxu0 0.0
    %843 = vmatpush.msra.mxu0 0.0
    %844 = vmatpush.msra.mxu0 0.0
    %845 = vmatpush.msra.mxu0 0.0
    %846 = vmatpush.msra.mxu0 0.0
    %847 = vmatpush.msra.mxu0 %v805
    %848 = vmatmul.f32.gmra.mxu0 %v810
    %v849 = vpop.f32.mrf.mxu0
    %v850 = vadd.f32 0.0, %v849
    %851 = vdwg.mxu0
    %855 = vrot.lane.b32.xlu0 %v789, 17
    %v856 = vpop.permute.xlu0 %855
    %857 = vrot.lane.b32.xlu0 %v790, 17
    %v858 = vpop.permute.xlu0 %857
    %859 = vrot.lane.b32.xlu0 %v791, 17
    %v860 = vpop.permute.xlu0 %859
    %v861 = vsel %vm142, %v856, %v858
    %v862 = vsel %vm142, %v858, %v860
    %v866 = vsel %vm808, %v792, 0
    %868 = vmatpush.msra.mxu0 0.0
    %869 = vmatpush.msra.mxu0 0.0
    %870 = vmatpush.msra.mxu0 0.0
    %871 = vmatpush.msra.mxu0 0.0
    %872 = vmatpush.msra.mxu0 0.0
    %873 = vmatpush.msra.mxu0 0.0
    %874 = vmatpush.msra.mxu0 0.0
    %875 = vmatpush.msra.mxu0 0.0
    %876 = vmatpush.msra.mxu0 0.0
    %877 = vmatpush.msra.mxu0 0.0
    %878 = vmatpush.msra.mxu0 0.0
    %879 = vmatpush.msra.mxu0 0.0
    %880 = vmatpush.msra.mxu0 0.0
    %881 = vmatpush.msra.mxu0 0.0
    %882 = vmatpush.msra.mxu0 0.0
    %883 = vmatpush.msra.mxu0 %v861
    %884 = vmatmul.f32.gmra.mxu0 %v866
    %v885 = vpop.f32.mrf.mxu0
    %v886 = vadd.f32 %v830, %v885
    %887 = vdwg.mxu0
    %888 = vmatpush.msra.mxu0 0.0
    %889 = vmatpush.msra.mxu0 0.0
    %890 = vmatpush.msra.mxu0 0.0
    %891 = vmatpush.msra.mxu0 0.0
    %892 = vmatpush.msra.mxu0 0.0
    %893 = vmatpush.msra.mxu0 0.0
    %894 = vmatpush.msra.mxu0 0.0
    %895 = vmatpush.msra.mxu0 0.0
    %896 = vmatpush.msra.mxu0 0.0
    %897 = vmatpush.msra.mxu0 0.0
    %898 = vmatpush.msra.mxu0 0.0
    %899 = vmatpush.msra.mxu0 0.0
    %900 = vmatpush.msra.mxu0 0.0
    %901 = vmatpush.msra.mxu0 0.0
    %902 = vmatpush.msra.mxu0 0.0
    %903 = vmatpush.msra.mxu0 %v862
    %904 = vmatmul.f32.gmra.mxu0 %v866
    %v905 = vpop.f32.mrf.mxu0
    %v906 = vadd.f32 %v850, %v905
    %907 = vdwg.mxu0
    %908 = vrot.lane.b32.xlu0 %v195, 113
    %v909 = vpop.permute.xlu0 %908
    %910 = vrot.lane.b32.xlu0 %v196, 113
    %v911 = vpop.permute.xlu0 %910
    %v912 = vsel %vm202, %v909, %v911
    %v916 = vmul.f32 %v778, %v909
    %v917 = vmul.f32 %v779, %v912
    %v918 = vmul.f32 %v780, %v911
    %s919 = scalar_lea.vmem %s6, 16
    %v920 = vld [vmem:[%s919] sm:$0xff]
    %924 = vrot.lane.b32.xlu0 %v916, 15
    %v925 = vpop.permute.xlu0 %924
    %926 = vrot.lane.b32.xlu0 %v917, 15
    %v927 = vpop.permute.xlu0 %926
    %928 = vrot.lane.b32.xlu0 %v918, 15
    %v929 = vpop.permute.xlu0 %928
    %v930 = vsel %vm224, %v925, %v927
    %v931 = vsel %vm224, %v927, %v929
    %v935 = vsel %vm808, %v920, 0
    %937 = vmatpush.msra.mxu0 0.0
    %938 = vmatpush.msra.mxu0 0.0
    %939 = vmatpush.msra.mxu0 0.0
    %940 = vmatpush.msra.mxu0 0.0
    %941 = vmatpush.msra.mxu0 0.0
    %942 = vmatpush.msra.mxu0 0.0
    %943 = vmatpush.msra.mxu0 0.0
    %944 = vmatpush.msra.mxu0 0.0
    %945 = vmatpush.msra.mxu0 0.0
    %946 = vmatpush.msra.mxu0 0.0
    %947 = vmatpush.msra.mxu0 0.0
    %948 = vmatpush.msra.mxu0 0.0
    %949 = vmatpush.msra.mxu0 0.0
    %950 = vmatpush.msra.mxu0 0.0
    %951 = vmatpush.msra.mxu0 0.0
    %952 = vmatpush.msra.mxu0 %v930
    %953 = vmatmul.f32.gmra.mxu0 %v935
    %v954 = vpop.f32.mrf.mxu0
    %v955 = vadd.f32 0.0, %v954
    %956 = vdwg.mxu0
    %957 = vmatpush.msra.mxu0 0.0
    %958 = vmatpush.msra.mxu0 0.0
    %959 = vmatpush.msra.mxu0 0.0
    %960 = vmatpush.msra.mxu0 0.0
    %961 = vmatpush.msra.mxu0 0.0
    %962 = vmatpush.msra.mxu0 0.0
    %963 = vmatpush.msra.mxu0 0.0
    %964 = vmatpush.msra.mxu0 0.0
    %965 = vmatpush.msra.mxu0 0.0
    %966 = vmatpush.msra.mxu0 0.0
    %967 = vmatpush.msra.mxu0 0.0
    %968 = vmatpush.msra.mxu0 0.0
    %969 = vmatpush.msra.mxu0 0.0
    %970 = vmatpush.msra.mxu0 0.0
    %971 = vmatpush.msra.mxu0 0.0
    %972 = vmatpush.msra.mxu0 %v931
    %973 = vmatmul.f32.gmra.mxu0 %v935
    %v974 = vpop.f32.mrf.mxu0
    %v975 = vadd.f32 0.0, %v974
    %976 = vdwg.mxu0
    %v977 = vadd.f32 %v886, %v955
    %v978 = vadd.f32 %v906, %v975
    %979 = vrot.lane.b32.xlu0 %v46, 127
    %v980 = vpop.permute.xlu0 %979
    %981 = vrot.lane.b32.xlu0 %v47, 127
    %v982 = vpop.permute.xlu0 %981
    %v983 = vsel %vm281, %v980, %v982
    %v987 = vmul.f32 %v778, %v980
    %v988 = vmul.f32 %v779, %v983
    %v989 = vmul.f32 %v780, %v982
    %s990 = scalar_lea.vmem %s6, 24
    %v991 = vld [vmem:[%s990] sm:$0xff]
    %995 = vrot.lane.b32.xlu0 %v987, 1
    %v996 = vpop.permute.xlu0 %995
    %997 = vrot.lane.b32.xlu0 %v988, 1
    %v998 = vpop.permute.xlu0 %997
    %999 = vrot.lane.b32.xlu0 %v989, 1
    %v1000 = vpop.permute.xlu0 %999
    %v1001 = vsel %vm303, %v996, %v998
    %v1002 = vsel %vm303, %v998, %v1000
    %v1006 = vsel %vm808, %v991, 0
    %1008 = vmatpush.msra.mxu0 0.0
    %1009 = vmatpush.msra.mxu0 0.0
    %1010 = vmatpush.msra.mxu0 0.0
    %1011 = vmatpush.msra.mxu0 0.0
    %1012 = vmatpush.msra.mxu0 0.0
    %1013 = vmatpush.msra.mxu0 0.0
    %1014 = vmatpush.msra.mxu0 0.0
    %1015 = vmatpush.msra.mxu0 0.0
    %1016 = vmatpush.msra.mxu0 0.0
    %1017 = vmatpush.msra.mxu0 0.0
    %1018 = vmatpush.msra.mxu0 0.0
    %1019 = vmatpush.msra.mxu0 0.0
    %1020 = vmatpush.msra.mxu0 0.0
    %1021 = vmatpush.msra.mxu0 0.0
    %1022 = vmatpush.msra.mxu0 0.0
    %1023 = vmatpush.msra.mxu0 %v1001
    %1024 = vmatmul.f32.gmra.mxu0 %v1006
    %v1025 = vpop.f32.mrf.mxu0
    %v1026 = vadd.f32 0.0, %v1025
    %1027 = vdwg.mxu0
    %1028 = vmatpush.msra.mxu0 0.0
    %1029 = vmatpush.msra.mxu0 0.0
    %1030 = vmatpush.msra.mxu0 0.0
    %1031 = vmatpush.msra.mxu0 0.0
    %1032 = vmatpush.msra.mxu0 0.0
    %1033 = vmatpush.msra.mxu0 0.0
    %1034 = vmatpush.msra.mxu0 0.0
    %1035 = vmatpush.msra.mxu0 0.0
    %1036 = vmatpush.msra.mxu0 0.0
    %1037 = vmatpush.msra.mxu0 0.0
    %1038 = vmatpush.msra.mxu0 0.0
    %1039 = vmatpush.msra.mxu0 0.0
    %1040 = vmatpush.msra.mxu0 0.0
    %1041 = vmatpush.msra.mxu0 0.0
    %1042 = vmatpush.msra.mxu0 0.0
    %1043 = vmatpush.msra.mxu0 %v1002
    %1044 = vmatmul.f32.gmra.mxu0 %v1006
    %v1045 = vpop.f32.mrf.mxu0
    %v1046 = vadd.f32 0.0, %v1045
    %1047 = vdwg.mxu0
    %v1048 = vadd.f32 %v977, %v1026
    %v1049 = vadd.f32 %v978, %v1046
    %s1050 = scalar_lea.vmem %s6, 32
    %v1051 = vld [vmem:[%s1050] sm:$0xff]
    %v1053 = vsel %vm808, %v1051, 0
    %1055 = vmatpush.msra.mxu0 0.0
    %1056 = vmatpush.msra.mxu0 0.0
    %1057 = vmatpush.msra.mxu0 0.0
    %1058 = vmatpush.msra.mxu0 0.0
    %1059 = vmatpush.msra.mxu0 0.0
    %1060 = vmatpush.msra.mxu0 0.0
    %1061 = vmatpush.msra.mxu0 0.0
    %1062 = vmatpush.msra.mxu0 0.0
    %1063 = vmatpush.msra.mxu0 0.0
    %1064 = vmatpush.msra.mxu0 0.0
    %1065 = vmatpush.msra.mxu0 0.0
    %1066 = vmatpush.msra.mxu0 0.0
    %1067 = vmatpush.msra.mxu0 0.0
    %1068 = vmatpush.msra.mxu0 0.0
    %1069 = vmatpush.msra.mxu0 0.0
    %1070 = vmatpush.msra.mxu0 %v779
    %1071 = vmatmul.f32.gmra.mxu0 %v1053
    %v1072 = vpop.f32.mrf.mxu0
    %v1073 = vadd.f32 0.0, %v1072
    %1074 = vdwg.mxu0
    %1075 = vmatpush.msra.mxu0 0.0
    %1076 = vmatpush.msra.mxu0 0.0
    %1077 = vmatpush.msra.mxu0 0.0
    %1078 = vmatpush.msra.mxu0 0.0
    %1079 = vmatpush.msra.mxu0 0.0
    %1080 = vmatpush.msra.mxu0 0.0
    %1081 = vmatpush.msra.mxu0 0.0
    %1082 = vmatpush.msra.mxu0 0.0
    %1083 = vmatpush.msra.mxu0 0.0
    %1084 = vmatpush.msra.mxu0 0.0
    %1085 = vmatpush.msra.mxu0 0.0
    %1086 = vmatpush.msra.mxu0 0.0
    %1087 = vmatpush.msra.mxu0 0.0
    %1088 = vmatpush.msra.mxu0 0.0
    %1089 = vmatpush.msra.mxu0 0.0
    %1090 = vmatpush.msra.mxu0 %v780
    %1091 = vmatmul.f32.gmra.mxu0 %v1053
    %v1092 = vpop.f32.mrf.mxu0
    %v1093 = vadd.f32 0.0, %v1092
    %1094 = vdwg.mxu0
    %v1095 = vadd.f32 %v1048, %v1073
    %v1096 = vadd.f32 %v1049, %v1093
    %v1097 = vld [vmem:[#allocation3 + $0x8] sm:$0xff]
    %v1098 = vld [vmem:[#allocation3 + $0x10] sm:$0xff]
    %v1099 = vld [vmem:[#allocation3 + $0x18] sm:$0xff]
    %1100 = vrot.lane.b32.xlu0 %v195, 1
    %v1101 = vpop.permute.xlu0 %1100
    %1102 = vrot.lane.b32.xlu0 %v196, 1
    %v1103 = vpop.permute.xlu0 %1102
    %v1104 = vsel %vm303, %v1101, %v1103
    %v1108 = vmul.f32 %v1097, %v1101
    %v1109 = vmul.f32 %v1098, %v1104
    %v1110 = vmul.f32 %v1099, %v1103
    %s1111 = scalar_lea.vmem %s6, 40
    %v1112 = vld [vmem:[%s1111] sm:$0xff]
    %1116 = vrot.lane.b32.xlu0 %v1108, 127
    %v1117 = vpop.permute.xlu0 %1116
    %1118 = vrot.lane.b32.xlu0 %v1109, 127
    %v1119 = vpop.permute.xlu0 %1118
    %1120 = vrot.lane.b32.xlu0 %v1110, 127
    %v1121 = vpop.permute.xlu0 %1120
    %v1122 = vsel %vm281, %v1117, %v1119
    %v1123 = vsel %vm281, %v1119, %v1121
    %v1127 = vsel %vm808, %v1112, 0
    %1129 = vmatpush.msra.mxu0 0.0
    %1130 = vmatpush.msra.mxu0 0.0
    %1131 = vmatpush.msra.mxu0 0.0
    %1132 = vmatpush.msra.mxu0 0.0
    %1133 = vmatpush.msra.mxu0 0.0
    %1134 = vmatpush.msra.mxu0 0.0
    %1135 = vmatpush.msra.mxu0 0.0
    %1136 = vmatpush.msra.mxu0 0.0
    %1137 = vmatpush.msra.mxu0 0.0
    %1138 = vmatpush.msra.mxu0 0.0
    %1139 = vmatpush.msra.mxu0 0.0
    %1140 = vmatpush.msra.mxu0 0.0
    %1141 = vmatpush.msra.mxu0 0.0
    %1142 = vmatpush.msra.mxu0 0.0
    %1143 = vmatpush.msra.mxu0 0.0
    %1144 = vmatpush.msra.mxu0 %v1122
    %1145 = vmatmul.f32.gmra.mxu0 %v1127
    %v1146 = vpop.f32.mrf.mxu0
    %v1147 = vadd.f32 0.0, %v1146
    %1148 = vdwg.mxu0
    %1149 = vmatpush.msra.mxu0 0.0
    %1150 = vmatpush.msra.mxu0 0.0
    %1151 = vmatpush.msra.mxu0 0.0
    %1152 = vmatpush.msra.mxu0 0.0
    %1153 = vmatpush.msra.mxu0 0.0
    %1154 = vmatpush.msra.mxu0 0.0
    %1155 = vmatpush.msra.mxu0 0.0
    %1156 = vmatpush.msra.mxu0 0.0
    %1157 = vmatpush.msra.mxu0 0.0
    %1158 = vmatpush.msra.mxu0 0.0
    %1159 = vmatpush.msra.mxu0 0.0
    %1160 = vmatpush.msra.mxu0 0.0
    %1161 = vmatpush.msra.mxu0 0.0
    %1162 = vmatpush.msra.mxu0 0.0
    %1163 = vmatpush.msra.mxu0 0.0
    %1164 = vmatpush.msra.mxu0 %v1123
    %1165 = vmatmul.f32.gmra.mxu0 %v1127
    %v1166 = vpop.f32.mrf.mxu0
    %v1167 = vadd.f32 0.0, %v1166
    %1168 = vdwg.mxu0
    %v1169 = vadd.f32 %v1095, %v1147
    %v1170 = vadd.f32 %v1096, %v1167
    %1171 = vrot.lane.b32.xlu0 %v46, 15
    %v1172 = vpop.permute.xlu0 %1171
    %1173 = vrot.lane.b32.xlu0 %v47, 15
    %v1174 = vpop.permute.xlu0 %1173
    %v1175 = vsel %vm224, %v1172, %v1174
    %v1179 = vmul.f32 %v1097, %v1172
    %v1180 = vmul.f32 %v1098, %v1175
    %v1181 = vmul.f32 %v1099, %v1174
    %s1182 = scalar_lea.vmem %s6, 48
    %v1183 = vld [vmem:[%s1182] sm:$0xff]
    %1187 = vrot.lane.b32.xlu0 %v1179, 113
    %v1188 = vpop.permute.xlu0 %1187
    %1189 = vrot.lane.b32.xlu0 %v1180, 113
    %v1190 = vpop.permute.xlu0 %1189
    %1191 = vrot.lane.b32.xlu0 %v1181, 113
    %v1192 = vpop.permute.xlu0 %1191
    %v1193 = vsel %vm202, %v1188, %v1190
    %v1194 = vsel %vm202, %v1190, %v1192
    %v1198 = vsel %vm808, %v1183, 0
    %1200 = vmatpush.msra.mxu0 0.0
    %1201 = vmatpush.msra.mxu0 0.0
    %1202 = vmatpush.msra.mxu0 0.0
    %1203 = vmatpush.msra.mxu0 0.0
    %1204 = vmatpush.msra.mxu0 0.0
    %1205 = vmatpush.msra.mxu0 0.0
    %1206 = vmatpush.msra.mxu0 0.0
    %1207 = vmatpush.msra.mxu0 0.0
    %1208 = vmatpush.msra.mxu0 0.0
    %1209 = vmatpush.msra.mxu0 0.0
    %1210 = vmatpush.msra.mxu0 0.0
    %1211 = vmatpush.msra.mxu0 0.0
    %1212 = vmatpush.msra.mxu0 0.0
    %1213 = vmatpush.msra.mxu0 0.0
    %1214 = vmatpush.msra.mxu0 0.0
    %1215 = vmatpush.msra.mxu0 %v1193
    %1216 = vmatmul.f32.gmra.mxu0 %v1198
    %v1217 = vpop.f32.mrf.mxu0
    %v1218 = vadd.f32 0.0, %v1217
    %1219 = vdwg.mxu0
    %1220 = vmatpush.msra.mxu0 0.0
    %1221 = vmatpush.msra.mxu0 0.0
    %1222 = vmatpush.msra.mxu0 0.0
    %1223 = vmatpush.msra.mxu0 0.0
    %1224 = vmatpush.msra.mxu0 0.0
    %1225 = vmatpush.msra.mxu0 0.0
    %1226 = vmatpush.msra.mxu0 0.0
    %1227 = vmatpush.msra.mxu0 0.0
    %1228 = vmatpush.msra.mxu0 0.0
    %1229 = vmatpush.msra.mxu0 0.0
    %1230 = vmatpush.msra.mxu0 0.0
    %1231 = vmatpush.msra.mxu0 0.0
    %1232 = vmatpush.msra.mxu0 0.0
    %1233 = vmatpush.msra.mxu0 0.0
    %1234 = vmatpush.msra.mxu0 0.0
    %1235 = vmatpush.msra.mxu0 %v1194
    %1236 = vmatmul.f32.gmra.mxu0 %v1198
    %v1237 = vpop.f32.mrf.mxu0
    %v1238 = vadd.f32 0.0, %v1237
    %1239 = vdwg.mxu0
    %v1240 = vadd.f32 %v1169, %v1218
    %v1241 = vadd.f32 %v1170, %v1238
    %s1242 = scalar_lea.vmem %s6, 56
    %v1243 = vld [vmem:[%s1242] sm:$0xff]
    %1247 = vrot.lane.b32.xlu0 %v1097, 112
    %v1248 = vpop.permute.xlu0 %1247
    %1249 = vrot.lane.b32.xlu0 %v1098, 112
    %v1250 = vpop.permute.xlu0 %1249
    %1251 = vrot.lane.b32.xlu0 %v1099, 112
    %v1252 = vpop.permute.xlu0 %1251
    %v1253 = vsel %vm583, %v1248, %v1250
    %v1254 = vsel %vm583, %v1250, %v1252
    %v1258 = vsel %vm808, %v1243, 0
    %1260 = vmatpush.msra.mxu0 0.0
    %1261 = vmatpush.msra.mxu0 0.0
    %1262 = vmatpush.msra.mxu0 0.0
    %1263 = vmatpush.msra.mxu0 0.0
    %1264 = vmatpush.msra.mxu0 0.0
    %1265 = vmatpush.msra.mxu0 0.0
    %1266 = vmatpush.msra.mxu0 0.0
    %1267 = vmatpush.msra.mxu0 0.0
    %1268 = vmatpush.msra.mxu0 0.0
    %1269 = vmatpush.msra.mxu0 0.0
    %1270 = vmatpush.msra.mxu0 0.0
    %1271 = vmatpush.msra.mxu0 0.0
    %1272 = vmatpush.msra.mxu0 0.0
    %1273 = vmatpush.msra.mxu0 0.0
    %1274 = vmatpush.msra.mxu0 0.0
    %1275 = vmatpush.msra.mxu0 %v1253
    %1276 = vmatmul.f32.gmra.mxu0 %v1258
    %v1277 = vpop.f32.mrf.mxu0
    %v1278 = vadd.f32 0.0, %v1277
    %1279 = vdwg.mxu0
    %1280 = vmatpush.msra.mxu0 0.0
    %1281 = vmatpush.msra.mxu0 0.0
    %1282 = vmatpush.msra.mxu0 0.0
    %1283 = vmatpush.msra.mxu0 0.0
    %1284 = vmatpush.msra.mxu0 0.0
    %1285 = vmatpush.msra.mxu0 0.0
    %1286 = vmatpush.msra.mxu0 0.0
    %1287 = vmatpush.msra.mxu0 0.0
    %1288 = vmatpush.msra.mxu0 0.0
    %1289 = vmatpush.msra.mxu0 0.0
    %1290 = vmatpush.msra.mxu0 0.0
    %1291 = vmatpush.msra.mxu0 0.0
    %1292 = vmatpush.msra.mxu0 0.0
    %1293 = vmatpush.msra.mxu0 0.0
    %1294 = vmatpush.msra.mxu0 0.0
    %1295 = vmatpush.msra.mxu0 %v1254
    %1296 = vmatmul.f32.gmra.mxu0 %v1258
    %v1297 = vpop.f32.mrf.mxu0
    %v1298 = vadd.f32 0.0, %v1297
    %1299 = vdwg.mxu0
    %v1300 = vadd.f32 %v1240, %v1278
    %v1301 = vadd.f32 %v1241, %v1298
    %1302 = vrot.lane.b32.xlu0 %v195, 17
    %v1303 = vpop.permute.xlu0 %1302
    %1304 = vrot.lane.b32.xlu0 %v196, 17
    %v1305 = vpop.permute.xlu0 %1304
    %v1306 = vsel %vm142, %v1303, %v1305
    %v1310 = vmul.f32 %v1097, %v1303
    %v1311 = vmul.f32 %v1098, %v1306
    %v1312 = vmul.f32 %v1099, %v1305
    %s1313 = scalar_lea.vmem %s6, 64
    %v1314 = vld [vmem:[%s1313] sm:$0xff]
    %1318 = vrot.lane.b32.xlu0 %v1310, 111
    %v1319 = vpop.permute.xlu0 %1318
    %1320 = vrot.lane.b32.xlu0 %v1311, 111
    %v1321 = vpop.permute.xlu0 %1320
    %1322 = vrot.lane.b32.xlu0 %v1312, 111
    %v1323 = vpop.permute.xlu0 %1322
    %v1324 = vsel %vm54, %v1319, %v1321
    %v1325 = vsel %vm54, %v1321, %v1323
    %v1329 = vsel %vm808, %v1314, 0
    %1331 = vmatpush.msra.mxu0 0.0
    %1332 = vmatpush.msra.mxu0 0.0
    %1333 = vmatpush.msra.mxu0 0.0
    %1334 = vmatpush.msra.mxu0 0.0
    %1335 = vmatpush.msra.mxu0 0.0
    %1336 = vmatpush.msra.mxu0 0.0
    %1337 = vmatpush.msra.mxu0 0.0
    %1338 = vmatpush.msra.mxu0 0.0
    %1339 = vmatpush.msra.mxu0 0.0
    %1340 = vmatpush.msra.mxu0 0.0
    %1341 = vmatpush.msra.mxu0 0.0
    %1342 = vmatpush.msra.mxu0 0.0
    %1343 = vmatpush.msra.mxu0 0.0
    %1344 = vmatpush.msra.mxu0 0.0
    %1345 = vmatpush.msra.mxu0 0.0
    %1346 = vmatpush.msra.mxu0 %v1324
    %1347 = vmatmul.f32.gmra.mxu0 %v1329
    %v1348 = vpop.f32.mrf.mxu0
    %v1349 = vadd.f32 0.0, %v1348
    %1350 = vdwg.mxu0
    %1351 = vmatpush.msra.mxu0 0.0
    %1352 = vmatpush.msra.mxu0 0.0
    %1353 = vmatpush.msra.mxu0 0.0
    %1354 = vmatpush.msra.mxu0 0.0
    %1355 = vmatpush.msra.mxu0 0.0
    %1356 = vmatpush.msra.mxu0 0.0
    %1357 = vmatpush.msra.mxu0 0.0
    %1358 = vmatpush.msra.mxu0 0.0
    %1359 = vmatpush.msra.mxu0 0.0
    %1360 = vmatpush.msra.mxu0 0.0
    %1361 = vmatpush.msra.mxu0 0.0
    %1362 = vmatpush.msra.mxu0 0.0
    %1363 = vmatpush.msra.mxu0 0.0
    %1364 = vmatpush.msra.mxu0 0.0
    %1365 = vmatpush.msra.mxu0 0.0
    %1366 = vmatpush.msra.mxu0 %v1325
    %1367 = vmatmul.f32.gmra.mxu0 %v1329
    %v1368 = vpop.f32.mrf.mxu0
    %v1369 = vadd.f32 0.0, %v1368
    %1370 = vdwg.mxu0
    %v1371 = vadd.f32 %v1300, %v1349
    %v1372 = vadd.f32 %v1301, %v1369
    %v1373 = vld [vmem:[%s7] sm:$0xff]
    %1375 = vset.pattern.permute.xlu0 0
    %1376 = vperm.xlu0 %1375, %v1373
    %v1377 = vpop.permute.xlu0 %1376
    %v1379 = vadd.f32 %v1371, %v1377
    %v1380 = vadd.f32 %v1372, %v1377
    %vm1381 = vcmp.ge.f32.partialorder %v1379, 0.0
    %vm1382 = vcmp.ge.f32.partialorder %v1380, 0.0
    %v1383 = vmul.f32 %v1379, 0.1
    %v1384 = vmul.f32 %v1380, 0.1
    %v1385 = vsel %vm1381, %v1379, %v1383
    %v1386 = vsel %vm1382, %v1380, %v1384
    %v1387 = vld [vmem:[%s8] sm:$0xff]
    %v1388 = vld [vmem:[#allocation2 + $0x4] sm:$0xff]
    %v1389 = vld [vmem:[%s9] sm:$0xff]
    %1391 = vset.pattern.permute.xlu0 0
    %1392 = vperm.xlu0 %1391, %v1389
    %v1393 = vpop.permute.xlu0 %1392
    %1396 = vst [vmem:[#allocation1] ss:$2 sm:$0xff] %v1388
    %v1397 = vld.sshfl [vmem:[#allocation1] sm:$0xff pattern:$0x75316420]
    %v1398 = vld.sshfl [vmem:[#allocation1 + $0x8] sm:$0xff pattern:$0x75316420]
    %v1400 = vsel %vm80, %v1387, 0
    %v1402 = vsel %vm49, %v1397, 0
    %v1404 = vsel %vm49, %v1398, 0
    %1406 = vmatpush.msra.mxu0 0.0
    %1407 = vmatpush.msra.mxu0 0.0
    %1408 = vmatpush.msra.mxu0 0.0
    %1409 = vmatpush.msra.mxu0 0.0
    %1410 = vmatpush.msra.mxu0 0.0
    %1411 = vmatpush.msra.mxu0 0.0
    %1412 = vmatpush.msra.mxu0 0.0
    %1413 = vmatpush.msra.mxu0 0.0
    %1414 = vmatpush.msra.mxu0 0.0
    %1415 = vmatpush.msra.mxu0 0.0
    %1416 = vmatpush.msra.mxu0 0.0
    %1417 = vmatpush.msra.mxu0 0.0
    %1418 = vmatpush.msra.mxu0 0.0
    %1419 = vmatpush.msra.mxu0 0.0
    %1420 = vmatpush.msra.mxu0 0.0
    %1421 = vmatpush.msra.mxu0 %v1402
    %1422 = vmatmul.f32.gmra.mxu0 %v1400
    %v1423 = vpop.f32.mrf.mxu0
    %v1424 = vadd.f32 %v1393, %v1423
    %1425 = vdwg.mxu0
    %1426 = vmatpush.msra.mxu0 0.0
    %1427 = vmatpush.msra.mxu0 0.0
    %1428 = vmatpush.msra.mxu0 0.0
    %1429 = vmatpush.msra.mxu0 0.0
    %1430 = vmatpush.msra.mxu0 0.0
    %1431 = vmatpush.msra.mxu0 0.0
    %1432 = vmatpush.msra.mxu0 0.0
    %1433 = vmatpush.msra.mxu0 0.0
    %1434 = vmatpush.msra.mxu0 0.0
    %1435 = vmatpush.msra.mxu0 0.0
    %1436 = vmatpush.msra.mxu0 0.0
    %1437 = vmatpush.msra.mxu0 0.0
    %1438 = vmatpush.msra.mxu0 0.0
    %1439 = vmatpush.msra.mxu0 0.0
    %1440 = vmatpush.msra.mxu0 0.0
    %1441 = vmatpush.msra.mxu0 %v1404
    %1442 = vmatmul.f32.gmra.mxu0 %v1400
    %v1443 = vpop.f32.mrf.mxu0
    %v1444 = vadd.f32 %v1393, %v1443
    %1445 = vdwg.mxu0
    %v1446 = vadd.f32 %v1385, %v1424
    %v1447 = vadd.f32 %v1386, %v1444
    %1448 = vst [vmem:[#allocation4] sm:$0xff] %v1446
    %1449 = vst [vmem:[#allocation4 + $0x8] sm:$0xff] %v1447
    %s1450 = scalar_lea.vmem [#allocation2], 16
    %1451 = vst [vmem:[%s1450] sm:$0xf] 0.0
    %1452 = vst [vmem:[%s1450 + $0xc] sm:$0xf] 0.0
    %s1453 = scalar_lea.vmem %s1, 8
    %v1454 = vld [vmem:[%s1453] sm:$0xff]
    %1455 = vst [vmem:[%s1450 + $0x4] sm:$0xff] %v1454
    %v1456 = vld [vmem:[%s1450] sm:$0xff]
    %v1457 = vld [vmem:[%s1450 + $0x8] sm:$0xf]
    %v1458 = vmul.f32 %v1456, %v55
    %v1459 = vmul.f32 %v1457, %v53
    %v1460 = vld [vmem:[%s2] sm:$0xff]
    %v1461 = vld [vmem:[%s61] sm:$0xff]
    %1464 = vst [vmem:[#allocation1] ss:$2 sm:$0xff] %v1456
    %s1465 = scalar_lea.vmem [#allocation1], 16
    %1466 = vst [vmem:[%s1465] ss:$2 sm:$0xff] %v1457
    %v1467 = vld.sshfl [vmem:[#allocation1] sm:$0xff pattern:$0x75316420]
    %v1468 = vld.sshfl [vmem:[#allocation1 + $0x8] sm:$0xff pattern:$0x75316420]
    %v1469 = vld.sshfl [vmem:[#allocation1 + $0x10] sm:$0xff pattern:$0x75316420]
    %1470 = vrot.lane.b32.xlu0 %v1467, 16
    %v1471 = vpop.permute.xlu0 %1470
    %1472 = vrot.lane.b32.xlu0 %v1468, 16
    %v1473 = vpop.permute.xlu0 %1472
    %1474 = vrot.lane.b32.xlu0 %v1469, 16
    %v1475 = vpop.permute.xlu0 %1474
    %v1476 = vsel %vm77, %v1471, %v1473
    %v1477 = vsel %vm77, %v1473, %v1475
    %v1479 = vsel %vm80, %v1461, 0
    %v1481 = vsel %vm49, %v1476, 0
    %v1483 = vsel %vm49, %v1477, 0
    %1485 = vmatpush.msra.mxu0 0.0
    %1486 = vmatpush.msra.mxu0 0.0
    %1487 = vmatpush.msra.mxu0 0.0
    %1488 = vmatpush.msra.mxu0 0.0
    %1489 = vmatpush.msra.mxu0 0.0
    %1490 = vmatpush.msra.mxu0 0.0
    %1491 = vmatpush.msra.mxu0 0.0
    %1492 = vmatpush.msra.mxu0 0.0
    %1493 = vmatpush.msra.mxu0 0.0
    %1494 = vmatpush.msra.mxu0 0.0
    %1495 = vmatpush.msra.mxu0 0.0
    %1496 = vmatpush.msra.mxu0 0.0
    %1497 = vmatpush.msra.mxu0 0.0
    %1498 = vmatpush.msra.mxu0 0.0
    %1499 = vmatpush.msra.mxu0 0.0
    %1500 = vmatpush.msra.mxu0 %v1481
    %1501 = vmatmul.f32.gmra.mxu0 %v1479
    %v1502 = vpop.f32.mrf.mxu0
    %v1503 = vadd.f32 0.0, %v1502
    %1504 = vdwg.mxu0
    %1505 = vmatpush.msra.mxu0 0.0
    %1506 = vmatpush.msra.mxu0 0.0
    %1507 = vmatpush.msra.mxu0 0.0
    %1508 = vmatpush.msra.mxu0 0.0
    %1509 = vmatpush.msra.mxu0 0.0
    %1510 = vmatpush.msra.mxu0 0.0
    %1511 = vmatpush.msra.mxu0 0.0
    %1512 = vmatpush.msra.mxu0 0.0
    %1513 = vmatpush.msra.mxu0 0.0
    %1514 = vmatpush.msra.mxu0 0.0
    %1515 = vmatpush.msra.mxu0 0.0
    %1516 = vmatpush.msra.mxu0 0.0
    %1517 = vmatpush.msra.mxu0 0.0
    %1518 = vmatpush.msra.mxu0 0.0
    %1519 = vmatpush.msra.mxu0 0.0
    %1520 = vmatpush.msra.mxu0 %v1483
    %1521 = vmatmul.f32.gmra.mxu0 %v1479
    %v1522 = vpop.f32.mrf.mxu0
    %v1523 = vadd.f32 0.0, %v1522
    %1524 = vdwg.mxu0
    %1527 = vst [vmem:[#allocation1] ss:$2 sm:$0xff] %v1458
    %s1528 = scalar_lea.vmem [#allocation1], 16
    %1529 = vst [vmem:[%s1528] ss:$2 sm:$0xff] %v1459
    %v1530 = vld.sshfl [vmem:[#allocation1] sm:$0xff pattern:$0x75316420]
    %v1531 = vld.sshfl [vmem:[#allocation1 + $0x8] sm:$0xff pattern:$0x75316420]
    %v1532 = vld.sshfl [vmem:[#allocation1 + $0x10] sm:$0xff pattern:$0x75316420]
    %1533 = vrot.lane.b32.xlu0 %v1530, 17
    %v1534 = vpop.permute.xlu0 %1533
    %1535 = vrot.lane.b32.xlu0 %v1531, 17
    %v1536 = vpop.permute.xlu0 %1535
    %1537 = vrot.lane.b32.xlu0 %v1532, 17
    %v1538 = vpop.permute.xlu0 %1537
    %v1539 = vsel %vm142, %v1534, %v1536
    %v1540 = vsel %vm142, %v1536, %v1538
    %v1542 = vsel %vm80, %v1460, 0
    %v1544 = vsel %vm49, %v1539, 0
    %v1546 = vsel %vm49, %v1540, 0
    %1548 = vmatpush.msra.mxu0 0.0
    %1549 = vmatpush.msra.mxu0 0.0
    %1550 = vmatpush.msra.mxu0 0.0
    %1551 = vmatpush.msra.mxu0 0.0
    %1552 = vmatpush.msra.mxu0 0.0
    %1553 = vmatpush.msra.mxu0 0.0
    %1554 = vmatpush.msra.mxu0 0.0
    %1555 = vmatpush.msra.mxu0 0.0
    %1556 = vmatpush.msra.mxu0 0.0
    %1557 = vmatpush.msra.mxu0 0.0
    %1558 = vmatpush.msra.mxu0 0.0
    %1559 = vmatpush.msra.mxu0 0.0
    %1560 = vmatpush.msra.mxu0 0.0
    %1561 = vmatpush.msra.mxu0 0.0
    %1562 = vmatpush.msra.mxu0 0.0
    %1563 = vmatpush.msra.mxu0 %v1544
    %1564 = vmatmul.f32.gmra.mxu0 %v1542
    %v1565 = vpop.f32.mrf.mxu0
    %v1566 = vadd.f32 %v1503, %v1565
    %1567 = vdwg.mxu0
    %1568 = vmatpush.msra.mxu0 0.0
    %1569 = vmatpush.msra.mxu0 0.0
    %1570 = vmatpush.msra.mxu0 0.0
    %1571 = vmatpush.msra.mxu0 0.0
    %1572 = vmatpush.msra.mxu0 0.0
    %1573 = vmatpush.msra.mxu0 0.0
    %1574 = vmatpush.msra.mxu0 0.0
    %1575 = vmatpush.msra.mxu0 0.0
    %1576 = vmatpush.msra.mxu0 0.0
    %1577 = vmatpush.msra.mxu0 0.0
    %1578 = vmatpush.msra.mxu0 0.0
    %1579 = vmatpush.msra.mxu0 0.0
    %1580 = vmatpush.msra.mxu0 0.0
    %1581 = vmatpush.msra.mxu0 0.0
    %1582 = vmatpush.msra.mxu0 0.0
    %1583 = vmatpush.msra.mxu0 %v1546
    %1584 = vmatmul.f32.gmra.mxu0 %v1542
    %v1585 = vpop.f32.mrf.mxu0
    %v1586 = vadd.f32 %v1523, %v1585
    %1587 = vdwg.mxu0
    %v1588 = vld [vmem:[%s1450] sm:$0xff]
    %v1589 = vld [vmem:[%s1450 + $0x8] sm:$0xf]
    %v1590 = vmul.f32 %v1588, %v203
    %v1591 = vmul.f32 %v1589, %v201
    %v1592 = vld [vmem:[%s208] sm:$0xff]
    %1595 = vst [vmem:[#allocation1] ss:$2 sm:$0xff] %v1590
    %s1596 = scalar_lea.vmem [#allocation1], 16
    %1597 = vst [vmem:[%s1596] ss:$2 sm:$0xff] %v1591
    %v1598 = vld.sshfl [vmem:[#allocation1] sm:$0xff pattern:$0x75316420]
    %v1599 = vld.sshfl [vmem:[#allocation1 + $0x8] sm:$0xff pattern:$0x75316420]
    %v1600 = vld.sshfl [vmem:[#allocation1 + $0x10] sm:$0xff pattern:$0x75316420]
    %1601 = vrot.lane.b32.xlu0 %v1598, 15
    %v1602 = vpop.permute.xlu0 %1601
    %1603 = vrot.lane.b32.xlu0 %v1599, 15
    %v1604 = vpop.permute.xlu0 %1603
    %1605 = vrot.lane.b32.xlu0 %v1600, 15
    %v1606 = vpop.permute.xlu0 %1605
    %v1607 = vsel %vm224, %v1602, %v1604
    %v1608 = vsel %vm224, %v1604, %v1606
    %v1610 = vsel %vm80, %v1592, 0
    %v1612 = vsel %vm49, %v1607, 0
    %v1614 = vsel %vm49, %v1608, 0
    %1616 = vmatpush.msra.mxu0 0.0
    %1617 = vmatpush.msra.mxu0 0.0
    %1618 = vmatpush.msra.mxu0 0.0
    %1619 = vmatpush.msra.mxu0 0.0
    %1620 = vmatpush.msra.mxu0 0.0
    %1621 = vmatpush.msra.mxu0 0.0
    %1622 = vmatpush.msra.mxu0 0.0
    %1623 = vmatpush.msra.mxu0 0.0
    %1624 = vmatpush.msra.mxu0 0.0
    %1625 = vmatpush.msra.mxu0 0.0
    %1626 = vmatpush.msra.mxu0 0.0
    %1627 = vmatpush.msra.mxu0 0.0
    %1628 = vmatpush.msra.mxu0 0.0
    %1629 = vmatpush.msra.mxu0 0.0
    %1630 = vmatpush.msra.mxu0 0.0
    %1631 = vmatpush.msra.mxu0 %v1612
    %1632 = vmatmul.f32.gmra.mxu0 %v1610
    %v1633 = vpop.f32.mrf.mxu0
    %v1634 = vadd.f32 0.0, %v1633
    %1635 = vdwg.mxu0
    %1636 = vmatpush.msra.mxu0 0.0
    %1637 = vmatpush.msra.mxu0 0.0
    %1638 = vmatpush.msra.mxu0 0.0
    %1639 = vmatpush.msra.mxu0 0.0
    %1640 = vmatpush.msra.mxu0 0.0
    %1641 = vmatpush.msra.mxu0 0.0
    %1642 = vmatpush.msra.mxu0 0.0
    %1643 = vmatpush.msra.mxu0 0.0
    %1644 = vmatpush.msra.mxu0 0.0
    %1645 = vmatpush.msra.mxu0 0.0
    %1646 = vmatpush.msra.mxu0 0.0
    %1647 = vmatpush.msra.mxu0 0.0
    %1648 = vmatpush.msra.mxu0 0.0
    %1649 = vmatpush.msra.mxu0 0.0
    %1650 = vmatpush.msra.mxu0 0.0
    %1651 = vmatpush.msra.mxu0 %v1614
    %1652 = vmatmul.f32.gmra.mxu0 %v1610
    %v1653 = vpop.f32.mrf.mxu0
    %v1654 = vadd.f32 0.0, %v1653
    %1655 = vdwg.mxu0
    %v1656 = vadd.f32 %v1566, %v1634
    %v1657 = vadd.f32 %v1586, %v1654
    %v1658 = vld [vmem:[%s1450] sm:$0xff]
    %v1659 = vld [vmem:[%s1450 + $0x8] sm:$0xf]
    %v1660 = vmul.f32 %v1658, %v282
    %v1661 = vmul.f32 %v1659, %v280
    %v1662 = vld [vmem:[%s287] sm:$0xff]
    %1665 = vst [vmem:[#allocation1] ss:$2 sm:$0xff] %v1660
    %s1666 = scalar_lea.vmem [#allocation1], 16
    %1667 = vst [vmem:[%s1666] ss:$2 sm:$0xff] %v1661
    %v1668 = vld.sshfl [vmem:[#allocation1] sm:$0xff pattern:$0x75316420]
    %v1669 = vld.sshfl [vmem:[#allocation1 + $0x8] sm:$0xff pattern:$0x75316420]
    %v1670 = vld.sshfl [vmem:[#allocation1 + $0x10] sm:$0xff pattern:$0x75316420]
    %1671 = vrot.lane.b32.xlu0 %v1668, 1
    %v1672 = vpop.permute.xlu0 %1671
    %1673 = vrot.lane.b32.xlu0 %v1669, 1
    %v1674 = vpop.permute.xlu0 %1673
    %1675 = vrot.lane.b32.xlu0 %v1670, 1
    %v1676 = vpop.permute.xlu0 %1675
    %v1677 = vsel %vm303, %v1672, %v1674
    %v1678 = vsel %vm303, %v1674, %v1676
    %v1680 = vsel %vm80, %v1662, 0
    %v1682 = vsel %vm49, %v1677, 0
    %v1684 = vsel %vm49, %v1678, 0
    %1686 = vmatpush.msra.mxu0 0.0
    %1687 = vmatpush.msra.mxu0 0.0
    %1688 = vmatpush.msra.mxu0 0.0
    %1689 = vmatpush.msra.mxu0 0.0
    %1690 = vmatpush.msra.mxu0 0.0
    %1691 = vmatpush.msra.mxu0 0.0
    %1692 = vmatpush.msra.mxu0 0.0
    %1693 = vmatpush.msra.mxu0 0.0
    %1694 = vmatpush.msra.mxu0 0.0
    %1695 = vmatpush.msra.mxu0 0.0
    %1696 = vmatpush.msra.mxu0 0.0
    %1697 = vmatpush.msra.mxu0 0.0
    %1698 = vmatpush.msra.mxu0 0.0
    %1699 = vmatpush.msra.mxu0 0.0
    %1700 = vmatpush.msra.mxu0 0.0
    %1701 = vmatpush.msra.mxu0 %v1682
    %1702 = vmatmul.f32.gmra.mxu0 %v1680
    %v1703 = vpop.f32.mrf.mxu0
    %v1704 = vadd.f32 0.0, %v1703
    %1705 = vdwg.mxu0
    %1706 = vmatpush.msra.mxu0 0.0
    %1707 = vmatpush.msra.mxu0 0.0
    %1708 = vmatpush.msra.mxu0 0.0
    %1709 = vmatpush.msra.mxu0 0.0
    %1710 = vmatpush.msra.mxu0 0.0
    %1711 = vmatpush.msra.mxu0 0.0
    %1712 = vmatpush.msra.mxu0 0.0
    %1713 = vmatpush.msra.mxu0 0.0
    %1714 = vmatpush.msra.mxu0 0.0
    %1715 = vmatpush.msra.mxu0 0.0
    %1716 = vmatpush.msra.mxu0 0.0
    %1717 = vmatpush.msra.mxu0 0.0
    %1718 = vmatpush.msra.mxu0 0.0
    %1719 = vmatpush.msra.mxu0 0.0
    %1720 = vmatpush.msra.mxu0 0.0
    %1721 = vmatpush.msra.mxu0 %v1684
    %1722 = vmatmul.f32.gmra.mxu0 %v1680
    %v1723 = vpop.f32.mrf.mxu0
    %v1724 = vadd.f32 0.0, %v1723
    %1725 = vdwg.mxu0
    %v1726 = vadd.f32 %v1656, %v1704
    %v1727 = vadd.f32 %v1657, %v1724
    %v1728 = vld [vmem:[%s1450 + $0x4] sm:$0xff]
    %v1729 = vld [vmem:[%s356] sm:$0xff]
    %1731 = vst [vmem:[#allocation1] ss:$2 sm:$0xff] %v1728
    %v1732 = vld.sshfl [vmem:[#allocation1] sm:$0xff pattern:$0x75316420]
    %v1733 = vld.sshfl [vmem:[#allocation1 + $0x8] sm:$0xff pattern:$0x75316420]
    %v1735 = vsel %vm80, %v1729, 0
    %v1737 = vsel %vm49, %v1732, 0
    %v1739 = vsel %vm49, %v1733, 0
    %1741 = vmatpush.msra.mxu0 0.0
    %1742 = vmatpush.msra.mxu0 0.0
    %1743 = vmatpush.msra.mxu0 0.0
    %1744 = vmatpush.msra.mxu0 0.0
    %1745 = vmatpush.msra.mxu0 0.0
    %1746 = vmatpush.msra.mxu0 0.0
    %1747 = vmatpush.msra.mxu0 0.0
    %1748 = vmatpush.msra.mxu0 0.0
    %1749 = vmatpush.msra.mxu0 0.0
    %1750 = vmatpush.msra.mxu0 0.0
    %1751 = vmatpush.msra.mxu0 0.0
    %1752 = vmatpush.msra.mxu0 0.0
    %1753 = vmatpush.msra.mxu0 0.0
    %1754 = vmatpush.msra.mxu0 0.0
    %1755 = vmatpush.msra.mxu0 0.0
    %1756 = vmatpush.msra.mxu0 %v1737
    %1757 = vmatmul.f32.gmra.mxu0 %v1735
    %v1758 = vpop.f32.mrf.mxu0
    %v1759 = vadd.f32 0.0, %v1758
    %1760 = vdwg.mxu0
    %1761 = vmatpush.msra.mxu0 0.0
    %1762 = vmatpush.msra.mxu0 0.0
    %1763 = vmatpush.msra.mxu0 0.0
    %1764 = vmatpush.msra.mxu0 0.0
    %1765 = vmatpush.msra.mxu0 0.0
    %1766 = vmatpush.msra.mxu0 0.0
    %1767 = vmatpush.msra.mxu0 0.0
    %1768 = vmatpush.msra.mxu0 0.0
    %1769 = vmatpush.msra.mxu0 0.0
    %1770 = vmatpush.msra.mxu0 0.0
    %1771 = vmatpush.msra.mxu0 0.0
    %1772 = vmatpush.msra.mxu0 0.0
    %1773 = vmatpush.msra.mxu0 0.0
    %1774 = vmatpush.msra.mxu0 0.0
    %1775 = vmatpush.msra.mxu0 0.0
    %1776 = vmatpush.msra.mxu0 %v1739
    %1777 = vmatmul.f32.gmra.mxu0 %v1735
    %v1778 = vpop.f32.mrf.mxu0
    %v1779 = vadd.f32 0.0, %v1778
    %1780 = vdwg.mxu0
    %v1781 = vadd.f32 %v1726, %v1759
    %v1782 = vadd.f32 %v1727, %v1779
    %v1783 = vld [vmem:[%s1450 + $0x4] sm:$0xff]
    %v1784 = vld [vmem:[%s1450 + $0xc] sm:$0xf]
    %v1785 = vmul.f32 %v1783, %v416
    %v1786 = vmul.f32 %v1784, %v415
    %v1787 = vld [vmem:[%s421] sm:$0xff]
    %1790 = vst [vmem:[#allocation1] ss:$2 sm:$0xff] %v1785
    %s1791 = scalar_lea.vmem [#allocation1], 16
    %1792 = vst [vmem:[%s1791] ss:$2 sm:$0xff] %v1786
    %v1793 = vld.sshfl [vmem:[#allocation1] sm:$0xff pattern:$0x75316420]
    %v1794 = vld.sshfl [vmem:[#allocation1 + $0x8] sm:$0xff pattern:$0x75316420]
    %v1795 = vld.sshfl [vmem:[#allocation1 + $0x10] sm:$0xff pattern:$0x75316420]
    %1796 = vrot.lane.b32.xlu0 %v1793, 127
    %v1797 = vpop.permute.xlu0 %1796
    %1798 = vrot.lane.b32.xlu0 %v1794, 127
    %v1799 = vpop.permute.xlu0 %1798
    %1800 = vrot.lane.b32.xlu0 %v1795, 127
    %v1801 = vpop.permute.xlu0 %1800
    %v1802 = vsel %vm281, %v1797, %v1799
    %v1803 = vsel %vm281, %v1799, %v1801
    %v1805 = vsel %vm80, %v1787, 0
    %v1807 = vsel %vm49, %v1802, 0
    %v1809 = vsel %vm49, %v1803, 0
    %1811 = vmatpush.msra.mxu0 0.0
    %1812 = vmatpush.msra.mxu0 0.0
    %1813 = vmatpush.msra.mxu0 0.0
    %1814 = vmatpush.msra.mxu0 0.0
    %1815 = vmatpush.msra.mxu0 0.0
    %1816 = vmatpush.msra.mxu0 0.0
    %1817 = vmatpush.msra.mxu0 0.0
    %1818 = vmatpush.msra.mxu0 0.0
    %1819 = vmatpush.msra.mxu0 0.0
    %1820 = vmatpush.msra.mxu0 0.0
    %1821 = vmatpush.msra.mxu0 0.0
    %1822 = vmatpush.msra.mxu0 0.0
    %1823 = vmatpush.msra.mxu0 0.0
    %1824 = vmatpush.msra.mxu0 0.0
    %1825 = vmatpush.msra.mxu0 0.0
    %1826 = vmatpush.msra.mxu0 %v1807
    %1827 = vmatmul.f32.gmra.mxu0 %v1805
    %v1828 = vpop.f32.mrf.mxu0
    %v1829 = vadd.f32 0.0, %v1828
    %1830 = vdwg.mxu0
    %1831 = vmatpush.msra.mxu0 0.0
    %1832 = vmatpush.msra.mxu0 0.0
    %1833 = vmatpush.msra.mxu0 0.0
    %1834 = vmatpush.msra.mxu0 0.0
    %1835 = vmatpush.msra.mxu0 0.0
    %1836 = vmatpush.msra.mxu0 0.0
    %1837 = vmatpush.msra.mxu0 0.0
    %1838 = vmatpush.msra.mxu0 0.0
    %1839 = vmatpush.msra.mxu0 0.0
    %1840 = vmatpush.msra.mxu0 0.0
    %1841 = vmatpush.msra.mxu0 0.0
    %1842 = vmatpush.msra.mxu0 0.0
    %1843 = vmatpush.msra.mxu0 0.0
    %1844 = vmatpush.msra.mxu0 0.0
    %1845 = vmatpush.msra.mxu0 0.0
    %1846 = vmatpush.msra.mxu0 %v1809
    %1847 = vmatmul.f32.gmra.mxu0 %v1805
    %v1848 = vpop.f32.mrf.mxu0
    %v1849 = vadd.f32 0.0, %v1848
    %1850 = vdwg.mxu0
    %v1851 = vadd.f32 %v1781, %v1829
    %v1852 = vadd.f32 %v1782, %v1849
    %v1853 = vld [vmem:[%s1450 + $0x4] sm:$0xff]
    %v1854 = vld [vmem:[%s1450 + $0xc] sm:$0xf]
    %v1855 = vmul.f32 %v1853, %v493
    %v1856 = vmul.f32 %v1854, %v492
    %v1857 = vld [vmem:[%s498] sm:$0xff]
    %1860 = vst [vmem:[#allocation1] ss:$2 sm:$0xff] %v1855
    %s1861 = scalar_lea.vmem [#allocation1], 16
    %1862 = vst [vmem:[%s1861] ss:$2 sm:$0xff] %v1856
    %v1863 = vld.sshfl [vmem:[#allocation1] sm:$0xff pattern:$0x75316420]
    %v1864 = vld.sshfl [vmem:[#allocation1 + $0x8] sm:$0xff pattern:$0x75316420]
    %v1865 = vld.sshfl [vmem:[#allocation1 + $0x10] sm:$0xff pattern:$0x75316420]
    %1866 = vrot.lane.b32.xlu0 %v1863, 113
    %v1867 = vpop.permute.xlu0 %1866
    %1868 = vrot.lane.b32.xlu0 %v1864, 113
    %v1869 = vpop.permute.xlu0 %1868
    %1870 = vrot.lane.b32.xlu0 %v1865, 113
    %v1871 = vpop.permute.xlu0 %1870
    %v1872 = vsel %vm202, %v1867, %v1869
    %v1873 = vsel %vm202, %v1869, %v1871
    %v1875 = vsel %vm80, %v1857, 0
    %v1877 = vsel %vm49, %v1872, 0
    %v1879 = vsel %vm49, %v1873, 0
    %1881 = vmatpush.msra.mxu0 0.0
    %1882 = vmatpush.msra.mxu0 0.0
    %1883 = vmatpush.msra.mxu0 0.0
    %1884 = vmatpush.msra.mxu0 0.0
    %1885 = vmatpush.msra.mxu0 0.0
    %1886 = vmatpush.msra.mxu0 0.0
    %1887 = vmatpush.msra.mxu0 0.0
    %1888 = vmatpush.msra.mxu0 0.0
    %1889 = vmatpush.msra.mxu0 0.0
    %1890 = vmatpush.msra.mxu0 0.0
    %1891 = vmatpush.msra.mxu0 0.0
    %1892 = vmatpush.msra.mxu0 0.0
    %1893 = vmatpush.msra.mxu0 0.0
    %1894 = vmatpush.msra.mxu0 0.0
    %1895 = vmatpush.msra.mxu0 0.0
    %1896 = vmatpush.msra.mxu0 %v1877
    %1897 = vmatmul.f32.gmra.mxu0 %v1875
    %v1898 = vpop.f32.mrf.mxu0
    %v1899 = vadd.f32 0.0, %v1898
    %1900 = vdwg.mxu0
    %1901 = vmatpush.msra.mxu0 0.0
    %1902 = vmatpush.msra.mxu0 0.0
    %1903 = vmatpush.msra.mxu0 0.0
    %1904 = vmatpush.msra.mxu0 0.0
    %1905 = vmatpush.msra.mxu0 0.0
    %1906 = vmatpush.msra.mxu0 0.0
    %1907 = vmatpush.msra.mxu0 0.0
    %1908 = vmatpush.msra.mxu0 0.0
    %1909 = vmatpush.msra.mxu0 0.0
    %1910 = vmatpush.msra.mxu0 0.0
    %1911 = vmatpush.msra.mxu0 0.0
    %1912 = vmatpush.msra.mxu0 0.0
    %1913 = vmatpush.msra.mxu0 0.0
    %1914 = vmatpush.msra.mxu0 0.0
    %1915 = vmatpush.msra.mxu0 0.0
    %1916 = vmatpush.msra.mxu0 %v1879
    %1917 = vmatmul.f32.gmra.mxu0 %v1875
    %v1918 = vpop.f32.mrf.mxu0
    %v1919 = vadd.f32 0.0, %v1918
    %1920 = vdwg.mxu0
    %v1921 = vadd.f32 %v1851, %v1899
    %v1922 = vadd.f32 %v1852, %v1919
    %v1923 = vld [vmem:[%s1450 + $0x4] sm:$0xff]
    %v1924 = vld [vmem:[%s1450 + $0xc] sm:$0xf]
    %v1925 = vld [vmem:[%s567] sm:$0xff]
    %1928 = vst [vmem:[#allocation1] ss:$2 sm:$0xff] %v1923
    %s1929 = scalar_lea.vmem [#allocation1], 16
    %1930 = vst [vmem:[%s1929] ss:$2 sm:$0xff] %v1924
    %v1931 = vld.sshfl [vmem:[#allocation1] sm:$0xff pattern:$0x75316420]
    %v1932 = vld.sshfl [vmem:[#allocation1 + $0x8] sm:$0xff pattern:$0x75316420]
    %v1933 = vld.sshfl [vmem:[#allocation1 + $0x10] sm:$0xff pattern:$0x75316420]
    %1934 = vrot.lane.b32.xlu0 %v1931, 112
    %v1935 = vpop.permute.xlu0 %1934
    %1936 = vrot.lane.b32.xlu0 %v1932, 112
    %v1937 = vpop.permute.xlu0 %1936
    %1938 = vrot.lane.b32.xlu0 %v1933, 112
    %v1939 = vpop.permute.xlu0 %1938
    %v1940 = vsel %vm583, %v1935, %v1937
    %v1941 = vsel %vm583, %v1937, %v1939
    %v1943 = vsel %vm80, %v1925, 0
    %v1945 = vsel %vm49, %v1940, 0
    %v1947 = vsel %vm49, %v1941, 0
    %1949 = vmatpush.msra.mxu0 0.0
    %1950 = vmatpush.msra.mxu0 0.0
    %1951 = vmatpush.msra.mxu0 0.0
    %1952 = vmatpush.msra.mxu0 0.0
    %1953 = vmatpush.msra.mxu0 0.0
    %1954 = vmatpush.msra.mxu0 0.0
    %1955 = vmatpush.msra.mxu0 0.0
    %1956 = vmatpush.msra.mxu0 0.0
    %1957 = vmatpush.msra.mxu0 0.0
    %1958 = vmatpush.msra.mxu0 0.0
    %1959 = vmatpush.msra.mxu0 0.0
    %1960 = vmatpush.msra.mxu0 0.0
    %1961 = vmatpush.msra.mxu0 0.0
    %1962 = vmatpush.msra.mxu0 0.0
    %1963 = vmatpush.msra.mxu0 0.0
    %1964 = vmatpush.msra.mxu0 %v1945
    %1965 = vmatmul.f32.gmra.mxu0 %v1943
    %v1966 = vpop.f32.mrf.mxu0
    %v1967 = vadd.f32 0.0, %v1966
    %1968 = vdwg.mxu0
    %1969 = vmatpush.msra.mxu0 0.0
    %1970 = vmatpush.msra.mxu0 0.0
    %1971 = vmatpush.msra.mxu0 0.0
    %1972 = vmatpush.msra.mxu0 0.0
    %1973 = vmatpush.msra.mxu0 0.0
    %1974 = vmatpush.msra.mxu0 0.0
    %1975 = vmatpush.msra.mxu0 0.0
    %1976 = vmatpush.msra.mxu0 0.0
    %1977 = vmatpush.msra.mxu0 0.0
    %1978 = vmatpush.msra.mxu0 0.0
    %1979 = vmatpush.msra.mxu0 0.0
    %1980 = vmatpush.msra.mxu0 0.0
    %1981 = vmatpush.msra.mxu0 0.0
    %1982 = vmatpush.msra.mxu0 0.0
    %1983 = vmatpush.msra.mxu0 0.0
    %1984 = vmatpush.msra.mxu0 %v1947
    %1985 = vmatmul.f32.gmra.mxu0 %v1943
    %v1986 = vpop.f32.mrf.mxu0
    %v1987 = vadd.f32 0.0, %v1986
    %1988 = vdwg.mxu0
    %v1989 = vadd.f32 %v1921, %v1967
    %v1990 = vadd.f32 %v1922, %v1987
    %v1991 = vld [vmem:[%s1450 + $0x4] sm:$0xff]
    %v1992 = vld [vmem:[%s1450 + $0xc] sm:$0xf]
    %v1993 = vmul.f32 %v1991, %v640
    %v1994 = vmul.f32 %v1992, %v639
    %v1995 = vld [vmem:[%s645] sm:$0xff]
    %1998 = vst [vmem:[#allocation1] ss:$2 sm:$0xff] %v1993
    %s1999 = scalar_lea.vmem [#allocation1], 16
    %2000 = vst [vmem:[%s1999] ss:$2 sm:$0xff] %v1994
    %v2001 = vld.sshfl [vmem:[#allocation1] sm:$0xff pattern:$0x75316420]
    %v2002 = vld.sshfl [vmem:[#allocation1 + $0x8] sm:$0xff pattern:$0x75316420]
    %v2003 = vld.sshfl [vmem:[#allocation1 + $0x10] sm:$0xff pattern:$0x75316420]
    %2004 = vrot.lane.b32.xlu0 %v2001, 111
    %v2005 = vpop.permute.xlu0 %2004
    %2006 = vrot.lane.b32.xlu0 %v2002, 111
    %v2007 = vpop.permute.xlu0 %2006
    %2008 = vrot.lane.b32.xlu0 %v2003, 111
    %v2009 = vpop.permute.xlu0 %2008
    %v2010 = vsel %vm54, %v2005, %v2007
    %v2011 = vsel %vm54, %v2007, %v2009
    %v2013 = vsel %vm80, %v1995, 0
    %v2015 = vsel %vm49, %v2010, 0
    %v2017 = vsel %vm49, %v2011, 0
    %2019 = vmatpush.msra.mxu0 0.0
    %2020 = vmatpush.msra.mxu0 0.0
    %2021 = vmatpush.msra.mxu0 0.0
    %2022 = vmatpush.msra.mxu0 0.0
    %2023 = vmatpush.msra.mxu0 0.0
    %2024 = vmatpush.msra.mxu0 0.0
    %2025 = vmatpush.msra.mxu0 0.0
    %2026 = vmatpush.msra.mxu0 0.0
    %2027 = vmatpush.msra.mxu0 0.0
    %2028 = vmatpush.msra.mxu0 0.0
    %2029 = vmatpush.msra.mxu0 0.0
    %2030 = vmatpush.msra.mxu0 0.0
    %2031 = vmatpush.msra.mxu0 0.0
    %2032 = vmatpush.msra.mxu0 0.0
    %2033 = vmatpush.msra.mxu0 0.0
    %2034 = vmatpush.msra.mxu0 %v2015
    %2035 = vmatmul.f32.gmra.mxu0 %v2013
    %v2036 = vpop.f32.mrf.mxu0
    %v2037 = vadd.f32 0.0, %v2036
    %2038 = vdwg.mxu0
    %2039 = vmatpush.msra.mxu0 0.0
    %2040 = vmatpush.msra.mxu0 0.0
    %2041 = vmatpush.msra.mxu0 0.0
    %2042 = vmatpush.msra.mxu0 0.0
    %2043 = vmatpush.msra.mxu0 0.0
    %2044 = vmatpush.msra.mxu0 0.0
    %2045 = vmatpush.msra.mxu0 0.0
    %2046 = vmatpush.msra.mxu0 0.0
    %2047 = vmatpush.msra.mxu0 0.0
    %2048 = vmatpush.msra.mxu0 0.0
    %2049 = vmatpush.msra.mxu0 0.0
    %2050 = vmatpush.msra.mxu0 0.0
    %2051 = vmatpush.msra.mxu0 0.0
    %2052 = vmatpush.msra.mxu0 0.0
    %2053 = vmatpush.msra.mxu0 0.0
    %2054 = vmatpush.msra.mxu0 %v2017
    %2055 = vmatmul.f32.gmra.mxu0 %v2013
    %v2056 = vpop.f32.mrf.mxu0
    %v2057 = vadd.f32 0.0, %v2056
    %2058 = vdwg.mxu0
    %v2059 = vadd.f32 %v1989, %v2037
    %v2060 = vadd.f32 %v1990, %v2057
    %v2061 = vld [vmem:[%s3] sm:$0xff]
    %2063 = vset.pattern.permute.xlu0 0
    %2064 = vperm.xlu0 %2063, %v2061
    %v2065 = vpop.permute.xlu0 %2064
    %v2067 = vadd.f32 %v2059, %v2065
    %v2068 = vadd.f32 %v2060, %v2065
    %v2069 = vadd.f32 %v2067, %v2068
    %2070 = vadd.xlane.f32.xlu0 %v2069
    %v2071 = vpop.xlane.xlu0 %2070
    %v2072 = vmul.f32 %v2067, %v2067
    %v2073 = vmul.f32 %v2068, %v2068
    %v2074 = vadd.f32 %v2072, %v2073
    %2075 = vadd.xlane.f32.xlu0 %v2074
    %v2076 = vpop.xlane.xlu0 %2075
    %v2077 = vmul.f32 %v2071, 0.00390625
    %v2078 = vmul.f32 %v2076, 0.00390625
    %v2079 = vmul.f32 %v2077, %v2077
    %v2080 = vsub.f32 %v2078, %v2079
    %v2081 = vmax.f32 %v2080, 0.0
    %v2082 = vadd.f32 %v2081, 1e-05
    %v2083 = vrsqrt.pop %v2082
    %v2084 = vmul.f32 %v2083, %v2082
    %v2085 = vmul.f32 %v2084, %v2083
    %v2086 = vmul.f32 0.5, %v2085
    %v2087 = vsub.f32 1.5, %v2086
    %v2088 = vmul.f32 %v2083, %v2087
    %vm2089 = vweird.f32 %v2082
    %vm2090 = vweird.f32 %v2083
    %vm2091 = vmor %vm2089, %vm2090
    %v2092 = vsel %vm2091, %v2083, %v2088
    %v2093 = vld [vmem:[%s4] sm:$0xff]
    %v2094 = vmul.f32 %v2093, %v2092
    %v2095 = vsel %vm746, %v2094, 1.0
    %v2096 = vld [vmem:[%s5] sm:$0xff]
    %v2097 = vmul.f32 %v2077, %v2095
    %v2098 = vsub.f32 %v2096, %v2097
    %v2099 = vsel %vm746, %v2098, 0.0
    %2101 = vset.pattern.permute.xlu0 0
    %2102 = vperm.xlu0 %2101, %v2095
    %v2103 = vpop.permute.xlu0 %2102
    %v2105 = vmul.f32 %v2067, %v2103
    %v2106 = vmul.f32 %v2068, %v2103
    %2108 = vset.pattern.permute.xlu0 0
    %2109 = vperm.xlu0 %2108, %v2099
    %v2110 = vpop.permute.xlu0 %2109
    %v2112 = vadd.f32 %v2105, %v2110
    %v2113 = vadd.f32 %v2106, %v2110
    %vm2114 = vcmp.ge.f32.partialorder %v2112, 0.0
    %vm2115 = vcmp.ge.f32.partialorder %v2113, 0.0
    %v2116 = vmul.f32 %v2112, 0.1
    %v2117 = vmul.f32 %v2113, 0.1
    %v2118 = vsel %vm2114, %v2112, %v2116
    %v2119 = vsel %vm2115, %v2113, %v2117
    %s2120 = scalar_lea.vmem [#allocation3], 32
    %2121 = vst [vmem:[%s2120] sm:$0xff] 0.0
    %2122 = vst [vmem:[%s2120 + $0x18] sm:$0xff] 0.0
    %2123 = vst [vmem:[%s2120 + $0x8] sm:$0xff] %v2118
    %2124 = vst [vmem:[%s2120 + $0x10] sm:$0xff] %v2119
    %v2125 = vld [vmem:[%s2120] sm:$0xff]
    %v2126 = vld [vmem:[%s2120 + $0x8] sm:$0xff]
    %v2127 = vld [vmem:[%s2120 + $0x10] sm:$0xff]
    %v2128 = vmul.f32 %v2125, %v782
    %v2129 = vmul.f32 %v2126, %v785
    %v2130 = vmul.f32 %v2127, %v784
    %v2131 = vld [vmem:[%s6] sm:$0xff]
    %v2132 = vld [vmem:[%s793] sm:$0xff]
    %2136 = vrot.lane.b32.xlu0 %v2125, 16
    %v2137 = vpop.permute.xlu0 %2136
    %2138 = vrot.lane.b32.xlu0 %v2126, 16
    %v2139 = vpop.permute.xlu0 %2138
    %2140 = vrot.lane.b32.xlu0 %v2127, 16
    %v2141 = vpop.permute.xlu0 %2140
    %v2142 = vsel %vm77, %v2137, %v2139
    %v2143 = vsel %vm77, %v2139, %v2141
    %v2147 = vsel %vm808, %v2132, 0
    %2149 = vmatpush.msra.mxu0 0.0
    %2150 = vmatpush.msra.mxu0 0.0
    %2151 = vmatpush.msra.mxu0 0.0
    %2152 = vmatpush.msra.mxu0 0.0
    %2153 = vmatpush.msra.mxu0 0.0
    %2154 = vmatpush.msra.mxu0 0.0
    %2155 = vmatpush.msra.mxu0 0.0
    %2156 = vmatpush.msra.mxu0 0.0
    %2157 = vmatpush.msra.mxu0 0.0
    %2158 = vmatpush.msra.mxu0 0.0
    %2159 = vmatpush.msra.mxu0 0.0
    %2160 = vmatpush.msra.mxu0 0.0
    %2161 = vmatpush.msra.mxu0 0.0
    %2162 = vmatpush.msra.mxu0 0.0
    %2163 = vmatpush.msra.mxu0 0.0
    %2164 = vmatpush.msra.mxu0 %v2142
    %2165 = vmatmul.f32.gmra.mxu0 %v2147
    %v2166 = vpop.f32.mrf.mxu0
    %v2167 = vadd.f32 0.0, %v2166
    %2168 = vdwg.mxu0
    %2169 = vmatpush.msra.mxu0 0.0
    %2170 = vmatpush.msra.mxu0 0.0
    %2171 = vmatpush.msra.mxu0 0.0
    %2172 = vmatpush.msra.mxu0 0.0
    %2173 = vmatpush.msra.mxu0 0.0
    %2174 = vmatpush.msra.mxu0 0.0
    %2175 = vmatpush.msra.mxu0 0.0
    %2176 = vmatpush.msra.mxu0 0.0
    %2177 = vmatpush.msra.mxu0 0.0
    %2178 = vmatpush.msra.mxu0 0.0
    %2179 = vmatpush.msra.mxu0 0.0
    %2180 = vmatpush.msra.mxu0 0.0
    %2181 = vmatpush.msra.mxu0 0.0
    %2182 = vmatpush.msra.mxu0 0.0
    %2183 = vmatpush.msra.mxu0 0.0
    %2184 = vmatpush.msra.mxu0 %v2143
    %2185 = vmatmul.f32.gmra.mxu0 %v2147
    %v2186 = vpop.f32.mrf.mxu0
    %v2187 = vadd.f32 0.0, %v2186
    %2188 = vdwg.mxu0
    %2192 = vrot.lane.b32.xlu0 %v2128, 17
    %v2193 = vpop.permute.xlu0 %2192
    %2194 = vrot.lane.b32.xlu0 %v2129, 17
    %v2195 = vpop.permute.xlu0 %2194
    %2196 = vrot.lane.b32.xlu0 %v2130, 17
    %v2197 = vpop.permute.xlu0 %2196
    %v2198 = vsel %vm142, %v2193, %v2195
    %v2199 = vsel %vm142, %v2195, %v2197
    %v2203 = vsel %vm808, %v2131, 0
    %2205 = vmatpush.msra.mxu0 0.0
    %2206 = vmatpush.msra.mxu0 0.0
    %2207 = vmatpush.msra.mxu0 0.0
    %2208 = vmatpush.msra.mxu0 0.0
    %2209 = vmatpush.msra.mxu0 0.0
    %2210 = vmatpush.msra.mxu0 0.0
    %2211 = vmatpush.msra.mxu0 0.0
    %2212 = vmatpush.msra.mxu0 0.0
    %2213 = vmatpush.msra.mxu0 0.0
    %2214 = vmatpush.msra.mxu0 0.0
    %2215 = vmatpush.msra.mxu0 0.0
    %2216 = vmatpush.msra.mxu0 0.0
    %2217 = vmatpush.msra.mxu0 0.0
    %2218 = vmatpush.msra.mxu0 0.0
    %2219 = vmatpush.msra.mxu0 0.0
    %2220 = vmatpush.msra.mxu0 %v2198
    %2221 = vmatmul.f32.gmra.mxu0 %v2203
    %v2222 = vpop.f32.mrf.mxu0
    %v2223 = vadd.f32 %v2167, %v2222
    %2224 = vdwg.mxu0
    %2225 = vmatpush.msra.mxu0 0.0
    %2226 = vmatpush.msra.mxu0 0.0
    %2227 = vmatpush.msra.mxu0 0.0
    %2228 = vmatpush.msra.mxu0 0.0
    %2229 = vmatpush.msra.mxu0 0.0
    %2230 = vmatpush.msra.mxu0 0.0
    %2231 = vmatpush.msra.mxu0 0.0
    %2232 = vmatpush.msra.mxu0 0.0
    %2233 = vmatpush.msra.mxu0 0.0
    %2234 = vmatpush.msra.mxu0 0.0
    %2235 = vmatpush.msra.mxu0 0.0
    %2236 = vmatpush.msra.mxu0 0.0
    %2237 = vmatpush.msra.mxu0 0.0
    %2238 = vmatpush.msra.mxu0 0.0
    %2239 = vmatpush.msra.mxu0 0.0
    %2240 = vmatpush.msra.mxu0 %v2199
    %2241 = vmatmul.f32.gmra.mxu0 %v2203
    %v2242 = vpop.f32.mrf.mxu0
    %v2243 = vadd.f32 %v2187, %v2242
    %2244 = vdwg.mxu0
    %v2245 = vmul.f32 %v2125, %v909
    %v2246 = vmul.f32 %v2126, %v912
    %v2247 = vmul.f32 %v2127, %v911
    %v2248 = vld [vmem:[%s919] sm:$0xff]
    %2252 = vrot.lane.b32.xlu0 %v2245, 15
    %v2253 = vpop.permute.xlu0 %2252
    %2254 = vrot.lane.b32.xlu0 %v2246, 15
    %v2255 = vpop.permute.xlu0 %2254
    %2256 = vrot.lane.b32.xlu0 %v2247, 15
    %v2257 = vpop.permute.xlu0 %2256
    %v2258 = vsel %vm224, %v2253, %v2255
    %v2259 = vsel %vm224, %v2255, %v2257
    %v2263 = vsel %vm808, %v2248, 0
    %2265 = vmatpush.msra.mxu0 0.0
    %2266 = vmatpush.msra.mxu0 0.0
    %2267 = vmatpush.msra.mxu0 0.0
    %2268 = vmatpush.msra.mxu0 0.0
    %2269 = vmatpush.msra.mxu0 0.0
    %2270 = vmatpush.msra.mxu0 0.0
    %2271 = vmatpush.msra.mxu0 0.0
    %2272 = vmatpush.msra.mxu0 0.0
    %2273 = vmatpush.msra.mxu0 0.0
    %2274 = vmatpush.msra.mxu0 0.0
    %2275 = vmatpush.msra.mxu0 0.0
    %2276 = vmatpush.msra.mxu0 0.0
    %2277 = vmatpush.msra.mxu0 0.0
    %2278 = vmatpush.msra.mxu0 0.0
    %2279 = vmatpush.msra.mxu0 0.0
    %2280 = vmatpush.msra.mxu0 %v2258
    %2281 = vmatmul.f32.gmra.mxu0 %v2263
    %v2282 = vpop.f32.mrf.mxu0
    %v2283 = vadd.f32 0.0, %v2282
    %2284 = vdwg.mxu0
    %2285 = vmatpush.msra.mxu0 0.0
    %2286 = vmatpush.msra.mxu0 0.0
    %2287 = vmatpush.msra.mxu0 0.0
    %2288 = vmatpush.msra.mxu0 0.0
    %2289 = vmatpush.msra.mxu0 0.0
    %2290 = vmatpush.msra.mxu0 0.0
    %2291 = vmatpush.msra.mxu0 0.0
    %2292 = vmatpush.msra.mxu0 0.0
    %2293 = vmatpush.msra.mxu0 0.0
    %2294 = vmatpush.msra.mxu0 0.0
    %2295 = vmatpush.msra.mxu0 0.0
    %2296 = vmatpush.msra.mxu0 0.0
    %2297 = vmatpush.msra.mxu0 0.0
    %2298 = vmatpush.msra.mxu0 0.0
    %2299 = vmatpush.msra.mxu0 0.0
    %2300 = vmatpush.msra.mxu0 %v2259
    %2301 = vmatmul.f32.gmra.mxu0 %v2263
    %v2302 = vpop.f32.mrf.mxu0
    %v2303 = vadd.f32 0.0, %v2302
    %2304 = vdwg.mxu0
    %v2305 = vadd.f32 %v2223, %v2283
    %v2306 = vadd.f32 %v2243, %v2303
    %v2307 = vmul.f32 %v2125, %v980
    %v2308 = vmul.f32 %v2126, %v983
    %v2309 = vmul.f32 %v2127, %v982
    %v2310 = vld [vmem:[%s990] sm:$0xff]
    %2314 = vrot.lane.b32.xlu0 %v2307, 1
    %v2315 = vpop.permute.xlu0 %2314
    %2316 = vrot.lane.b32.xlu0 %v2308, 1
    %v2317 = vpop.permute.xlu0 %2316
    %2318 = vrot.lane.b32.xlu0 %v2309, 1
    %v2319 = vpop.permute.xlu0 %2318
    %v2320 = vsel %vm303, %v2315, %v2317
    %v2321 = vsel %vm303, %v2317, %v2319
    %v2325 = vsel %vm808, %v2310, 0
    %2327 = vmatpush.msra.mxu0 0.0
    %2328 = vmatpush.msra.mxu0 0.0
    %2329 = vmatpush.msra.mxu0 0.0
    %2330 = vmatpush.msra.mxu0 0.0
    %2331 = vmatpush.msra.mxu0 0.0
    %2332 = vmatpush.msra.mxu0 0.0
    %2333 = vmatpush.msra.mxu0 0.0
    %2334 = vmatpush.msra.mxu0 0.0
    %2335 = vmatpush.msra.mxu0 0.0
    %2336 = vmatpush.msra.mxu0 0.0
    %2337 = vmatpush.msra.mxu0 0.0
    %2338 = vmatpush.msra.mxu0 0.0
    %2339 = vmatpush.msra.mxu0 0.0
    %2340 = vmatpush.msra.mxu0 0.0
    %2341 = vmatpush.msra.mxu0 0.0
    %2342 = vmatpush.msra.mxu0 %v2320
    %2343 = vmatmul.f32.gmra.mxu0 %v2325
    %v2344 = vpop.f32.mrf.mxu0
    %v2345 = vadd.f32 0.0, %v2344
    %2346 = vdwg.mxu0
    %2347 = vmatpush.msra.mxu0 0.0
    %2348 = vmatpush.msra.mxu0 0.0
    %2349 = vmatpush.msra.mxu0 0.0
    %2350 = vmatpush.msra.mxu0 0.0
    %2351 = vmatpush.msra.mxu0 0.0
    %2352 = vmatpush.msra.mxu0 0.0
    %2353 = vmatpush.msra.mxu0 0.0
    %2354 = vmatpush.msra.mxu0 0.0
    %2355 = vmatpush.msra.mxu0 0.0
    %2356 = vmatpush.msra.mxu0 0.0
    %2357 = vmatpush.msra.mxu0 0.0
    %2358 = vmatpush.msra.mxu0 0.0
    %2359 = vmatpush.msra.mxu0 0.0
    %2360 = vmatpush.msra.mxu0 0.0
    %2361 = vmatpush.msra.mxu0 0.0
    %2362 = vmatpush.msra.mxu0 %v2321
    %2363 = vmatmul.f32.gmra.mxu0 %v2325
    %v2364 = vpop.f32.mrf.mxu0
    %v2365 = vadd.f32 0.0, %v2364
    %2366 = vdwg.mxu0
    %v2367 = vadd.f32 %v2305, %v2345
    %v2368 = vadd.f32 %v2306, %v2365
    %v2369 = vld [vmem:[%s1050] sm:$0xff]
    %v2371 = vsel %vm808, %v2369, 0
    %2373 = vmatpush.msra.mxu0 0.0
    %2374 = vmatpush.msra.mxu0 0.0
    %2375 = vmatpush.msra.mxu0 0.0
    %2376 = vmatpush.msra.mxu0 0.0
    %2377 = vmatpush.msra.mxu0 0.0
    %2378 = vmatpush.msra.mxu0 0.0
    %2379 = vmatpush.msra.mxu0 0.0
    %2380 = vmatpush.msra.mxu0 0.0
    %2381 = vmatpush.msra.mxu0 0.0
    %2382 = vmatpush.msra.mxu0 0.0
    %2383 = vmatpush.msra.mxu0 0.0
    %2384 = vmatpush.msra.mxu0 0.0
    %2385 = vmatpush.msra.mxu0 0.0
    %2386 = vmatpush.msra.mxu0 0.0
    %2387 = vmatpush.msra.mxu0 0.0
    %2388 = vmatpush.msra.mxu0 %v2126
    %2389 = vmatmul.f32.gmra.mxu0 %v2371
    %v2390 = vpop.f32.mrf.mxu0
    %v2391 = vadd.f32 0.0, %v2390
    %2392 = vdwg.mxu0
    %2393 = vmatpush.msra.mxu0 0.0
    %2394 = vmatpush.msra.mxu0 0.0
    %2395 = vmatpush.msra.mxu0 0.0
    %2396 = vmatpush.msra.mxu0 0.0
    %2397 = vmatpush.msra.mxu0 0.0
    %2398 = vmatpush.msra.mxu0 0.0
    %2399 = vmatpush.msra.mxu0 0.0
    %2400 = vmatpush.msra.mxu0 0.0
    %2401 = vmatpush.msra.mxu0 0.0
    %2402 = vmatpush.msra.mxu0 0.0
    %2403 = vmatpush.msra.mxu0 0.0
    %2404 = vmatpush.msra.mxu0 0.0
    %2405 = vmatpush.msra.mxu0 0.0
    %2406 = vmatpush.msra.mxu0 0.0
    %2407 = vmatpush.msra.mxu0 0.0
    %2408 = vmatpush.msra.mxu0 %v2127
    %2409 = vmatmul.f32.gmra.mxu0 %v2371
    %v2410 = vpop.f32.mrf.mxu0
    %v2411 = vadd.f32 0.0, %v2410
    %2412 = vdwg.mxu0
    %v2413 = vadd.f32 %v2367, %v2391
    %v2414 = vadd.f32 %v2368, %v2411
    %v2415 = vld [vmem:[%s2120 + $0x8] sm:$0xff]
    %v2416 = vld [vmem:[%s2120 + $0x10] sm:$0xff]
    %v2417 = vld [vmem:[%s2120 + $0x18] sm:$0xff]
    %v2418 = vmul.f32 %v2415, %v1101
    %v2419 = vmul.f32 %v2416, %v1104
    %v2420 = vmul.f32 %v2417, %v1103
    %v2421 = vld [vmem:[%s1111] sm:$0xff]
    %2425 = vrot.lane.b32.xlu0 %v2418, 127
    %v2426 = vpop.permute.xlu0 %2425
    %2427 = vrot.lane.b32.xlu0 %v2419, 127
    %v2428 = vpop.permute.xlu0 %2427
    %2429 = vrot.lane.b32.xlu0 %v2420, 127
    %v2430 = vpop.permute.xlu0 %2429
    %v2431 = vsel %vm281, %v2426, %v2428
    %v2432 = vsel %vm281, %v2428, %v2430
    %v2436 = vsel %vm808, %v2421, 0
    %2438 = vmatpush.msra.mxu0 0.0
    %2439 = vmatpush.msra.mxu0 0.0
    %2440 = vmatpush.msra.mxu0 0.0
    %2441 = vmatpush.msra.mxu0 0.0
    %2442 = vmatpush.msra.mxu0 0.0
    %2443 = vmatpush.msra.mxu0 0.0
    %2444 = vmatpush.msra.mxu0 0.0
    %2445 = vmatpush.msra.mxu0 0.0
    %2446 = vmatpush.msra.mxu0 0.0
    %2447 = vmatpush.msra.mxu0 0.0
    %2448 = vmatpush.msra.mxu0 0.0
    %2449 = vmatpush.msra.mxu0 0.0
    %2450 = vmatpush.msra.mxu0 0.0
    %2451 = vmatpush.msra.mxu0 0.0
    %2452 = vmatpush.msra.mxu0 0.0
    %2453 = vmatpush.msra.mxu0 %v2431
    %2454 = vmatmul.f32.gmra.mxu0 %v2436
    %v2455 = vpop.f32.mrf.mxu0
    %v2456 = vadd.f32 0.0, %v2455
    %2457 = vdwg.mxu0
    %2458 = vmatpush.msra.mxu0 0.0
    %2459 = vmatpush.msra.mxu0 0.0
    %2460 = vmatpush.msra.mxu0 0.0
    %2461 = vmatpush.msra.mxu0 0.0
    %2462 = vmatpush.msra.mxu0 0.0
    %2463 = vmatpush.msra.mxu0 0.0
    %2464 = vmatpush.msra.mxu0 0.0
    %2465 = vmatpush.msra.mxu0 0.0
    %2466 = vmatpush.msra.mxu0 0.0
    %2467 = vmatpush.msra.mxu0 0.0
    %2468 = vmatpush.msra.mxu0 0.0
    %2469 = vmatpush.msra.mxu0 0.0
    %2470 = vmatpush.msra.mxu0 0.0
    %2471 = vmatpush.msra.mxu0 0.0
    %2472 = vmatpush.msra.mxu0 0.0
    %2473 = vmatpush.msra.mxu0 %v2432
    %2474 = vmatmul.f32.gmra.mxu0 %v2436
    %v2475 = vpop.f32.mrf.mxu0
    %v2476 = vadd.f32 0.0, %v2475
    %2477 = vdwg.mxu0
    %v2478 = vadd.f32 %v2413, %v2456
    %v2479 = vadd.f32 %v2414, %v2476
    %v2480 = vmul.f32 %v2415, %v1172
    %v2481 = vmul.f32 %v2416, %v1175
    %v2482 = vmul.f32 %v2417, %v1174
    %v2483 = vld [vmem:[%s1182] sm:$0xff]
    %2487 = vrot.lane.b32.xlu0 %v2480, 113
    %v2488 = vpop.permute.xlu0 %2487
    %2489 = vrot.lane.b32.xlu0 %v2481, 113
    %v2490 = vpop.permute.xlu0 %2489
    %2491 = vrot.lane.b32.xlu0 %v2482, 113
    %v2492 = vpop.permute.xlu0 %2491
    %v2493 = vsel %vm202, %v2488, %v2490
    %v2494 = vsel %vm202, %v2490, %v2492
    %v2498 = vsel %vm808, %v2483, 0
    %2500 = vmatpush.msra.mxu0 0.0
    %2501 = vmatpush.msra.mxu0 0.0
    %2502 = vmatpush.msra.mxu0 0.0
    %2503 = vmatpush.msra.mxu0 0.0
    %2504 = vmatpush.msra.mxu0 0.0
    %2505 = vmatpush.msra.mxu0 0.0
    %2506 = vmatpush.msra.mxu0 0.0
    %2507 = vmatpush.msra.mxu0 0.0
    %2508 = vmatpush.msra.mxu0 0.0
    %2509 = vmatpush.msra.mxu0 0.0
    %2510 = vmatpush.msra.mxu0 0.0
    %2511 = vmatpush.msra.mxu0 0.0
    %2512 = vmatpush.msra.mxu0 0.0
    %2513 = vmatpush.msra.mxu0 0.0
    %2514 = vmatpush.msra.mxu0 0.0
    %2515 = vmatpush.msra.mxu0 %v2493
    %2516 = vmatmul.f32.gmra.mxu0 %v2498
    %v2517 = vpop.f32.mrf.mxu0
    %v2518 = vadd.f32 0.0, %v2517
    %2519 = vdwg.mxu0
    %2520 = vmatpush.msra.mxu0 0.0
    %2521 = vmatpush.msra.mxu0 0.0
    %2522 = vmatpush.msra.mxu0 0.0
    %2523 = vmatpush.msra.mxu0 0.0
    %2524 = vmatpush.msra.mxu0 0.0
    %2525 = vmatpush.msra.mxu0 0.0
    %2526 = vmatpush.msra.mxu0 0.0
    %2527 = vmatpush.msra.mxu0 0.0
    %2528 = vmatpush.msra.mxu0 0.0
    %2529 = vmatpush.msra.mxu0 0.0
    %2530 = vmatpush.msra.mxu0 0.0
    %2531 = vmatpush.msra.mxu0 0.0
    %2532 = vmatpush.msra.mxu0 0.0
    %2533 = vmatpush.msra.mxu0 0.0
    %2534 = vmatpush.msra.mxu0 0.0
    %2535 = vmatpush.msra.mxu0 %v2494
    %2536 = vmatmul.f32.gmra.mxu0 %v2498
    %v2537 = vpop.f32.mrf.mxu0
    %v2538 = vadd.f32 0.0, %v2537
    %2539 = vdwg.mxu0
    %v2540 = vadd.f32 %v2478, %v2518
    %v2541 = vadd.f32 %v2479, %v2538
    %v2542 = vld [vmem:[%s1242] sm:$0xff]
    %2546 = vrot.lane.b32.xlu0 %v2415, 112
    %v2547 = vpop.permute.xlu0 %2546
    %2548 = vrot.lane.b32.xlu0 %v2416, 112
    %v2549 = vpop.permute.xlu0 %2548
    %2550 = vrot.lane.b32.xlu0 %v2417, 112
    %v2551 = vpop.permute.xlu0 %2550
    %v2552 = vsel %vm583, %v2547, %v2549
    %v2553 = vsel %vm583, %v2549, %v2551
    %v2557 = vsel %vm808, %v2542, 0
    %2559 = vmatpush.msra.mxu0 0.0
    %2560 = vmatpush.msra.mxu0 0.0
    %2561 = vmatpush.msra.mxu0 0.0
    %2562 = vmatpush.msra.mxu0 0.0
    %2563 = vmatpush.msra.mxu0 0.0
    %2564 = vmatpush.msra.mxu0 0.0
    %2565 = vmatpush.msra.mxu0 0.0
    %2566 = vmatpush.msra.mxu0 0.0
    %2567 = vmatpush.msra.mxu0 0.0
    %2568 = vmatpush.msra.mxu0 0.0
    %2569 = vmatpush.msra.mxu0 0.0
    %2570 = vmatpush.msra.mxu0 0.0
    %2571 = vmatpush.msra.mxu0 0.0
    %2572 = vmatpush.msra.mxu0 0.0
    %2573 = vmatpush.msra.mxu0 0.0
    %2574 = vmatpush.msra.mxu0 %v2552
    %2575 = vmatmul.f32.gmra.mxu0 %v2557
    %v2576 = vpop.f32.mrf.mxu0
    %v2577 = vadd.f32 0.0, %v2576
    %2578 = vdwg.mxu0
    %2579 = vmatpush.msra.mxu0 0.0
    %2580 = vmatpush.msra.mxu0 0.0
    %2581 = vmatpush.msra.mxu0 0.0
    %2582 = vmatpush.msra.mxu0 0.0
    %2583 = vmatpush.msra.mxu0 0.0
    %2584 = vmatpush.msra.mxu0 0.0
    %2585 = vmatpush.msra.mxu0 0.0
    %2586 = vmatpush.msra.mxu0 0.0
    %2587 = vmatpush.msra.mxu0 0.0
    %2588 = vmatpush.msra.mxu0 0.0
    %2589 = vmatpush.msra.mxu0 0.0
    %2590 = vmatpush.msra.mxu0 0.0
    %2591 = vmatpush.msra.mxu0 0.0
    %2592 = vmatpush.msra.mxu0 0.0
    %2593 = vmatpush.msra.mxu0 0.0
    %2594 = vmatpush.msra.mxu0 %v2553
    %2595 = vmatmul.f32.gmra.mxu0 %v2557
    %v2596 = vpop.f32.mrf.mxu0
    %v2597 = vadd.f32 0.0, %v2596
    %2598 = vdwg.mxu0
    %v2599 = vadd.f32 %v2540, %v2577
    %v2600 = vadd.f32 %v2541, %v2597
    %v2601 = vmul.f32 %v2415, %v1303
    %v2602 = vmul.f32 %v2416, %v1306
    %v2603 = vmul.f32 %v2417, %v1305
    %v2604 = vld [vmem:[%s1313] sm:$0xff]
    %2608 = vrot.lane.b32.xlu0 %v2601, 111
    %v2609 = vpop.permute.xlu0 %2608
    %2610 = vrot.lane.b32.xlu0 %v2602, 111
    %v2611 = vpop.permute.xlu0 %2610
    %2612 = vrot.lane.b32.xlu0 %v2603, 111
    %v2613 = vpop.permute.xlu0 %2612
    %v2614 = vsel %vm54, %v2609, %v2611
    %v2615 = vsel %vm54, %v2611, %v2613
    %v2619 = vsel %vm808, %v2604, 0
    %2621 = vmatpush.msra.mxu0 0.0
    %2622 = vmatpush.msra.mxu0 0.0
    %2623 = vmatpush.msra.mxu0 0.0
    %2624 = vmatpush.msra.mxu0 0.0
    %2625 = vmatpush.msra.mxu0 0.0
    %2626 = vmatpush.msra.mxu0 0.0
    %2627 = vmatpush.msra.mxu0 0.0
    %2628 = vmatpush.msra.mxu0 0.0
    %2629 = vmatpush.msra.mxu0 0.0
    %2630 = vmatpush.msra.mxu0 0.0
    %2631 = vmatpush.msra.mxu0 0.0
    %2632 = vmatpush.msra.mxu0 0.0
    %2633 = vmatpush.msra.mxu0 0.0
    %2634 = vmatpush.msra.mxu0 0.0
    %2635 = vmatpush.msra.mxu0 0.0
    %2636 = vmatpush.msra.mxu0 %v2614
    %2637 = vmatmul.f32.gmra.mxu0 %v2619
    %v2638 = vpop.f32.mrf.mxu0
    %v2639 = vadd.f32 0.0, %v2638
    %2640 = vdwg.mxu0
    %2641 = vmatpush.msra.mxu0 0.0
    %2642 = vmatpush.msra.mxu0 0.0
    %2643 = vmatpush.msra.mxu0 0.0
    %2644 = vmatpush.msra.mxu0 0.0
    %2645 = vmatpush.msra.mxu0 0.0
    %2646 = vmatpush.msra.mxu0 0.0
    %2647 = vmatpush.msra.mxu0 0.0
    %2648 = vmatpush.msra.mxu0 0.0
    %2649 = vmatpush.msra.mxu0 0.0
    %2650 = vmatpush.msra.mxu0 0.0
    %2651 = vmatpush.msra.mxu0 0.0
    %2652 = vmatpush.msra.mxu0 0.0
    %2653 = vmatpush.msra.mxu0 0.0
    %2654 = vmatpush.msra.mxu0 0.0
    %2655 = vmatpush.msra.mxu0 0.0
    %2656 = vmatpush.msra.mxu0 %v2615
    %2657 = vmatmul.f32.gmra.mxu0 %v2619
    %v2658 = vpop.f32.mrf.mxu0
    %v2659 = vadd.f32 0.0, %v2658
    %2660 = vdwg.mxu0
    %v2661 = vadd.f32 %v2599, %v2639
    %v2662 = vadd.f32 %v2600, %v2659
    %v2663 = vld [vmem:[%s7] sm:$0xff]
    %2665 = vset.pattern.permute.xlu0 0
    %2666 = vperm.xlu0 %2665, %v2663
    %v2667 = vpop.permute.xlu0 %2666
    %v2669 = vadd.f32 %v2661, %v2667
    %v2670 = vadd.f32 %v2662, %v2667
    %vm2671 = vcmp.ge.f32.partialorder %v2669, 0.0
    %vm2672 = vcmp.ge.f32.partialorder %v2670, 0.0
    %v2673 = vmul.f32 %v2669, 0.1
    %v2674 = vmul.f32 %v2670, 0.1
    %v2675 = vsel %vm2671, %v2669, %v2673
    %v2676 = vsel %vm2672, %v2670, %v2674
    %v2677 = vld [vmem:[%s8] sm:$0xff]
    %v2678 = vld [vmem:[%s1450 + $0x4] sm:$0xff]
    %v2679 = vld [vmem:[%s9] sm:$0xff]
    %2681 = vset.pattern.permute.xlu0 0
    %2682 = vperm.xlu0 %2681, %v2679
    %v2683 = vpop.permute.xlu0 %2682
    %2686 = vst [vmem:[#allocation1] ss:$2 sm:$0xff] %v2678
    %v2687 = vld.sshfl [vmem:[#allocation1] sm:$0xff pattern:$0x75316420]
    %v2688 = vld.sshfl [vmem:[#allocation1 + $0x8] sm:$0xff pattern:$0x75316420]
    %v2690 = vsel %vm80, %v2677, 0
    %v2692 = vsel %vm49, %v2687, 0
    %v2694 = vsel %vm49, %v2688, 0
    %2696 = vmatpush.msra.mxu0 0.0
    %2697 = vmatpush.msra.mxu0 0.0
    %2698 = vmatpush.msra.mxu0 0.0
    %2699 = vmatpush.msra.mxu0 0.0
    %2700 = vmatpush.msra.mxu0 0.0
    %2701 = vmatpush.msra.mxu0 0.0
    %2702 = vmatpush.msra.mxu0 0.0
    %2703 = vmatpush.msra.mxu0 0.0
    %2704 = vmatpush.msra.mxu0 0.0
    %2705 = vmatpush.msra.mxu0 0.0
    %2706 = vmatpush.msra.mxu0 0.0
    %2707 = vmatpush.msra.mxu0 0.0
    %2708 = vmatpush.msra.mxu0 0.0
    %2709 = vmatpush.msra.mxu0 0.0
    %2710 = vmatpush.msra.mxu0 0.0
    %2711 = vmatpush.msra.mxu0 %v2692
    %2712 = vmatmul.f32.gmra.mxu0 %v2690
    %v2713 = vpop.f32.mrf.mxu0
    %v2714 = vadd.f32 %v2683, %v2713
    %2715 = vdwg.mxu0
    %2716 = vmatpush.msra.mxu0 0.0
    %2717 = vmatpush.msra.mxu0 0.0
    %2718 = vmatpush.msra.mxu0 0.0
    %2719 = vmatpush.msra.mxu0 0.0
    %2720 = vmatpush.msra.mxu0 0.0
    %2721 = vmatpush.msra.mxu0 0.0
    %2722 = vmatpush.msra.mxu0 0.0
    %2723 = vmatpush.msra.mxu0 0.0
    %2724 = vmatpush.msra.mxu0 0.0
    %2725 = vmatpush.msra.mxu0 0.0
    %2726 = vmatpush.msra.mxu0 0.0
    %2727 = vmatpush.msra.mxu0 0.0
    %2728 = vmatpush.msra.mxu0 0.0
    %2729 = vmatpush.msra.mxu0 0.0
    %2730 = vmatpush.msra.mxu0 0.0
    %2731 = vmatpush.msra.mxu0 %v2694
    %2732 = vmatmul.f32.gmra.mxu0 %v2690
    %v2733 = vpop.f32.mrf.mxu0
    %v2734 = vadd.f32 %v2683, %v2733
    %2735 = vdwg.mxu0
    %v2736 = vadd.f32 %v2675, %v2714
    %v2737 = vadd.f32 %v2676, %v2734
    %s2738 = scalar_lea.vmem [#allocation4], 16
    %2739 = vst [vmem:[%s2738] sm:$0xff] %v2736
    %2740 = vst [vmem:[%s2738 + $0x8] sm:$0xff] %v2737
    // Predicated region
    $region42: #{tpu_custom_call.1} parent=1 // pred_check
      _
    $region43: #{tpu_custom_call.1} parent=1 // pred_check_branch
      %2742 = sbr.rel (0) target = $region45
    $region44: #{tpu_custom_call.1} parent=1 // pred_region
      %2744 = vsyncadd [#allocation5], 0
      %s2745 = sshll.u32 [#allocation4], 4
      %s2746 = int_to_ptr.vmem [resolvable:$true] %s2745
      %s2747 = sshll.u32 %s10, 4
      %s2748 = int_to_ptr.hbm [resolvable:$true] %s2747
      %2753 = dma.vmem_to_hbm [thread:$0]  %s2746, 512, %s2748, [#allocation5], 256, 256, 16
    $region45: #{tpu_custom_call.1} parent=1 // pred_fallthru
      _
    // Predicated region
    $region46: #{tpu_custom_call.1} parent=1 // pred_check
      _
    $region47: #{tpu_custom_call.1} parent=1 // pred_check_branch
      %2755 = sbr.rel (0) target = $region49
    $region48: #{tpu_custom_call.1} parent=1 // pred_region
      %2757 = dma.done [#allocation5], 512
    $region49: #{tpu_custom_call.1} parent=1 // pred_fallthru
      _
    %2758 = vsyncpa [#allocation5], 1

</llo_original>
